<compile_context>
chip_gen: v5e
topology: v5e:2x2
jax: 0.10.0
libtpu: 0.0.40
codegen_flags: <defaults>
</compile_context>

<pallas_src>
import functools

import jax
import jax.numpy as jnp
from jax.experimental import pallas as pl
from jax.experimental.pallas import tpu as pltpu


# ============================================================================
# Kernel 1: composite (backbone o seg-head) 1x1 convs on the VPU for both
#           heads at all three scales + fused classify global-average-pool.
#           Grid: (batch, row-tiles of scale-1)  ["parallel", "arbitrary"].
# ============================================================================
def _backbone_seg_kernel(p1_ref, p2_ref, p3_ref,
                         wc1_ref, bc1_ref, wc2_ref, bc2_ref, wc3_ref, bc3_ref,
                         c1_ref, c2_ref, c3_ref, pool_ref, *, inv_m3):
    i = pl.program_id(1)

    def composite_conv(p_ref, wc_ref, bc_ref, out_ref):
        # 1x1 conv with composite weights (2*ns, Cin); Cin=4 so use VPU
        # outer-product accumulation instead of a >98%-idle MXU matmul.
        cin = p_ref.shape[0]
        for c in range(out_ref.shape[0]):            # 2*ns, static unroll
            acc = wc_ref[c:c + 1, 0:1] * p_ref[0]
            for k in range(1, cin):                  # Cin, static unroll
                acc = acc + wc_ref[c:c + 1, k:k + 1] * p_ref[k]
            out_ref[c] = acc + bc_ref[c:c + 1, 0:1]  # dense (th, w) store

    composite_conv(p1_ref, wc1_ref, bc1_ref, c1_ref)
    composite_conv(p2_ref, wc2_ref, bc2_ref, c2_ref)
    composite_conv(p3_ref, wc3_ref, bc3_ref, c3_ref)

    # Fused classify pool: running sum of p3 over row tiles (pool(x3) is
    # recovered exactly in kernel 3 since the 1x1 conv commutes with avg pool).
    @pl.when(i == 0)
    def _():
        pool_ref[...] = jnp.zeros_like(pool_ref)

    pool_ref[...] += jnp.sum(jnp.sum(p3_ref[...], axis=2), axis=1, keepdims=True)

    @pl.when(i == pl.num_programs(1) - 1)
    def _():
        pool_ref[...] = pool_ref[...] * inv_m3


# ============================================================================
# Kernel 2: hierarchical nearest-upsample + cross-scale sum for both heads.
#           up2(L) = ErT @ L @ Ec with tiny 0/1 factor-2 expansion matrices
#           (bf16-exact), row-tiled over the output.  Grid: (batch, H-tiles).
# ============================================================================
def _upsample_sum_kernel(c1_ref, c2_ref, c3_ref,
                         er32_ref, ec32_ref, er21_ref, ec21_ref,
                         er10_ref, ec10_ref, lung_ref, inf_ref, *, ns):
    def up2(s, er_ref, ec_ref):
        t = jnp.dot(er_ref[...], s.astype(jnp.bfloat16),
                    preferred_element_type=jnp.float32)
        return jnp.dot(t.astype(jnp.bfloat16), ec_ref[...],
                       preferred_element_type=jnp.float32)

    for ch in range(2 * ns):                         # static unroll, 2*ns small
        s = c3_ref[ch]                                           # (th3, w3)
        s = c2_ref[ch] + up2(s, er32_ref, ec32_ref)              # (th2, w2)
        s = c1_ref[ch] + up2(s, er21_ref, ec21_ref)              # (th1, w1)
        full = up2(s, er10_ref, ec10_ref)                        # (tH, W)
        if ch < ns:
            lung_ref[ch] = full
        else:
            inf_ref[ch - ns] = full


# ============================================================================
# Kernel 3: classify MLP on the pooled features (single step).
#   pooled(x3) = pooled(p3) @ wb3 + bb3, then Linear(576,1024) -> Hardswish ->
#   Linear(1024, ncls).  w1 is bf16 (exact E-style documented deviation),
#   f32 accumulation.
# ============================================================================
def _classify_kernel(pool_ref, wb3_ref, bb3_ref, w1_ref, b1_ref, w2_ref, b2_ref,
                     o_ref):
    px3 = (jnp.dot(pool_ref[...], wb3_ref[...],
                   preferred_element_type=jnp.float32) + bb3_ref[...])
    h = (jnp.dot(px3.astype(jnp.bfloat16), w1_ref[...],
                 preferred_element_type=jnp.float32) + b1_ref[...])
    h = h * jnp.clip(h + 3.0, 0.0, 6.0) * (1.0 / 6.0)            # Hardswish
    o_ref[...] = (jnp.dot(h, w2_ref[...], preferred_element_type=jnp.float32)
                  + b2_ref[...]).astype(o_ref.dtype)


# ----------------------------------------------------------------------------
# Host-side helpers
# ----------------------------------------------------------------------------
def _pool4d(t, f):
    """NCHW average pool by factor f (kept 4-D, channel-first)."""
    n, c, hh, ww = t.shape
    return t.reshape(n, c, hh // f, f, ww // f, f).mean(axis=(3, 5))


def _row_tile(h, cap=256, mult=32):
    """Largest row tile <= cap that divides h and is a multiple of `mult`;
    falls back to the full extent (always a legal full-dim block)."""
    if h <= cap:
        return h
    for t in range(cap - cap % mult, mult - 1, -mult):
        if h % t == 0:
            return t
    return h


def _expand2_rows(out_rows, dtype):
    """(out_rows, out_rows//2) 0/1 matrix: dest row r selects source row r//2."""
    src = out_rows // 2
    return (jnp.arange(out_rows)[:, None] // 2
            == jnp.arange(src)[None, :]).astype(dtype)


def _expand2_cols(in_cols, dtype):
    """(in_cols, 2*in_cols) 0/1 matrix: dest col j selects source col j//2."""
    out = 2 * in_cols
    return (jnp.arange(in_cols)[:, None]
            == jnp.arange(out)[None, :] // 2).astype(dtype)


# ----------------------------------------------------------------------------
# Full model forward (mirrors Multitask_MobileV3Smal_LRASPP.forward)
# ----------------------------------------------------------------------------
def multitask_forward(x, params):
    N, Cin, H, W = x.shape
    assert H % 8 == 0 and W % 8 == 0, "input spatial dims must be multiples of 8"
    f32 = jnp.float32

    # ---- synthetic backbone front end: strided average pooling (Cin kept) ----
    p1, p2, p3 = _pool4d(x, 2), _pool4d(x, 4), _pool4d(x, 8)
    h1, w1 = H // 2, W // 2
    h2, w2 = H // 4, W // 4
    h3, w3 = H // 8, W // 8
    m1, m2, m3 = h1 * w1, h2 * w2, h3 * w3

    # ---- fold seg heads into the backbone 1x1 convs (tiny host matmuls) -------
    backbone = params["backbone"]
    lung_p, inf_p = params["lung_head"], params["infected_head"]
    ns = lung_p[0][0].shape[1]
    C_all = 2 * ns
    wcs, bcs = [], []
    for s in range(3):
        wb_s, bb_s = backbone[s]                                    # (Cin, C_s)
        wseg = jnp.concatenate([lung_p[s][0], inf_p[s][0]], axis=1).T  # (2ns, C_s)
        bseg = jnp.concatenate([lung_p[s][1], inf_p[s][1]])            # (2ns,)
        wcs.append(wseg @ wb_s.T)                                   # (2ns, Cin)
        bcs.append((wseg @ bb_s + bseg).reshape(C_all, 1))

    # ---- kernel 1: composite convs + fused classify pool ---------------------
    th1 = _row_tile(h1, cap=256, mult=32)       # th1/4 stays a multiple of 8
    n_rt = h1 // th1
    th2, th3 = th1 // 2, th1 // 4
    cost1 = pl.CostEstimate(
        flops=2 * N * C_all * Cin * (m1 + m2 + m3),
        transcendentals=0,
        bytes_accessed=4 * (N * Cin * (m1 + m2 + m3)
                            + N * C_all * (m1 + m2 + m3)
                            + N * Cin + 3 * C_all * (Cin + 1)))

    c1, c2, c3, pool_p3 = pl.pallas_call(
        functools.partial(_backbone_seg_kernel, inv_m3=1.0 / float(m3)),
        out_shape=(
            jax.ShapeDtypeStruct((N, C_all, h1, w1), f32),
            jax.ShapeDtypeStruct((N, C_all, h2, w2), f32),
            jax.ShapeDtypeStruct((N, C_all, h3, w3), f32),
            jax.ShapeDtypeStruct((N, Cin, 1), f32),
        ),
        grid=(N, n_rt),
        in_specs=[
            pl.BlockSpec((None, Cin, th1, w1), lambda n, i: (n, 0, i, 0)),
            pl.BlockSpec((None, Cin, th2, w2), lambda n, i: (n, 0, i, 0)),
            pl.BlockSpec((None, Cin, th3, w3), lambda n, i: (n, 0, i, 0)),
            pl.BlockSpec((C_all, Cin), lambda n, i: (0, 0)),
            pl.BlockSpec((C_all, 1), lambda n, i: (0, 0)),
            pl.BlockSpec((C_all, Cin), lambda n, i: (0, 0)),
            pl.BlockSpec((C_all, 1), lambda n, i: (0, 0)),
            pl.BlockSpec((C_all, Cin), lambda n, i: (0, 0)),
            pl.BlockSpec((C_all, 1), lambda n, i: (0, 0)),
        ],
        out_specs=(
            pl.BlockSpec((None, C_all, th1, w1), lambda n, i: (n, 0, i, 0)),
            pl.BlockSpec((None, C_all, th2, w2), lambda n, i: (n, 0, i, 0)),
            pl.BlockSpec((None, C_all, th3, w3), lambda n, i: (n, 0, i, 0)),
            pl.BlockSpec((None, Cin, 1), lambda n, i: (n, 0, 0)),
        ),
        compiler_params=pltpu.CompilerParams(
            dimension_semantics=("parallel", "arbitrary"),
            vmem_limit_bytes=64 * 1024 * 1024),
        cost_estimate=cost1,
    )(p1, p2, p3, wcs[0], bcs[0], wcs[1], bcs[1], wcs[2], bcs[2])

    # ---- kernel 2: hierarchical upsample + cross-scale sum, row-tiled --------
    tH = _row_tile(H, cap=256, mult=64)         # tH/8 stays a multiple of 8
    n_ht = H // tH
    bf16 = jnp.bfloat16
    er10 = _expand2_rows(tH, bf16)              # (tH,    tH/2)  local, per-tile
    er21 = _expand2_rows(tH // 2, bf16)         # (tH/2,  tH/4)
    er32 = _expand2_rows(tH // 4, bf16)         # (tH/4,  tH/8)
    ec10 = _expand2_cols(w1, bf16)              # (w1, W)        global columns
    ec21 = _expand2_cols(w2, bf16)              # (w2, w1)
    ec32 = _expand2_cols(w3, bf16)              # (w3, w2)

    cost2 = pl.CostEstimate(
        flops=2 * N * C_all * (h2 * h3 * w3 + h2 * w3 * w2
                               + h1 * h2 * w2 + h1 * w2 * w1
                               + H * h1 * w1 + H * w1 * W),
        transcendentals=0,
        bytes_accessed=(4 * (N * C_all * (m1 + m2 + m3) + 2 * N * ns * H * W)
                        + 2 * (tH * (tH // 2) + (tH // 2) * (tH // 4)
                               + (tH // 4) * (tH // 8)
                               + w1 * W + w2 * w1 + w3 * w2)))

    lung_out, inf_out = pl.pallas_call(
        functools.partial(_upsample_sum_kernel, ns=ns),
        out_shape=(jax.ShapeDtypeStruct((N, ns, H, W), f32),
                   jax.ShapeDtypeStruct((N, ns, H, W), f32)),
        grid=(N, n_ht),
        in_specs=[
            pl.BlockSpec((None, C_all, tH // 2, w1), lambda n, i: (n, 0, i, 0)),
            pl.BlockSpec((None, C_all, tH // 4, w2), lambda n, i: (n, 0, i, 0)),
            pl.BlockSpec((None, C_all, tH // 8, w3), lambda n, i: (n, 0, i, 0)),
            pl.BlockSpec((tH // 4, tH // 8), lambda n, i: (0, 0)),
            pl.BlockSpec((w3, w2), lambda n, i: (0, 0)),
            pl.BlockSpec((tH // 2, tH // 4), lambda n, i: (0, 0)),
            pl.BlockSpec((w2, w1), lambda n, i: (0, 0)),
            pl.BlockSpec((tH, tH // 2), lambda n, i: (0, 0)),
            pl.BlockSpec((w1, W), lambda n, i: (0, 0)),
        ],
        out_specs=(pl.BlockSpec((None, ns, tH, W), lambda n, i: (n, 0, i, 0)),
                   pl.BlockSpec((None, ns, tH, W), lambda n, i: (n, 0, i, 0))),
        compiler_params=pltpu.CompilerParams(
            dimension_semantics=("parallel", "parallel"),
            vmem_limit_bytes=64 * 1024 * 1024),
        cost_estimate=cost2,
    )(c1, c2, c3, er32, ec32, er21, ec21, er10, ec10)

    # ---- kernel 3: classify MLP on pooled features (single step) -------------
    pooled = pool_p3.reshape(N, Cin)                         # metadata reshape
    wb3, bb3 = backbone[2]
    C3 = wb3.shape[1]
    w1c, b1c, w2c, b2c = params["classify"]
    hidden, ncls = w1c.shape[1], w2c.shape[1]
    cost3 = pl.CostEstimate(
        flops=2 * N * (Cin * C3 + C3 * hidden + hidden * ncls),
        transcendentals=0,
        bytes_accessed=(4 * (N * Cin + Cin * C3 + C3 + hidden
                             + hidden * ncls + ncls + N * ncls)
                        + 2 * C3 * hidden))

    y = pl.pallas_call(
        _classify_kernel,
        out_shape=jax.ShapeDtypeStruct((N, ncls), f32),
        cost_estimate=cost3,
    )(pooled, wb3, bb3.reshape(1, C3), w1c.astype(jnp.bfloat16),
      b1c.reshape(1, hidden), w2c, b2c.reshape(1, ncls))

    return y, lung_out, inf_out


# ----------------------------------------------------------------------------
# Pure-JAX reference (same stand-in semantics) for a correctness check.
# ----------------------------------------------------------------------------
def _reference_forward(x, params):
    N, Cin, H, W = x.shape
    feats = [_pool4d(x, 2), _pool4d(x, 4), _pool4d(x, 8)]
    xs = []
    for (wb, bb), p in zip(params["backbone"], feats):
        xs.append(jnp.einsum("nchw,cd->ndhw", p, wb) + bb[None, :, None, None])

    def seg_head(head_p):
        out = 0.0
        for (w, b), f in zip(head_p, xs):
            o = jnp.einsum("nchw,cd->ndhw", f, w) + b[None, :, None, None]
            fh, fw = H // o.shape[2], W // o.shape[3]
            o = jnp.repeat(jnp.repeat(o, fh, axis=2), fw, axis=3)
            out = out + o
        return out

    lung = seg_head(params["lung_head"])
    infected = seg_head(params["infected_head"])

    w1, b1, w2, b2 = params["classify"]
    pooled = xs[2].mean(axis=(2, 3))
    h = pooled @ w1 + b1
    h = h * jnp.clip(h + 3.0, 0.0, 6.0) / 6.0
    y = h @ w2 + b2
    return y, lung, infected


# ----------------------------------------------------------------------------
# Deterministic parameter construction
# ----------------------------------------------------------------------------
def make_params(key, in_ch=4, num_class_classify=3, num_seg=1):
    ks = jax.random.split(key, 16)
    k = iter(ks)

    def lin(kk, cin, cout, scale=0.05):
        kw, kb = jax.random.split(kk)
        w = scale * jax.random.normal(kw, (cin, cout), jnp.float32)
        b = scale * jax.random.normal(kb, (cout,), jnp.float32)
        return w, b

    backbone = [
        lin(next(k), in_ch, 16),
        lin(next(k), in_ch, 24),
        lin(next(k), in_ch, 576),
    ]
    lung_head = [
        lin(next(k), 16, num_seg),
        lin(next(k), 24, num_seg),
        lin(next(k), 576, num_seg),
    ]
    infected_head = [
        lin(next(k), 16, num_seg),
        lin(next(k), 24, num_seg),
        lin(next(k), 576, num_seg),
    ]
    w1, b1 = lin(next(k), 576, 1024, scale=0.02)
    w2, b2 = lin(next(k), 1024, num_class_classify, scale=0.02)
    return {
        "backbone": backbone,
        "lung_head": lung_head,
        "infected_head": infected_head,
        "classify": (w1, b1, w2, b2),
    }


if __name__ == "__main__":
    key = jax.random.PRNGKey(0)
    kx, kp = jax.random.split(key)

    N, C, H, W = 2, 4, 16, 16            # small NCHW input
    x = jax.random.normal(kx, (N, C, H, W), jnp.float32)
    params = make_params(kp, in_ch=C, num_class_classify=3, num_seg=1)

    y, lung_out, infect_out = jax.jit(multitask_forward)(x, params)
    jax.block_until_ready((y, lung_out, infect_out))

    assert y.shape == (N, 3)
    assert lung_out.shape == (N, 1, H, W)
    assert infect_out.shape == (N, 1, H, W)
    assert bool(jnp.all(jnp.isfinite(y)))

    # correctness vs. pure-JAX reference (loose tol: bf16 MXU inputs by design)
    y_ref, lung_r, inf_r = _reference_forward(x, params)
    assert bool(jnp.allclose(y, y_ref, atol=5e-3, rtol=5e-2))
    assert bool(jnp.allclose(lung_out, lung_r, atol=5e-3, rtol=5e-2))
    assert bool(jnp.allclose(infect_out, inf_r, atol=5e-3, rtol=5e-2))

    print("KERNEL_OK")
</pallas_src>

<mosaic_0001>
module attributes {stable_mosaic.version = 11 : i64} {
  func.func @_backbone_seg_kernel(%arg0: i32, %arg1: i32, %arg2: memref<1x4x8x8xf32, #tpu.memory_space<vmem>>, %arg3: memref<1x4x4x4xf32, #tpu.memory_space<vmem>>, %arg4: memref<1x4x2x2xf32, #tpu.memory_space<vmem>>, %arg5: memref<2x4xf32, #tpu.memory_space<vmem>>, %arg6: memref<2x1xf32, #tpu.memory_space<vmem>>, %arg7: memref<2x4xf32, #tpu.memory_space<vmem>>, %arg8: memref<2x1xf32, #tpu.memory_space<vmem>>, %arg9: memref<2x4xf32, #tpu.memory_space<vmem>>, %arg10: memref<2x1xf32, #tpu.memory_space<vmem>>, %arg11: memref<1x2x8x8xf32, #tpu.memory_space<vmem>>, %arg12: memref<1x2x4x4xf32, #tpu.memory_space<vmem>>, %arg13: memref<1x2x2x2xf32, #tpu.memory_space<vmem>>, %arg14: memref<1x4x1xf32, #tpu.memory_space<vmem>>) attributes {dimension_semantics = [#tpu.dimension_semantics<parallel>, #tpu.dimension_semantics<arbitrary>], iteration_bounds = array<i64: 2, 1>, scalar_prefetch = 0 : i64, scratch_operands = 0 : i64, tpu.core_type = #tpu.core_type<tc>, window_params = [{transform_indices = @transform_0, window_bounds = array<i64: 1, 4, 8, 8>}, {transform_indices = @transform_1, window_bounds = array<i64: 1, 4, 4, 4>}, {transform_indices = @transform_2, window_bounds = array<i64: 1, 4, 2, 2>}, {pipeline_mode = #tpu.pipeline_mode<synchronous>, transform_indices = @transform_3, window_bounds = array<i64: 2, 4>}, {pipeline_mode = #tpu.pipeline_mode<synchronous>, transform_indices = @transform_4, window_bounds = array<i64: 2, 1>}, {pipeline_mode = #tpu.pipeline_mode<synchronous>, transform_indices = @transform_5, window_bounds = array<i64: 2, 4>}, {pipeline_mode = #tpu.pipeline_mode<synchronous>, transform_indices = @transform_6, window_bounds = array<i64: 2, 1>}, {pipeline_mode = #tpu.pipeline_mode<synchronous>, transform_indices = @transform_7, window_bounds = array<i64: 2, 4>}, {pipeline_mode = #tpu.pipeline_mode<synchronous>, transform_indices = @transform_8, window_bounds = array<i64: 2, 1>}, {transform_indices = @transform_9, window_bounds = array<i64: 1, 2, 8, 8>}, {transform_indices = @transform_10, window_bounds = array<i64: 1, 2, 4, 4>}, {transform_indices = @transform_11, window_bounds = array<i64: 1, 2, 2, 2>}, {transform_indices = @transform_12, window_bounds = array<i64: 1, 4, 1>}]} {
    %c0 = arith.constant 0 : index
    %c0_0 = arith.constant 0 : index
    %0 = vector.load %arg5[%c0, %c0_0] : memref<2x4xf32, #tpu.memory_space<vmem>>, vector<1x1xf32>
    %c0_1 = arith.constant 0 : index
    %c0_2 = arith.constant 0 : index
    %c0_3 = arith.constant 0 : index
    %c0_4 = arith.constant 0 : index
    %1 = vector.load %arg2[%c0_1, %c0_2, %c0_3, %c0_4] : memref<1x4x8x8xf32, #tpu.memory_space<vmem>>, vector<1x1x8x8xf32>
    %2 = vector.shape_cast %1 : vector<1x1x8x8xf32> to vector<8x8xf32>
    %3 = vector.broadcast %0 : vector<1x1xf32> to vector<8x8xf32>
    %4 = arith.mulf %3, %2 : vector<8x8xf32>
    %c0_5 = arith.constant 0 : index
    %c1 = arith.constant 1 : index
    %5 = vector.load %arg5[%c0_5, %c1] : memref<2x4xf32, #tpu.memory_space<vmem>>, vector<1x1xf32>
    %c0_6 = arith.constant 0 : index
    %c1_7 = arith.constant 1 : index
    %c0_8 = arith.constant 0 : index
    %c0_9 = arith.constant 0 : index
    %6 = vector.load %arg2[%c0_6, %c1_7, %c0_8, %c0_9] : memref<1x4x8x8xf32, #tpu.memory_space<vmem>>, vector<1x1x8x8xf32>
    %7 = vector.shape_cast %6 : vector<1x1x8x8xf32> to vector<8x8xf32>
    %8 = vector.broadcast %5 : vector<1x1xf32> to vector<8x8xf32>
    %9 = arith.mulf %8, %7 : vector<8x8xf32>
    %10 = arith.addf %4, %9 : vector<8x8xf32>
    %c0_10 = arith.constant 0 : index
    %c2 = arith.constant 2 : index
    %11 = vector.load %arg5[%c0_10, %c2] : memref<2x4xf32, #tpu.memory_space<vmem>>, vector<1x1xf32>
    %c0_11 = arith.constant 0 : index
    %c2_12 = arith.constant 2 : index
    %c0_13 = arith.constant 0 : index
    %c0_14 = arith.constant 0 : index
    %12 = vector.load %arg2[%c0_11, %c2_12, %c0_13, %c0_14] : memref<1x4x8x8xf32, #tpu.memory_space<vmem>>, vector<1x1x8x8xf32>
    %13 = vector.shape_cast %12 : vector<1x1x8x8xf32> to vector<8x8xf32>
    %14 = vector.broadcast %11 : vector<1x1xf32> to vector<8x8xf32>
    %15 = arith.mulf %14, %13 : vector<8x8xf32>
    %16 = arith.addf %10, %15 : vector<8x8xf32>
    %c0_15 = arith.constant 0 : index
    %c3 = arith.constant 3 : index
    %17 = vector.load %arg5[%c0_15, %c3] : memref<2x4xf32, #tpu.memory_space<vmem>>, vector<1x1xf32>
    %c0_16 = arith.constant 0 : index
    %c3_17 = arith.constant 3 : index
    %c0_18 = arith.constant 0 : index
    %c0_19 = arith.constant 0 : index
    %18 = vector.load %arg2[%c0_16, %c3_17, %c0_18, %c0_19] : memref<1x4x8x8xf32, #tpu.memory_space<vmem>>, vector<1x1x8x8xf32>
    %19 = vector.shape_cast %18 : vector<1x1x8x8xf32> to vector<8x8xf32>
    %20 = vector.broadcast %17 : vector<1x1xf32> to vector<8x8xf32>
    %21 = arith.mulf %20, %19 : vector<8x8xf32>
    %22 = arith.addf %16, %21 : vector<8x8xf32>
    %c0_20 = arith.constant 0 : index
    %c0_21 = arith.constant 0 : index
    %23 = vector.load %arg6[%c0_20, %c0_21] : memref<2x1xf32, #tpu.memory_space<vmem>>, vector<1x1xf32>
    %24 = vector.broadcast %23 : vector<1x1xf32> to vector<8x8xf32>
    %25 = arith.addf %22, %24 : vector<8x8xf32>
    %c0_22 = arith.constant 0 : index
    %c0_23 = arith.constant 0 : index
    %c0_24 = arith.constant 0 : index
    %c0_25 = arith.constant 0 : index
    %26 = vector.load %arg11[%c0_22, %c0_23, %c0_24, %c0_25] : memref<1x2x8x8xf32, #tpu.memory_space<vmem>>, vector<1x1x8x8xf32>
    %27 = vector.shape_cast %26 : vector<1x1x8x8xf32> to vector<8x8xf32>
    %28 = vector.shape_cast %25 : vector<8x8xf32> to vector<1x1x8x8xf32>
    tpu.vector_store %arg11[%c0_22, %c0_23, %c0_24, %c0_25], %28 {strides = array<i32>} : memref<1x2x8x8xf32, #tpu.memory_space<vmem>>, vector<1x1x8x8xf32>,
    %c1_26 = arith.constant 1 : index
    %c0_27 = arith.constant 0 : index
    %29 = vector.load %arg5[%c1_26, %c0_27] : memref<2x4xf32, #tpu.memory_space<vmem>>, vector<1x1xf32>
    %c0_28 = arith.constant 0 : index
    %c0_29 = arith.constant 0 : index
    %c0_30 = arith.constant 0 : index
    %c0_31 = arith.constant 0 : index
    %30 = vector.load %arg2[%c0_28, %c0_29, %c0_30, %c0_31] : memref<1x4x8x8xf32, #tpu.memory_space<vmem>>, vector<1x1x8x8xf32>
    %31 = vector.shape_cast %30 : vector<1x1x8x8xf32> to vector<8x8xf32>
    %32 = vector.broadcast %29 : vector<1x1xf32> to vector<8x8xf32>
    %33 = arith.mulf %32, %31 : vector<8x8xf32>
    %c1_32 = arith.constant 1 : index
    %c1_33 = arith.constant 1 : index
    %34 = vector.load %arg5[%c1_32, %c1_33] : memref<2x4xf32, #tpu.memory_space<vmem>>, vector<1x1xf32>
    %c0_34 = arith.constant 0 : index
    %c1_35 = arith.constant 1 : index
    %c0_36 = arith.constant 0 : index
    %c0_37 = arith.constant 0 : index
    %35 = vector.load %arg2[%c0_34, %c1_35, %c0_36, %c0_37] : memref<1x4x8x8xf32, #tpu.memory_space<vmem>>, vector<1x1x8x8xf32>
    %36 = vector.shape_cast %35 : vector<1x1x8x8xf32> to vector<8x8xf32>
    %37 = vector.broadcast %34 : vector<1x1xf32> to vector<8x8xf32>
    %38 = arith.mulf %37, %36 : vector<8x8xf32>
    %39 = arith.addf %33, %38 : vector<8x8xf32>
    %c1_38 = arith.constant 1 : index
    %c2_39 = arith.constant 2 : index
    %40 = vector.load %arg5[%c1_38, %c2_39] : memref<2x4xf32, #tpu.memory_space<vmem>>, vector<1x1xf32>
    %c0_40 = arith.constant 0 : index
    %c2_41 = arith.constant 2 : index
    %c0_42 = arith.constant 0 : index
    %c0_43 = arith.constant 0 : index
    %41 = vector.load %arg2[%c0_40, %c2_41, %c0_42, %c0_43] : memref<1x4x8x8xf32, #tpu.memory_space<vmem>>, vector<1x1x8x8xf32>
    %42 = vector.shape_cast %41 : vector<1x1x8x8xf32> to vector<8x8xf32>
    %43 = vector.broadcast %40 : vector<1x1xf32> to vector<8x8xf32>
    %44 = arith.mulf %43, %42 : vector<8x8xf32>
    %45 = arith.addf %39, %44 : vector<8x8xf32>
    %c1_44 = arith.constant 1 : index
    %c3_45 = arith.constant 3 : index
    %46 = vector.load %arg5[%c1_44, %c3_45] : memref<2x4xf32, #tpu.memory_space<vmem>>, vector<1x1xf32>
    %c0_46 = arith.constant 0 : index
    %c3_47 = arith.constant 3 : index
    %c0_48 = arith.constant 0 : index
    %c0_49 = arith.constant 0 : index
    %47 = vector.load %arg2[%c0_46, %c3_47, %c0_48, %c0_49] : memref<1x4x8x8xf32, #tpu.memory_space<vmem>>, vector<1x1x8x8xf32>
    %48 = vector.shape_cast %47 : vector<1x1x8x8xf32> to vector<8x8xf32>
    %49 = vector.broadcast %46 : vector<1x1xf32> to vector<8x8xf32>
    %50 = arith.mulf %49, %48 : vector<8x8xf32>
    %51 = arith.addf %45, %50 : vector<8x8xf32>
    %c1_50 = arith.constant 1 : index
    %c0_51 = arith.constant 0 : index
    %52 = vector.load %arg6[%c1_50, %c0_51] : memref<2x1xf32, #tpu.memory_space<vmem>>, vector<1x1xf32>
    %53 = vector.broadcast %52 : vector<1x1xf32> to vector<8x8xf32>
    %54 = arith.addf %51, %53 : vector<8x8xf32>
    %c0_52 = arith.constant 0 : index
    %c1_53 = arith.constant 1 : index
    %c0_54 = arith.constant 0 : index
    %c0_55 = arith.constant 0 : index
    %55 = vector.load %arg11[%c0_52, %c1_53, %c0_54, %c0_55] : memref<1x2x8x8xf32, #tpu.memory_space<vmem>>, vector<1x1x8x8xf32>
    %56 = vector.shape_cast %55 : vector<1x1x8x8xf32> to vector<8x8xf32>
    %57 = vector.shape_cast %54 : vector<8x8xf32> to vector<1x1x8x8xf32>
    tpu.vector_store %arg11[%c0_52, %c1_53, %c0_54, %c0_55], %57 {strides = array<i32>} : memref<1x2x8x8xf32, #tpu.memory_space<vmem>>, vector<1x1x8x8xf32>,
    %c0_56 = arith.constant 0 : index
    %c0_57 = arith.constant 0 : index
    %58 = vector.load %arg7[%c0_56, %c0_57] : memref<2x4xf32, #tpu.memory_space<vmem>>, vector<1x1xf32>
    %c0_58 = arith.constant 0 : index
    %c0_59 = arith.constant 0 : index
    %c0_60 = arith.constant 0 : index
    %c0_61 = arith.constant 0 : index
    %59 = vector.load %arg3[%c0_58, %c0_59, %c0_60, %c0_61] : memref<1x4x4x4xf32, #tpu.memory_space<vmem>>, vector<1x1x4x4xf32>
    %60 = vector.shape_cast %59 : vector<1x1x4x4xf32> to vector<4x4xf32>
    %61 = vector.broadcast %58 : vector<1x1xf32> to vector<4x4xf32>
    %62 = arith.mulf %61, %60 : vector<4x4xf32>
    %c0_62 = arith.constant 0 : index
    %c1_63 = arith.constant 1 : index
    %63 = vector.load %arg7[%c0_62, %c1_63] : memref<2x4xf32, #tpu.memory_space<vmem>>, vector<1x1xf32>
    %c0_64 = arith.constant 0 : index
    %c1_65 = arith.constant 1 : index
    %c0_66 = arith.constant 0 : index
    %c0_67 = arith.constant 0 : index
    %64 = vector.load %arg3[%c0_64, %c1_65, %c0_66, %c0_67] : memref<1x4x4x4xf32, #tpu.memory_space<vmem>>, vector<1x1x4x4xf32>
    %65 = vector.shape_cast %64 : vector<1x1x4x4xf32> to vector<4x4xf32>
    %66 = vector.broadcast %63 : vector<1x1xf32> to vector<4x4xf32>
    %67 = arith.mulf %66, %65 : vector<4x4xf32>
    %68 = arith.addf %62, %67 : vector<4x4xf32>
    %c0_68 = arith.constant 0 : index
    %c2_69 = arith.constant 2 : index
    %69 = vector.load %arg7[%c0_68, %c2_69] : memref<2x4xf32, #tpu.memory_space<vmem>>, vector<1x1xf32>
    %c0_70 = arith.constant 0 : index
    %c2_71 = arith.constant 2 : index
    %c0_72 = arith.constant 0 : index
    %c0_73 = arith.constant 0 : index
    %70 = vector.load %arg3[%c0_70, %c2_71, %c0_72, %c0_73] : memref<1x4x4x4xf32, #tpu.memory_space<vmem>>, vector<1x1x4x4xf32>
    %71 = vector.shape_cast %70 : vector<1x1x4x4xf32> to vector<4x4xf32>
    %72 = vector.broadcast %69 : vector<1x1xf32> to vector<4x4xf32>
    %73 = arith.mulf %72, %71 : vector<4x4xf32>
    %74 = arith.addf %68, %73 : vector<4x4xf32>
    %c0_74 = arith.constant 0 : index
    %c3_75 = arith.constant 3 : index
    %75 = vector.load %arg7[%c0_74, %c3_75] : memref<2x4xf32, #tpu.memory_space<vmem>>, vector<1x1xf32>
    %c0_76 = arith.constant 0 : index
    %c3_77 = arith.constant 3 : index
    %c0_78 = arith.constant 0 : index
    %c0_79 = arith.constant 0 : index
    %76 = vector.load %arg3[%c0_76, %c3_77, %c0_78, %c0_79] : memref<1x4x4x4xf32, #tpu.memory_space<vmem>>, vector<1x1x4x4xf32>
    %77 = vector.shape_cast %76 : vector<1x1x4x4xf32> to vector<4x4xf32>
    %78 = vector.broadcast %75 : vector<1x1xf32> to vector<4x4xf32>
    %79 = arith.mulf %78, %77 : vector<4x4xf32>
    %80 = arith.addf %74, %79 : vector<4x4xf32>
    %c0_80 = arith.constant 0 : index
    %c0_81 = arith.constant 0 : index
    %81 = vector.load %arg8[%c0_80, %c0_81] : memref<2x1xf32, #tpu.memory_space<vmem>>, vector<1x1xf32>
    %82 = vector.broadcast %81 : vector<1x1xf32> to vector<4x4xf32>
    %83 = arith.addf %80, %82 : vector<4x4xf32>
    %c0_82 = arith.constant 0 : index
    %c0_83 = arith.constant 0 : index
    %c0_84 = arith.constant 0 : index
    %c0_85 = arith.constant 0 : index
    %84 = vector.load %arg12[%c0_82, %c0_83, %c0_84, %c0_85] : memref<1x2x4x4xf32, #tpu.memory_space<vmem>>, vector<1x1x4x4xf32>
    %85 = vector.shape_cast %84 : vector<1x1x4x4xf32> to vector<4x4xf32>
    %86 = vector.shape_cast %83 : vector<4x4xf32> to vector<1x1x4x4xf32>
    tpu.vector_store %arg12[%c0_82, %c0_83, %c0_84, %c0_85], %86 {strides = array<i32>} : memref<1x2x4x4xf32, #tpu.memory_space<vmem>>, vector<1x1x4x4xf32>,
    %c1_86 = arith.constant 1 : index
    %c0_87 = arith.constant 0 : index
    %87 = vector.load %arg7[%c1_86, %c0_87] : memref<2x4xf32, #tpu.memory_space<vmem>>, vector<1x1xf32>
    %c0_88 = arith.constant 0 : index
    %c0_89 = arith.constant 0 : index
    %c0_90 = arith.constant 0 : index
    %c0_91 = arith.constant 0 : index
    %88 = vector.load %arg3[%c0_88, %c0_89, %c0_90, %c0_91] : memref<1x4x4x4xf32, #tpu.memory_space<vmem>>, vector<1x1x4x4xf32>
    %89 = vector.shape_cast %88 : vector<1x1x4x4xf32> to vector<4x4xf32>
    %90 = vector.broadcast %87 : vector<1x1xf32> to vector<4x4xf32>
    %91 = arith.mulf %90, %89 : vector<4x4xf32>
    %c1_92 = arith.constant 1 : index
    %c1_93 = arith.constant 1 : index
    %92 = vector.load %arg7[%c1_92, %c1_93] : memref<2x4xf32, #tpu.memory_space<vmem>>, vector<1x1xf32>
    %c0_94 = arith.constant 0 : index
    %c1_95 = arith.constant 1 : index
    %c0_96 = arith.constant 0 : index
    %c0_97 = arith.constant 0 : index
    %93 = vector.load %arg3[%c0_94, %c1_95, %c0_96, %c0_97] : memref<1x4x4x4xf32, #tpu.memory_space<vmem>>, vector<1x1x4x4xf32>
    %94 = vector.shape_cast %93 : vector<1x1x4x4xf32> to vector<4x4xf32>
    %95 = vector.broadcast %92 : vector<1x1xf32> to vector<4x4xf32>
    %96 = arith.mulf %95, %94 : vector<4x4xf32>
    %97 = arith.addf %91, %96 : vector<4x4xf32>
    %c1_98 = arith.constant 1 : index
    %c2_99 = arith.constant 2 : index
    %98 = vector.load %arg7[%c1_98, %c2_99] : memref<2x4xf32, #tpu.memory_space<vmem>>, vector<1x1xf32>
    %c0_100 = arith.constant 0 : index
    %c2_101 = arith.constant 2 : index
    %c0_102 = arith.constant 0 : index
    %c0_103 = arith.constant 0 : index
    %99 = vector.load %arg3[%c0_100, %c2_101, %c0_102, %c0_103] : memref<1x4x4x4xf32, #tpu.memory_space<vmem>>, vector<1x1x4x4xf32>
    %100 = vector.shape_cast %99 : vector<1x1x4x4xf32> to vector<4x4xf32>
    %101 = vector.broadcast %98 : vector<1x1xf32> to vector<4x4xf32>
    %102 = arith.mulf %101, %100 : vector<4x4xf32>
    %103 = arith.addf %97, %102 : vector<4x4xf32>
    %c1_104 = arith.constant 1 : index
    %c3_105 = arith.constant 3 : index
    %104 = vector.load %arg7[%c1_104, %c3_105] : memref<2x4xf32, #tpu.memory_space<vmem>>, vector<1x1xf32>
    %c0_106 = arith.constant 0 : index
    %c3_107 = arith.constant 3 : index
    %c0_108 = arith.constant 0 : index
    %c0_109 = arith.constant 0 : index
    %105 = vector.load %arg3[%c0_106, %c3_107, %c0_108, %c0_109] : memref<1x4x4x4xf32, #tpu.memory_space<vmem>>, vector<1x1x4x4xf32>
    %106 = vector.shape_cast %105 : vector<1x1x4x4xf32> to vector<4x4xf32>
    %107 = vector.broadcast %104 : vector<1x1xf32> to vector<4x4xf32>
    %108 = arith.mulf %107, %106 : vector<4x4xf32>
    %109 = arith.addf %103, %108 : vector<4x4xf32>
    %c1_110 = arith.constant 1 : index
    %c0_111 = arith.constant 0 : index
    %110 = vector.load %arg8[%c1_110, %c0_111] : memref<2x1xf32, #tpu.memory_space<vmem>>, vector<1x1xf32>
    %111 = vector.broadcast %110 : vector<1x1xf32> to vector<4x4xf32>
    %112 = arith.addf %109, %111 : vector<4x4xf32>
    %c0_112 = arith.constant 0 : index
    %c1_113 = arith.constant 1 : index
    %c0_114 = arith.constant 0 : index
    %c0_115 = arith.constant 0 : index
    %113 = vector.load %arg12[%c0_112, %c1_113, %c0_114, %c0_115] : memref<1x2x4x4xf32, #tpu.memory_space<vmem>>, vector<1x1x4x4xf32>
    %114 = vector.shape_cast %113 : vector<1x1x4x4xf32> to vector<4x4xf32>
    %115 = vector.shape_cast %112 : vector<4x4xf32> to vector<1x1x4x4xf32>
    tpu.vector_store %arg12[%c0_112, %c1_113, %c0_114, %c0_115], %115 {strides = array<i32>} : memref<1x2x4x4xf32, #tpu.memory_space<vmem>>, vector<1x1x4x4xf32>,
    %c0_116 = arith.constant 0 : index
    %c0_117 = arith.constant 0 : index
    %116 = vector.load %arg9[%c0_116, %c0_117] : memref<2x4xf32, #tpu.memory_space<vmem>>, vector<1x1xf32>
    %c0_118 = arith.constant 0 : index
    %c0_119 = arith.constant 0 : index
    %c0_120 = arith.constant 0 : index
    %c0_121 = arith.constant 0 : index
    %117 = vector.load %arg4[%c0_118, %c0_119, %c0_120, %c0_121] : memref<1x4x2x2xf32, #tpu.memory_space<vmem>>, vector<1x1x2x2xf32>
    %118 = vector.shape_cast %117 : vector<1x1x2x2xf32> to vector<2x2xf32>
    %119 = vector.broadcast %116 : vector<1x1xf32> to vector<2x2xf32>
    %120 = arith.mulf %119, %118 : vector<2x2xf32>
    %c0_122 = arith.constant 0 : index
    %c1_123 = arith.constant 1 : index
    %121 = vector.load %arg9[%c0_122, %c1_123] : memref<2x4xf32, #tpu.memory_space<vmem>>, vector<1x1xf32>
    %c0_124 = arith.constant 0 : index
    %c1_125 = arith.constant 1 : index
    %c0_126 = arith.constant 0 : index
    %c0_127 = arith.constant 0 : index
    %122 = vector.load %arg4[%c0_124, %c1_125, %c0_126, %c0_127] : memref<1x4x2x2xf32, #tpu.memory_space<vmem>>, vector<1x1x2x2xf32>
    %123 = vector.shape_cast %122 : vector<1x1x2x2xf32> to vector<2x2xf32>
    %124 = vector.broadcast %121 : vector<1x1xf32> to vector<2x2xf32>
    %125 = arith.mulf %124, %123 : vector<2x2xf32>
    %126 = arith.addf %120, %125 : vector<2x2xf32>
    %c0_128 = arith.constant 0 : index
    %c2_129 = arith.constant 2 : index
    %127 = vector.load %arg9[%c0_128, %c2_129] : memref<2x4xf32, #tpu.memory_space<vmem>>, vector<1x1xf32>
    %c0_130 = arith.constant 0 : index
    %c2_131 = arith.constant 2 : index
    %c0_132 = arith.constant 0 : index
    %c0_133 = arith.constant 0 : index
    %128 = vector.load %arg4[%c0_130, %c2_131, %c0_132, %c0_133] : memref<1x4x2x2xf32, #tpu.memory_space<vmem>>, vector<1x1x2x2xf32>
    %129 = vector.shape_cast %128 : vector<1x1x2x2xf32> to vector<2x2xf32>
    %130 = vector.broadcast %127 : vector<1x1xf32> to vector<2x2xf32>
    %131 = arith.mulf %130, %129 : vector<2x2xf32>
    %132 = arith.addf %126, %131 : vector<2x2xf32>
    %c0_134 = arith.constant 0 : index
    %c3_135 = arith.constant 3 : index
    %133 = vector.load %arg9[%c0_134, %c3_135] : memref<2x4xf32, #tpu.memory_space<vmem>>, vector<1x1xf32>
    %c0_136 = arith.constant 0 : index
    %c3_137 = arith.constant 3 : index
    %c0_138 = arith.constant 0 : index
    %c0_139 = arith.constant 0 : index
    %134 = vector.load %arg4[%c0_136, %c3_137, %c0_138, %c0_139] : memref<1x4x2x2xf32, #tpu.memory_space<vmem>>, vector<1x1x2x2xf32>
    %135 = vector.shape_cast %134 : vector<1x1x2x2xf32> to vector<2x2xf32>
    %136 = vector.broadcast %133 : vector<1x1xf32> to vector<2x2xf32>
    %137 = arith.mulf %136, %135 : vector<2x2xf32>
    %138 = arith.addf %132, %137 : vector<2x2xf32>
    %c0_140 = arith.constant 0 : index
    %c0_141 = arith.constant 0 : index
    %139 = vector.load %arg10[%c0_140, %c0_141] : memref<2x1xf32, #tpu.memory_space<vmem>>, vector<1x1xf32>
    %140 = vector.broadcast %139 : vector<1x1xf32> to vector<2x2xf32>
    %141 = arith.addf %138, %140 : vector<2x2xf32>
    %c0_142 = arith.constant 0 : index
    %c0_143 = arith.constant 0 : index
    %c0_144 = arith.constant 0 : index
    %c0_145 = arith.constant 0 : index
    %142 = vector.load %arg13[%c0_142, %c0_143, %c0_144, %c0_145] : memref<1x2x2x2xf32, #tpu.memory_space<vmem>>, vector<1x1x2x2xf32>
    %143 = vector.shape_cast %142 : vector<1x1x2x2xf32> to vector<2x2xf32>
    %144 = vector.shape_cast %141 : vector<2x2xf32> to vector<1x1x2x2xf32>
    tpu.vector_store %arg13[%c0_142, %c0_143, %c0_144, %c0_145], %144 {strides = array<i32>} : memref<1x2x2x2xf32, #tpu.memory_space<vmem>>, vector<1x1x2x2xf32>,
    %c1_146 = arith.constant 1 : index
    %c0_147 = arith.constant 0 : index
    %145 = vector.load %arg9[%c1_146, %c0_147] : memref<2x4xf32, #tpu.memory_space<vmem>>, vector<1x1xf32>
    %c0_148 = arith.constant 0 : index
    %c0_149 = arith.constant 0 : index
    %c0_150 = arith.constant 0 : index
    %c0_151 = arith.constant 0 : index
    %146 = vector.load %arg4[%c0_148, %c0_149, %c0_150, %c0_151] : memref<1x4x2x2xf32, #tpu.memory_space<vmem>>, vector<1x1x2x2xf32>
    %147 = vector.shape_cast %146 : vector<1x1x2x2xf32> to vector<2x2xf32>
    %148 = vector.broadcast %145 : vector<1x1xf32> to vector<2x2xf32>
    %149 = arith.mulf %148, %147 : vector<2x2xf32>
    %c1_152 = arith.constant 1 : index
    %c1_153 = arith.constant 1 : index
    %150 = vector.load %arg9[%c1_152, %c1_153] : memref<2x4xf32, #tpu.memory_space<vmem>>, vector<1x1xf32>
    %c0_154 = arith.constant 0 : index
    %c1_155 = arith.constant 1 : index
    %c0_156 = arith.constant 0 : index
    %c0_157 = arith.constant 0 : index
    %151 = vector.load %arg4[%c0_154, %c1_155, %c0_156, %c0_157] : memref<1x4x2x2xf32, #tpu.memory_space<vmem>>, vector<1x1x2x2xf32>
    %152 = vector.shape_cast %151 : vector<1x1x2x2xf32> to vector<2x2xf32>
    %153 = vector.broadcast %150 : vector<1x1xf32> to vector<2x2xf32>
    %154 = arith.mulf %153, %152 : vector<2x2xf32>
    %155 = arith.addf %149, %154 : vector<2x2xf32>
    %c1_158 = arith.constant 1 : index
    %c2_159 = arith.constant 2 : index
    %156 = vector.load %arg9[%c1_158, %c2_159] : memref<2x4xf32, #tpu.memory_space<vmem>>, vector<1x1xf32>
    %c0_160 = arith.constant 0 : index
    %c2_161 = arith.constant 2 : index
    %c0_162 = arith.constant 0 : index
    %c0_163 = arith.constant 0 : index
    %157 = vector.load %arg4[%c0_160, %c2_161, %c0_162, %c0_163] : memref<1x4x2x2xf32, #tpu.memory_space<vmem>>, vector<1x1x2x2xf32>
    %158 = vector.shape_cast %157 : vector<1x1x2x2xf32> to vector<2x2xf32>
    %159 = vector.broadcast %156 : vector<1x1xf32> to vector<2x2xf32>
    %160 = arith.mulf %159, %158 : vector<2x2xf32>
    %161 = arith.addf %155, %160 : vector<2x2xf32>
    %c1_164 = arith.constant 1 : index
    %c3_165 = arith.constant 3 : index
    %162 = vector.load %arg9[%c1_164, %c3_165] : memref<2x4xf32, #tpu.memory_space<vmem>>, vector<1x1xf32>
    %c0_166 = arith.constant 0 : index
    %c3_167 = arith.constant 3 : index
    %c0_168 = arith.constant 0 : index
    %c0_169 = arith.constant 0 : index
    %163 = vector.load %arg4[%c0_166, %c3_167, %c0_168, %c0_169] : memref<1x4x2x2xf32, #tpu.memory_space<vmem>>, vector<1x1x2x2xf32>
    %164 = vector.shape_cast %163 : vector<1x1x2x2xf32> to vector<2x2xf32>
    %165 = vector.broadcast %162 : vector<1x1xf32> to vector<2x2xf32>
    %166 = arith.mulf %165, %164 : vector<2x2xf32>
    %167 = arith.addf %161, %166 : vector<2x2xf32>
    %c1_170 = arith.constant 1 : index
    %c0_171 = arith.constant 0 : index
    %168 = vector.load %arg10[%c1_170, %c0_171] : memref<2x1xf32, #tpu.memory_space<vmem>>, vector<1x1xf32>
    %169 = vector.broadcast %168 : vector<1x1xf32> to vector<2x2xf32>
    %170 = arith.addf %167, %169 : vector<2x2xf32>
    %c0_172 = arith.constant 0 : index
    %c1_173 = arith.constant 1 : index
    %c0_174 = arith.constant 0 : index
    %c0_175 = arith.constant 0 : index
    %171 = vector.load %arg13[%c0_172, %c1_173, %c0_174, %c0_175] : memref<1x2x2x2xf32, #tpu.memory_space<vmem>>, vector<1x1x2x2xf32>
    %172 = vector.shape_cast %171 : vector<1x1x2x2xf32> to vector<2x2xf32>
    %173 = vector.shape_cast %170 : vector<2x2xf32> to vector<1x1x2x2xf32>
    tpu.vector_store %arg13[%c0_172, %c1_173, %c0_174, %c0_175], %173 {strides = array<i32>} : memref<1x2x2x2xf32, #tpu.memory_space<vmem>>, vector<1x1x2x2xf32>,
    %c0_i32 = arith.constant 0 : i32
    %174 = arith.cmpi eq, %arg1, %c0_i32 : i32
    %175 = arith.extui %174 : i1 to i32
    %c0_i32_176 = arith.constant 0 : i32
    %176 = arith.cmpi ne, %175, %c0_i32_176 : i32
    scf.if %176 {
      %cst_190 = arith.constant 0.000000e+00 : f32
      %191 = vector.broadcast %cst_190 : f32 to vector<4x1xf32>
      %c0_191 = arith.constant 0 : index
      %c0_192 = arith.constant 0 : index
      %c0_193 = arith.constant 0 : index
      %192 = vector.load %arg14[%c0_191, %c0_192, %c0_193] : memref<1x4x1xf32, #tpu.memory_space<vmem>>, vector<1x4x1xf32>
      %193 = vector.shape_cast %192 : vector<1x4x1xf32> to vector<4x1xf32>
      %194 = vector.shape_cast %191 : vector<4x1xf32> to vector<1x4x1xf32>
      tpu.vector_store %arg14[%c0_191, %c0_192, %c0_193], %194 {strides = array<i32>} : memref<1x4x1xf32, #tpu.memory_space<vmem>>, vector<1x4x1xf32>,
    } else {
    }
    %c0_177 = arith.constant 0 : index
    %c0_178 = arith.constant 0 : index
    %c0_179 = arith.constant 0 : index
    %177 = vector.load %arg14[%c0_177, %c0_178, %c0_179] : memref<1x4x1xf32, #tpu.memory_space<vmem>>, vector<1x4x1xf32>
    %178 = vector.shape_cast %177 : vector<1x4x1xf32> to vector<4x1xf32>
    %c0_180 = arith.constant 0 : index
    %c0_181 = arith.constant 0 : index
    %c0_182 = arith.constant 0 : index
    %c0_183 = arith.constant 0 : index
    %179 = vector.load %arg4[%c0_180, %c0_181, %c0_182, %c0_183] : memref<1x4x2x2xf32, #tpu.memory_space<vmem>>, vector<1x4x2x2xf32>
    %180 = vector.shape_cast %179 : vector<1x4x2x2xf32> to vector<4x2x2xf32>
    %cst = arith.constant dense<0.000000e+00> : vector<4x2xf32>
    %181 = vector.multi_reduction <add>, %180, %cst [2] : vector<4x2x2xf32> to vector<4x2xf32>
    %cst_184 = arith.constant dense<0.000000e+00> : vector<4xf32>
    %182 = vector.multi_reduction <add>, %181, %cst_184 [1] : vector<4x2xf32> to vector<4xf32>
    %183 = vector.shape_cast %182 : vector<4xf32> to vector<4x1xf32>
    %184 = arith.addf %178, %183 : vector<4x1xf32>
    %c0_185 = arith.constant 0 : index
    %c0_186 = arith.constant 0 : index
    %c0_187 = arith.constant 0 : index
    %185 = vector.load %arg14[%c0_185, %c0_186, %c0_187] : memref<1x4x1xf32, #tpu.memory_space<vmem>>, vector<1x4x1xf32>
    %186 = vector.shape_cast %185 : vector<1x4x1xf32> to vector<4x1xf32>
    %187 = vector.shape_cast %184 : vector<4x1xf32> to vector<1x4x1xf32>
    tpu.vector_store %arg14[%c0_185, %c0_186, %c0_187], %187 {strides = array<i32>} : memref<1x4x1xf32, #tpu.memory_space<vmem>>, vector<1x4x1xf32>,
    %c0_i32_188 = arith.constant 0 : i32
    %188 = arith.cmpi eq, %arg1, %c0_i32_188 : i32
    %189 = arith.extui %188 : i1 to i32
    %c0_i32_189 = arith.constant 0 : i32
    %190 = arith.cmpi ne, %189, %c0_i32_189 : i32
    scf.if %190 {
      %c0_190 = arith.constant 0 : index
      %c0_191 = arith.constant 0 : index
      %c0_192 = arith.constant 0 : index
      %191 = vector.load %arg14[%c0_190, %c0_191, %c0_192] : memref<1x4x1xf32, #tpu.memory_space<vmem>>, vector<1x4x1xf32>
      %192 = vector.shape_cast %191 : vector<1x4x1xf32> to vector<4x1xf32>
      %cst_193 = arith.constant 2.500000e-01 : f32
      %193 = vector.broadcast %cst_193 : f32 to vector<4x1xf32>
      %194 = arith.mulf %192, %193 : vector<4x1xf32>
      %c0_194 = arith.constant 0 : index
      %c0_195 = arith.constant 0 : index
      %c0_196 = arith.constant 0 : index
      %195 = vector.load %arg14[%c0_194, %c0_195, %c0_196] : memref<1x4x1xf32, #tpu.memory_space<vmem>>, vector<1x4x1xf32>
      %196 = vector.shape_cast %195 : vector<1x4x1xf32> to vector<4x1xf32>
      %197 = vector.shape_cast %194 : vector<4x1xf32> to vector<1x4x1xf32>
      tpu.vector_store %arg14[%c0_194, %c0_195, %c0_196], %197 {strides = array<i32>} : memref<1x4x1xf32, #tpu.memory_space<vmem>>, vector<1x4x1xf32>,
    } else {
    }
    return
  }
  func.func @transform_0(%arg0: i32, %arg1: i32) -> (i32, i32, i32, i32) {
    %c0_i32 = arith.constant 0 : i32
    %c0_i32_0 = arith.constant 0 : i32
    %c0_i32_1 = arith.constant 0 : i32
    return %arg0, %c0_i32, %arg1, %c0_i32_0 : i32, i32, i32, i32
  }
  func.func @transform_1(%arg0: i32, %arg1: i32) -> (i32, i32, i32, i32) {
    %c0_i32 = arith.constant 0 : i32
    %c0_i32_0 = arith.constant 0 : i32
    %c0_i32_1 = arith.constant 0 : i32
    return %arg0, %c0_i32, %arg1, %c0_i32_0 : i32, i32, i32, i32
  }
  func.func @transform_2(%arg0: i32, %arg1: i32) -> (i32, i32, i32, i32) {
    %c0_i32 = arith.constant 0 : i32
    %c0_i32_0 = arith.constant 0 : i32
    %c0_i32_1 = arith.constant 0 : i32
    return %arg0, %c0_i32, %arg1, %c0_i32_0 : i32, i32, i32, i32
  }
  func.func @transform_3(%arg0: i32, %arg1: i32) -> (i32, i32) {
    %c0_i32 = arith.constant 0 : i32
    %c0_i32_0 = arith.constant 0 : i32
    %c0_i32_1 = arith.constant 0 : i32
    return %c0_i32, %c0_i32_0 : i32, i32
  }
  func.func @transform_4(%arg0: i32, %arg1: i32) -> (i32, i32) {
    %c0_i32 = arith.constant 0 : i32
    %c0_i32_0 = arith.constant 0 : i32
    %c0_i32_1 = arith.constant 0 : i32
    return %c0_i32, %c0_i32_0 : i32, i32
  }
  func.func @transform_5(%arg0: i32, %arg1: i32) -> (i32, i32) {
    %c0_i32 = arith.constant 0 : i32
    %c0_i32_0 = arith.constant 0 : i32
    %c0_i32_1 = arith.constant 0 : i32
    return %c0_i32, %c0_i32_0 : i32, i32
  }
  func.func @transform_6(%arg0: i32, %arg1: i32) -> (i32, i32) {
    %c0_i32 = arith.constant 0 : i32
    %c0_i32_0 = arith.constant 0 : i32
    %c0_i32_1 = arith.constant 0 : i32
    return %c0_i32, %c0_i32_0 : i32, i32
  }
  func.func @transform_7(%arg0: i32, %arg1: i32) -> (i32, i32) {
    %c0_i32 = arith.constant 0 : i32
    %c0_i32_0 = arith.constant 0 : i32
    %c0_i32_1 = arith.constant 0 : i32
    return %c0_i32, %c0_i32_0 : i32, i32
  }
  func.func @transform_8(%arg0: i32, %arg1: i32) -> (i32, i32) {
    %c0_i32 = arith.constant 0 : i32
    %c0_i32_0 = arith.constant 0 : i32
    %c0_i32_1 = arith.constant 0 : i32
    return %c0_i32, %c0_i32_0 : i32, i32
  }
  func.func @transform_9(%arg0: i32, %arg1: i32) -> (i32, i32, i32, i32) {
    %c0_i32 = arith.constant 0 : i32
    %c0_i32_0 = arith.constant 0 : i32
    %c0_i32_1 = arith.constant 0 : i32
    return %arg0, %c0_i32, %arg1, %c0_i32_0 : i32, i32, i32, i32
  }
  func.func @transform_10(%arg0: i32, %arg1: i32) -> (i32, i32, i32, i32) {
    %c0_i32 = arith.constant 0 : i32
    %c0_i32_0 = arith.constant 0 : i32
    %c0_i32_1 = arith.constant 0 : i32
    return %arg0, %c0_i32, %arg1, %c0_i32_0 : i32, i32, i32, i32
  }
  func.func @transform_11(%arg0: i32, %arg1: i32) -> (i32, i32, i32, i32) {
    %c0_i32 = arith.constant 0 : i32
    %c0_i32_0 = arith.constant 0 : i32
    %c0_i32_1 = arith.constant 0 : i32
    return %arg0, %c0_i32, %arg1, %c0_i32_0 : i32, i32, i32, i32
  }
  func.func @transform_12(%arg0: i32, %arg1: i32) -> (i32, i32, i32) {
    %c0_i32 = arith.constant 0 : i32
    %c0_i32_0 = arith.constant 0 : i32
    %c0_i32_1 = arith.constant 0 : i32
    return %arg0, %c0_i32, %c0_i32_0 : i32, i32, i32
  }
}

module attributes {stable_mosaic.version = 11 : i64} {
  func.func @_classify_kernel(%arg0: memref<2x4xf32, #tpu.memory_space<vmem>>, %arg1: memref<4x576xf32, #tpu.memory_space<vmem>>, %arg2: memref<1x576xf32, #tpu.memory_space<vmem>>, %arg3: memref<576x1024xbf16, #tpu.memory_space<vmem>>, %arg4: memref<1x1024xf32, #tpu.memory_space<vmem>>, %arg5: memref<1024x3xf32, #tpu.memory_space<vmem>>, %arg6: memref<1x3xf32, #tpu.memory_space<vmem>>, %arg7: memref<2x3xf32, #tpu.memory_space<vmem>>) attributes {dimension_semantics = [], scalar_prefetch = 0 : i64, scratch_operands = 0 : i64, tpu.core_type = #tpu.core_type<tc>} {
    %c0 = arith.constant 0 : index
    %c0_0 = arith.constant 0 : index
    %0 = vector.load %arg0[%c0, %c0_0] : memref<2x4xf32, #tpu.memory_space<vmem>>, vector<2x4xf32>
    %c0_1 = arith.constant 0 : index
    %c0_2 = arith.constant 0 : index
    %1 = vector.load %arg1[%c0_1, %c0_2] : memref<4x576xf32, #tpu.memory_space<vmem>>, vector<4x576xf32>
    %cst = arith.constant dense<0.000000e+00> : vector<2x576xf32>
    %2 = tpu.matmul %0, %1, %cst {dimension_numbers = #tpu.dot_dimension_numbers<[1], [0], [0], [1], [0, 0, 1, 1], [], []>} : vector<2x4xf32>, vector<4x576xf32>, vector<2x576xf32> -> vector<2x576xf32>
    %c0_3 = arith.constant 0 : index
    %c0_4 = arith.constant 0 : index
    %3 = vector.load %arg2[%c0_3, %c0_4] : memref<1x576xf32, #tpu.memory_space<vmem>>, vector<1x576xf32>
    %4 = vector.broadcast %3 : vector<1x576xf32> to vector<2x576xf32>
    %5 = arith.addf %2, %4 : vector<2x576xf32>
    %6 = arith.truncf %5 : vector<2x576xf32> to vector<2x576xbf16>
    %c0_5 = arith.constant 0 : index
    %c0_6 = arith.constant 0 : index
    %7 = vector.load %arg3[%c0_5, %c0_6] : memref<576x1024xbf16, #tpu.memory_space<vmem>>, vector<576x1024xbf16>
    %cst_7 = arith.constant dense<0.000000e+00> : vector<2x1024xf32>
    %8 = tpu.matmul %6, %7, %cst_7 {dimension_numbers = #tpu.dot_dimension_numbers<[1], [0], [0], [1], [0, 0, 1, 1], [], []>} : vector<2x576xbf16>, vector<576x1024xbf16>, vector<2x1024xf32> -> vector<2x1024xf32>
    %c0_8 = arith.constant 0 : index
    %c0_9 = arith.constant 0 : index
    %9 = vector.load %arg4[%c0_8, %c0_9] : memref<1x1024xf32, #tpu.memory_space<vmem>>, vector<1x1024xf32>
    %10 = vector.broadcast %9 : vector<1x1024xf32> to vector<2x1024xf32>
    %11 = arith.addf %8, %10 : vector<2x1024xf32>
    %cst_10 = arith.constant 3.000000e+00 : f32
    %12 = vector.broadcast %cst_10 : f32 to vector<2x1024xf32>
    %13 = arith.addf %11, %12 : vector<2x1024xf32>
    %cst_11 = arith.constant 0.000000e+00 : f32
    %cst_12 = arith.constant 6.000000e+00 : f32
    %14 = vector.broadcast %cst_11 : f32 to vector<2x1024xf32>
    %15 = arith.maximumf %14, %13 : vector<2x1024xf32>
    %16 = vector.broadcast %cst_12 : f32 to vector<2x1024xf32>
    %17 = arith.minimumf %16, %15 : vector<2x1024xf32>
    %18 = arith.mulf %11, %17 : vector<2x1024xf32>
    %cst_13 = arith.constant 0.166666672 : f32
    %19 = vector.broadcast %cst_13 : f32 to vector<2x1024xf32>
    %20 = arith.mulf %18, %19 : vector<2x1024xf32>
    %c0_14 = arith.constant 0 : index
    %c0_15 = arith.constant 0 : index
    %21 = vector.load %arg5[%c0_14, %c0_15] : memref<1024x3xf32, #tpu.memory_space<vmem>>, vector<1024x3xf32>
    %cst_16 = arith.constant dense<0.000000e+00> : vector<2x3xf32>
    %22 = tpu.matmul %20, %21, %cst_16 {dimension_numbers = #tpu.dot_dimension_numbers<[1], [0], [0], [1], [0, 0, 1, 1], [], []>} : vector<2x1024xf32>, vector<1024x3xf32>, vector<2x3xf32> -> vector<2x3xf32>
    %c0_17 = arith.constant 0 : index
    %c0_18 = arith.constant 0 : index
    %23 = vector.load %arg6[%c0_17, %c0_18] : memref<1x3xf32, #tpu.memory_space<vmem>>, vector<1x3xf32>
    %24 = vector.broadcast %23 : vector<1x3xf32> to vector<2x3xf32>
    %25 = arith.addf %22, %24 : vector<2x3xf32>
    %c0_19 = arith.constant 0 : index
    %c0_20 = arith.constant 0 : index
    %26 = vector.load %arg7[%c0_19, %c0_20] : memref<2x3xf32, #tpu.memory_space<vmem>>, vector<2x3xf32>
    tpu.vector_store %arg7[%c0_19, %c0_20], %25 {strides = array<i32>} : memref<2x3xf32, #tpu.memory_space<vmem>>, vector<2x3xf32>,
    return
  }
}

module attributes {stable_mosaic.version = 11 : i64} {
  func.func @_upsample_sum_kernel(%arg0: i32, %arg1: i32, %arg2: memref<1x2x8x8xf32, #tpu.memory_space<vmem>>, %arg3: memref<1x2x4x4xf32, #tpu.memory_space<vmem>>, %arg4: memref<1x2x2x2xf32, #tpu.memory_space<vmem>>, %arg5: memref<4x2xbf16, #tpu.memory_space<vmem>>, %arg6: memref<2x4xbf16, #tpu.memory_space<vmem>>, %arg7: memref<8x4xbf16, #tpu.memory_space<vmem>>, %arg8: memref<4x8xbf16, #tpu.memory_space<vmem>>, %arg9: memref<16x8xbf16, #tpu.memory_space<vmem>>, %arg10: memref<8x16xbf16, #tpu.memory_space<vmem>>, %arg11: memref<1x1x16x16xf32, #tpu.memory_space<vmem>>, %arg12: memref<1x1x16x16xf32, #tpu.memory_space<vmem>>) attributes {dimension_semantics = [#tpu.dimension_semantics<parallel>, #tpu.dimension_semantics<parallel>], iteration_bounds = array<i64: 2, 1>, scalar_prefetch = 0 : i64, scratch_operands = 0 : i64, tpu.core_type = #tpu.core_type<tc>, window_params = [{transform_indices = @transform_0, window_bounds = array<i64: 1, 2, 8, 8>}, {transform_indices = @transform_1, window_bounds = array<i64: 1, 2, 4, 4>}, {transform_indices = @transform_2, window_bounds = array<i64: 1, 2, 2, 2>}, {pipeline_mode = #tpu.pipeline_mode<synchronous>, transform_indices = @transform_3, window_bounds = array<i64: 4, 2>}, {pipeline_mode = #tpu.pipeline_mode<synchronous>, transform_indices = @transform_4, window_bounds = array<i64: 2, 4>}, {pipeline_mode = #tpu.pipeline_mode<synchronous>, transform_indices = @transform_5, window_bounds = array<i64: 8, 4>}, {pipeline_mode = #tpu.pipeline_mode<synchronous>, transform_indices = @transform_6, window_bounds = array<i64: 4, 8>}, {pipeline_mode = #tpu.pipeline_mode<synchronous>, transform_indices = @transform_7, window_bounds = array<i64: 16, 8>}, {pipeline_mode = #tpu.pipeline_mode<synchronous>, transform_indices = @transform_8, window_bounds = array<i64: 8, 16>}, {transform_indices = @transform_9, window_bounds = array<i64: 1, 1, 16, 16>}, {transform_indices = @transform_10, window_bounds = array<i64: 1, 1, 16, 16>}]} {
    %c0 = arith.constant 0 : index
    %c0_0 = arith.constant 0 : index
    %c0_1 = arith.constant 0 : index
    %c0_2 = arith.constant 0 : index
    %0 = vector.load %arg4[%c0, %c0_0, %c0_1, %c0_2] : memref<1x2x2x2xf32, #tpu.memory_space<vmem>>, vector<1x1x2x2xf32>
    %1 = vector.shape_cast %0 : vector<1x1x2x2xf32> to vector<2x2xf32>
    %c0_3 = arith.constant 0 : index
    %c0_4 = arith.constant 0 : index
    %c0_5 = arith.constant 0 : index
    %c0_6 = arith.constant 0 : index
    %2 = vector.load %arg3[%c0_3, %c0_4, %c0_5, %c0_6] : memref<1x2x4x4xf32, #tpu.memory_space<vmem>>, vector<1x1x4x4xf32>
    %3 = vector.shape_cast %2 : vector<1x1x4x4xf32> to vector<4x4xf32>
    %c0_7 = arith.constant 0 : index
    %c0_8 = arith.constant 0 : index
    %4 = vector.load %arg5[%c0_7, %c0_8] : memref<4x2xbf16, #tpu.memory_space<vmem>>, vector<4x2xbf16>
    %5 = arith.truncf %1 : vector<2x2xf32> to vector<2x2xbf16>
    %cst = arith.constant dense<0.000000e+00> : vector<4x2xf32>
    %6 = tpu.matmul %4, %5, %cst {dimension_numbers = #tpu.dot_dimension_numbers<[1], [0], [0], [1], [0, 0, 1, 1], [], []>} : vector<4x2xbf16>, vector<2x2xbf16>, vector<4x2xf32> -> vector<4x2xf32>
    %7 = arith.truncf %6 : vector<4x2xf32> to vector<4x2xbf16>
    %c0_9 = arith.constant 0 : index
    %c0_10 = arith.constant 0 : index
    %8 = vector.load %arg6[%c0_9, %c0_10] : memref<2x4xbf16, #tpu.memory_space<vmem>>, vector<2x4xbf16>
    %cst_11 = arith.constant dense<0.000000e+00> : vector<4x4xf32>
    %9 = tpu.matmul %7, %8, %cst_11 {dimension_numbers = #tpu.dot_dimension_numbers<[1], [0], [0], [1], [0, 0, 1, 1], [], []>} : vector<4x2xbf16>, vector<2x4xbf16>, vector<4x4xf32> -> vector<4x4xf32>
    %10 = arith.addf %3, %9 : vector<4x4xf32>
    %c0_12 = arith.constant 0 : index
    %c0_13 = arith.constant 0 : index
    %c0_14 = arith.constant 0 : index
    %c0_15 = arith.constant 0 : index
    %11 = vector.load %arg2[%c0_12, %c0_13, %c0_14, %c0_15] : memref<1x2x8x8xf32, #tpu.memory_space<vmem>>, vector<1x1x8x8xf32>
    %12 = vector.shape_cast %11 : vector<1x1x8x8xf32> to vector<8x8xf32>
    %c0_16 = arith.constant 0 : index
    %c0_17 = arith.constant 0 : index
    %13 = vector.load %arg7[%c0_16, %c0_17] : memref<8x4xbf16, #tpu.memory_space<vmem>>, vector<8x4xbf16>
    %14 = arith.truncf %10 : vector<4x4xf32> to vector<4x4xbf16>
    %cst_18 = arith.constant dense<0.000000e+00> : vector<8x4xf32>
    %15 = tpu.matmul %13, %14, %cst_18 {dimension_numbers = #tpu.dot_dimension_numbers<[1], [0], [0], [1], [0, 0, 1, 1], [], []>} : vector<8x4xbf16>, vector<4x4xbf16>, vector<8x4xf32> -> vector<8x4xf32>
    %16 = arith.truncf %15 : vector<8x4xf32> to vector<8x4xbf16>
    %c0_19 = arith.constant 0 : index
    %c0_20 = arith.constant 0 : index
    %17 = vector.load %arg8[%c0_19, %c0_20] : memref<4x8xbf16, #tpu.memory_space<vmem>>, vector<4x8xbf16>
    %cst_21 = arith.constant dense<0.000000e+00> : vector<8x8xf32>
    %18 = tpu.matmul %16, %17, %cst_21 {dimension_numbers = #tpu.dot_dimension_numbers<[1], [0], [0], [1], [0, 0, 1, 1], [], []>} : vector<8x4xbf16>, vector<4x8xbf16>, vector<8x8xf32> -> vector<8x8xf32>
    %19 = arith.addf %12, %18 : vector<8x8xf32>
    %c0_22 = arith.constant 0 : index
    %c0_23 = arith.constant 0 : index
    %20 = vector.load %arg9[%c0_22, %c0_23] : memref<16x8xbf16, #tpu.memory_space<vmem>>, vector<16x8xbf16>
    %21 = arith.truncf %19 : vector<8x8xf32> to vector<8x8xbf16>
    %cst_24 = arith.constant dense<0.000000e+00> : vector<16x8xf32>
    %22 = tpu.matmul %20, %21, %cst_24 {dimension_numbers = #tpu.dot_dimension_numbers<[1], [0], [0], [1], [0, 0, 1, 1], [], []>} : vector<16x8xbf16>, vector<8x8xbf16>, vector<16x8xf32> -> vector<16x8xf32>
    %23 = arith.truncf %22 : vector<16x8xf32> to vector<16x8xbf16>
    %c0_25 = arith.constant 0 : index
    %c0_26 = arith.constant 0 : index
    %24 = vector.load %arg10[%c0_25, %c0_26] : memref<8x16xbf16, #tpu.memory_space<vmem>>, vector<8x16xbf16>
    %cst_27 = arith.constant dense<0.000000e+00> : vector<16x16xf32>
    %25 = tpu.matmul %23, %24, %cst_27 {dimension_numbers = #tpu.dot_dimension_numbers<[1], [0], [0], [1], [0, 0, 1, 1], [], []>} : vector<16x8xbf16>, vector<8x16xbf16>, vector<16x16xf32> -> vector<16x16xf32>
    %c0_28 = arith.constant 0 : index
    %c0_29 = arith.constant 0 : index
    %c0_30 = arith.constant 0 : index
    %c0_31 = arith.constant 0 : index
    %26 = vector.load %arg11[%c0_28, %c0_29, %c0_30, %c0_31] : memref<1x1x16x16xf32, #tpu.memory_space<vmem>>, vector<1x1x16x16xf32>
    %27 = vector.shape_cast %26 : vector<1x1x16x16xf32> to vector<16x16xf32>
    %28 = vector.shape_cast %25 : vector<16x16xf32> to vector<1x1x16x16xf32>
    tpu.vector_store %arg11[%c0_28, %c0_29, %c0_30, %c0_31], %28 {strides = array<i32>} : memref<1x1x16x16xf32, #tpu.memory_space<vmem>>, vector<1x1x16x16xf32>,
    %c0_32 = arith.constant 0 : index
    %c1 = arith.constant 1 : index
    %c0_33 = arith.constant 0 : index
    %c0_34 = arith.constant 0 : index
    %29 = vector.load %arg4[%c0_32, %c1, %c0_33, %c0_34] : memref<1x2x2x2xf32, #tpu.memory_space<vmem>>, vector<1x1x2x2xf32>
    %30 = vector.shape_cast %29 : vector<1x1x2x2xf32> to vector<2x2xf32>
    %c0_35 = arith.constant 0 : index
    %c1_36 = arith.constant 1 : index
    %c0_37 = arith.constant 0 : index
    %c0_38 = arith.constant 0 : index
    %31 = vector.load %arg3[%c0_35, %c1_36, %c0_37, %c0_38] : memref<1x2x4x4xf32, #tpu.memory_space<vmem>>, vector<1x1x4x4xf32>
    %32 = vector.shape_cast %31 : vector<1x1x4x4xf32> to vector<4x4xf32>
    %c0_39 = arith.constant 0 : index
    %c0_40 = arith.constant 0 : index
    %33 = vector.load %arg5[%c0_39, %c0_40] : memref<4x2xbf16, #tpu.memory_space<vmem>>, vector<4x2xbf16>
    %34 = arith.truncf %30 : vector<2x2xf32> to vector<2x2xbf16>
    %cst_41 = arith.constant dense<0.000000e+00> : vector<4x2xf32>
    %35 = tpu.matmul %33, %34, %cst_41 {dimension_numbers = #tpu.dot_dimension_numbers<[1], [0], [0], [1], [0, 0, 1, 1], [], []>} : vector<4x2xbf16>, vector<2x2xbf16>, vector<4x2xf32> -> vector<4x2xf32>
    %36 = arith.truncf %35 : vector<4x2xf32> to vector<4x2xbf16>
    %c0_42 = arith.constant 0 : index
    %c0_43 = arith.constant 0 : index
    %37 = vector.load %arg6[%c0_42, %c0_43] : memref<2x4xbf16, #tpu.memory_space<vmem>>, vector<2x4xbf16>
    %cst_44 = arith.constant dense<0.000000e+00> : vector<4x4xf32>
    %38 = tpu.matmul %36, %37, %cst_44 {dimension_numbers = #tpu.dot_dimension_numbers<[1], [0], [0], [1], [0, 0, 1, 1], [], []>} : vector<4x2xbf16>, vector<2x4xbf16>, vector<4x4xf32> -> vector<4x4xf32>
    %39 = arith.addf %32, %38 : vector<4x4xf32>
    %c0_45 = arith.constant 0 : index
    %c1_46 = arith.constant 1 : index
    %c0_47 = arith.constant 0 : index
    %c0_48 = arith.constant 0 : index
    %40 = vector.load %arg2[%c0_45, %c1_46, %c0_47, %c0_48] : memref<1x2x8x8xf32, #tpu.memory_space<vmem>>, vector<1x1x8x8xf32>
    %41 = vector.shape_cast %40 : vector<1x1x8x8xf32> to vector<8x8xf32>
    %c0_49 = arith.constant 0 : index
    %c0_50 = arith.constant 0 : index
    %42 = vector.load %arg7[%c0_49, %c0_50] : memref<8x4xbf16, #tpu.memory_space<vmem>>, vector<8x4xbf16>
    %43 = arith.truncf %39 : vector<4x4xf32> to vector<4x4xbf16>
    %cst_51 = arith.constant dense<0.000000e+00> : vector<8x4xf32>
    %44 = tpu.matmul %42, %43, %cst_51 {dimension_numbers = #tpu.dot_dimension_numbers<[1], [0], [0], [1], [0, 0, 1, 1], [], []>} : vector<8x4xbf16>, vector<4x4xbf16>, vector<8x4xf32> -> vector<8x4xf32>
    %45 = arith.truncf %44 : vector<8x4xf32> to vector<8x4xbf16>
    %c0_52 = arith.constant 0 : index
    %c0_53 = arith.constant 0 : index
    %46 = vector.load %arg8[%c0_52, %c0_53] : memref<4x8xbf16, #tpu.memory_space<vmem>>, vector<4x8xbf16>
    %cst_54 = arith.constant dense<0.000000e+00> : vector<8x8xf32>
    %47 = tpu.matmul %45, %46, %cst_54 {dimension_numbers = #tpu.dot_dimension_numbers<[1], [0], [0], [1], [0, 0, 1, 1], [], []>} : vector<8x4xbf16>, vector<4x8xbf16>, vector<8x8xf32> -> vector<8x8xf32>
    %48 = arith.addf %41, %47 : vector<8x8xf32>
    %c0_55 = arith.constant 0 : index
    %c0_56 = arith.constant 0 : index
    %49 = vector.load %arg9[%c0_55, %c0_56] : memref<16x8xbf16, #tpu.memory_space<vmem>>, vector<16x8xbf16>
    %50 = arith.truncf %48 : vector<8x8xf32> to vector<8x8xbf16>
    %cst_57 = arith.constant dense<0.000000e+00> : vector<16x8xf32>
    %51 = tpu.matmul %49, %50, %cst_57 {dimension_numbers = #tpu.dot_dimension_numbers<[1], [0], [0], [1], [0, 0, 1, 1], [], []>} : vector<16x8xbf16>, vector<8x8xbf16>, vector<16x8xf32> -> vector<16x8xf32>
    %52 = arith.truncf %51 : vector<16x8xf32> to vector<16x8xbf16>
    %c0_58 = arith.constant 0 : index
    %c0_59 = arith.constant 0 : index
    %53 = vector.load %arg10[%c0_58, %c0_59] : memref<8x16xbf16, #tpu.memory_space<vmem>>, vector<8x16xbf16>
    %cst_60 = arith.constant dense<0.000000e+00> : vector<16x16xf32>
    %54 = tpu.matmul %52, %53, %cst_60 {dimension_numbers = #tpu.dot_dimension_numbers<[1], [0], [0], [1], [0, 0, 1, 1], [], []>} : vector<16x8xbf16>, vector<8x16xbf16>, vector<16x16xf32> -> vector<16x16xf32>
    %c0_61 = arith.constant 0 : index
    %c0_62 = arith.constant 0 : index
    %c0_63 = arith.constant 0 : index
    %c0_64 = arith.constant 0 : index
    %55 = vector.load %arg12[%c0_61, %c0_62, %c0_63, %c0_64] : memref<1x1x16x16xf32, #tpu.memory_space<vmem>>, vector<1x1x16x16xf32>
    %56 = vector.shape_cast %55 : vector<1x1x16x16xf32> to vector<16x16xf32>
    %57 = vector.shape_cast %54 : vector<16x16xf32> to vector<1x1x16x16xf32>
    tpu.vector_store %arg12[%c0_61, %c0_62, %c0_63, %c0_64], %57 {strides = array<i32>} : memref<1x1x16x16xf32, #tpu.memory_space<vmem>>, vector<1x1x16x16xf32>,
    return
  }
  func.func @transform_0(%arg0: i32, %arg1: i32) -> (i32, i32, i32, i32) {
    %c0_i32 = arith.constant 0 : i32
    %c0_i32_0 = arith.constant 0 : i32
    %c0_i32_1 = arith.constant 0 : i32
    return %arg0, %c0_i32, %arg1, %c0_i32_0 : i32, i32, i32, i32
  }
  func.func @transform_1(%arg0: i32, %arg1: i32) -> (i32, i32, i32, i32) {
    %c0_i32 = arith.constant 0 : i32
    %c0_i32_0 = arith.constant 0 : i32
    %c0_i32_1 = arith.constant 0 : i32
    return %arg0, %c0_i32, %arg1, %c0_i32_0 : i32, i32, i32, i32
  }
  func.func @transform_2(%arg0: i32, %arg1: i32) -> (i32, i32, i32, i32) {
    %c0_i32 = arith.constant 0 : i32
    %c0_i32_0 = arith.constant 0 : i32
    %c0_i32_1 = arith.constant 0 : i32
    return %arg0, %c0_i32, %arg1, %c0_i32_0 : i32, i32, i32, i32
  }
  func.func @transform_3(%arg0: i32, %arg1: i32) -> (i32, i32) {
    %c0_i32 = arith.constant 0 : i32
    %c0_i32_0 = arith.constant 0 : i32
    %c0_i32_1 = arith.constant 0 : i32
    return %c0_i32, %c0_i32_0 : i32, i32
  }
  func.func @transform_4(%arg0: i32, %arg1: i32) -> (i32, i32) {
    %c0_i32 = arith.constant 0 : i32
    %c0_i32_0 = arith.constant 0 : i32
    %c0_i32_1 = arith.constant 0 : i32
    return %c0_i32, %c0_i32_0 : i32, i32
  }
  func.func @transform_5(%arg0: i32, %arg1: i32) -> (i32, i32) {
    %c0_i32 = arith.constant 0 : i32
    %c0_i32_0 = arith.constant 0 : i32
    %c0_i32_1 = arith.constant 0 : i32
    return %c0_i32, %c0_i32_0 : i32, i32
  }
  func.func @transform_6(%arg0: i32, %arg1: i32) -> (i32, i32) {
    %c0_i32 = arith.constant 0 : i32
    %c0_i32_0 = arith.constant 0 : i32
    %c0_i32_1 = arith.constant 0 : i32
    return %c0_i32, %c0_i32_0 : i32, i32
  }
  func.func @transform_7(%arg0: i32, %arg1: i32) -> (i32, i32) {
    %c0_i32 = arith.constant 0 : i32
    %c0_i32_0 = arith.constant 0 : i32
    %c0_i32_1 = arith.constant 0 : i32
    return %c0_i32, %c0_i32_0 : i32, i32
  }
  func.func @transform_8(%arg0: i32, %arg1: i32) -> (i32, i32) {
    %c0_i32 = arith.constant 0 : i32
    %c0_i32_0 = arith.constant 0 : i32
    %c0_i32_1 = arith.constant 0 : i32
    return %c0_i32, %c0_i32_0 : i32, i32
  }
  func.func @transform_9(%arg0: i32, %arg1: i32) -> (i32, i32, i32, i32) {
    %c0_i32 = arith.constant 0 : i32
    %c0_i32_0 = arith.constant 0 : i32
    %c0_i32_1 = arith.constant 0 : i32
    return %arg0, %c0_i32, %arg1, %c0_i32_0 : i32, i32, i32, i32
  }
  func.func @transform_10(%arg0: i32, %arg1: i32) -> (i32, i32, i32, i32) {
    %c0_i32 = arith.constant 0 : i32
    %c0_i32_0 = arith.constant 0 : i32
    %c0_i32_1 = arith.constant 0 : i32
    return %arg0, %c0_i32, %arg1, %c0_i32_0 : i32, i32, i32, i32
  }
}

</mosaic_0001>

<llo_original>
// kernel: multitask_forward.3
$region0: #{multitask_forward.3}
  #allocation0 [shape = 'u32[]', space=smem, size = 0x4, offset = 0x4, fixed_abs, tag = 'smem constant byte address 0x4 - core index']
  #allocation1 [shape = 'u32[72,128]{1,0:T(1,128)}', space=vmem, size = 0x9000, scoped, tag = 'internal scratch']
  %s0 = inlined_call_operand.vmem [shape: f32[2,4,8,8], index: 0, kind: input, shape index: {}]
  %s1 = inlined_call_operand.vmem [shape: f32[2,4,4,4], index: 1, kind: input, shape index: {}]
  %s2 = inlined_call_operand.vmem [shape: f32[2,4,2,2], index: 2, kind: input, shape index: {}]
  %s3 = inlined_call_operand.vmem [shape: f32[2,4], index: 3, kind: input, shape index: {}]
  %s4 = inlined_call_operand.vmem [shape: f32[2,1], index: 4, kind: input, shape index: {}]
  %s5 = inlined_call_operand.vmem [shape: f32[2,4], index: 5, kind: input, shape index: {}]
  %s6 = inlined_call_operand.vmem [shape: f32[2,1], index: 6, kind: input, shape index: {}]
  %s7 = inlined_call_operand.vmem [shape: f32[2,4], index: 7, kind: input, shape index: {}]
  %s8 = inlined_call_operand.vmem [shape: f32[2,1], index: 8, kind: input, shape index: {}]
  %s9 = inlined_call_operand.vmem [shape: f32[2,2,8,8], index: 9, kind: output, shape index: {0}]
  %s10 = inlined_call_operand.vmem [shape: f32[2,2,4,4], index: 10, kind: output, shape index: {1}]
  %s11 = inlined_call_operand.vmem [shape: f32[2,2,2,2], index: 11, kind: output, shape index: {2}]
  %s12 = inlined_call_operand.vmem [shape: f32[2,4,1], index: 12, kind: output, shape index: {3}]
  %13 = xla_tuple %s9, %s10, %s11, %s12
  %s14 = sld [smem:[#allocation0]]
  $region101: #{multitask_forward.3} parent=0
    _
  %s16 = ssub.s32 1, %s14
  %s17 = scalar_select 0, %s16, %s14
  loop: start=0, step=1, limit=4
  $region2: #{multitask_forward.3} parent=0 // loop_pre_header
    _
  $region3: #{multitask_forward.3} parent=0 // loop_header
    %s19 = sphi 0, %s23
    %p20 = scmp.ge.s32.totalorder %s19, 4
    %s26 = sphi 0, %s38
    %s27 = sphi 0, %s34
    %s28 = sphi 0, %s26
    %s29 = sphi 0, %s27
    %s30 = sphi 0, %s28
    %s31 = sphi 0, %s29
    %s43 = sphi 0, %s45
    %s46 = sphi 0, %s43
    %s47 = sphi 0, %s46
    %s63 = sphi 0, %s47
    %s71 = sphi 0, %s73
    %s74 = sphi 0, %s71
    %s75 = sphi 0, %s74
    %s91 = sphi 0, %s75
    %s99 = sphi 0, %s101
    %s102 = sphi 0, %s99
    %s103 = sphi 0, %s102
    %s119 = sphi 0, %s103
    %s123 = sphi 0, %s123
    %s125 = sphi 0, %s123
    %s126 = sphi 0, %s125
    %s140 = sphi 0, %s126
    %s144 = sphi 0, %s144
    %s146 = sphi 0, %s144
    %s147 = sphi 0, %s146
    %s161 = sphi 0, %s147
    %s165 = sphi 0, %s165
    %s167 = sphi 0, %s165
    %s168 = sphi 0, %s167
    %s182 = sphi 0, %s168
    %s186 = sphi 0, %s186
    %s188 = sphi 0, %s186
    %s189 = sphi 0, %s188
    %s203 = sphi 0, %s189
    %s207 = sphi 0, %s207
    %s209 = sphi 0, %s207
    %s210 = sphi 0, %s209
    %s224 = sphi 0, %s210
    %s228 = sphi 0, %s228
    %s230 = sphi 0, %s228
    %s231 = sphi 0, %s230
    %s245 = sphi 0, %s231
    %s253 = sphi 0, %s255
    %s256 = sphi 0, %s253
    %s257 = sphi 0, %s256
    %s273 = sphi 0, %s257
    %s281 = sphi 0, %s283
    %s284 = sphi 0, %s281
    %s285 = sphi 0, %s284
    %s301 = sphi 0, %s285
    %s309 = sphi 0, %s311
    %s312 = sphi 0, %s309
    %s313 = sphi 0, %s312
    %s329 = sphi 0, %s313
    %s335 = sphi 0, %s337
    %s338 = sphi 0, %s335
    %s339 = sphi 0, %s338
    %s355 = sphi 0, %s339
  $region4: #{multitask_forward.3} parent=0 // loop_header_branch
    %22 = sbr.rel (%p20) target = $region8
  $region5: #{multitask_forward.3} parent=0 // loop_body
    %s24 = ssub.s32 %s19, 1
    %s25 = ssub.s32 %s19, 2
    %s32 = sadd.s32 1, %s27
    %p33 = scmp.ge.s32.totalorder %s32, 1
    %s34 = scalar_select %p33, 0, %s32
    %s35 = sadd.s32 1, %s26
    %s36 = scalar_select %p33, %s35, %s26
    %p37 = scmp.ge.s32.totalorder %s36, 2
    %s38 = scalar_select %p37, 0, %s36
    %s39 = ssub.s32 %s26, %s38
    %s40 = ssub.s32 %s27, %s34
    %s41 = sor.u32 %s39, %s40
    %p42 = scmp.eq.s32.totalorder %s41, 0
    %s44 = sadd.s32 %s43, 1
    %s45 = scalar_select %p42, %s43, %s44
    %p48 = pneg %p42
    %p49 = scmp.eq.s32.totalorder %s19, 1
    %p50 = por %p48, %p49
    %p51 = scmp.ne.s32.totalorder %s43, %s46
    %p52 = scmp.eq.s32.totalorder %s19, 0
    %p53 = por %p51, %p52
    %p54 = scmp.ne.s32.totalorder %s43, %s46
    %p55 = scmp.eq.s32.totalorder %s24, 1
    %p56 = por %p54, %p55
    %p57 = scmp.ne.s32.totalorder %s46, %s47
    %p58 = scmp.eq.s32.totalorder %s24, 0
    %p59 = por %p57, %p58
    %p60 = scmp.ne.s32.totalorder %s46, %s47
    %p61 = scmp.eq.s32.totalorder %s25, 1
    %p62 = por %p60, %p61
    %p64 = scmp.ne.s32.totalorder %s47, %s63
    %p65 = scmp.eq.s32.totalorder %s25, 0
    %p66 = por %p64, %p65
    %s67 = ssub.s32 %s26, %s38
    %s68 = ssub.s32 %s27, %s34
    %s69 = sor.u32 %s67, %s68
    %p70 = scmp.eq.s32.totalorder %s69, 0
    %s72 = sadd.s32 %s71, 1
    %s73 = scalar_select %p70, %s71, %s72
    %p76 = pneg %p70
    %p77 = scmp.eq.s32.totalorder %s19, 1
    %p78 = por %p76, %p77
    %p79 = scmp.ne.s32.totalorder %s71, %s74
    %p80 = scmp.eq.s32.totalorder %s19, 0
    %p81 = por %p79, %p80
    %p82 = scmp.ne.s32.totalorder %s71, %s74
    %p83 = scmp.eq.s32.totalorder %s24, 1
    %p84 = por %p82, %p83
    %p85 = scmp.ne.s32.totalorder %s74, %s75
    %p86 = scmp.eq.s32.totalorder %s24, 0
    %p87 = por %p85, %p86
    %p88 = scmp.ne.s32.totalorder %s74, %s75
    %p89 = scmp.eq.s32.totalorder %s25, 1
    %p90 = por %p88, %p89
    %p92 = scmp.ne.s32.totalorder %s75, %s91
    %p93 = scmp.eq.s32.totalorder %s25, 0
    %p94 = por %p92, %p93
    %s95 = ssub.s32 %s26, %s38
    %s96 = ssub.s32 %s27, %s34
    %s97 = sor.u32 %s95, %s96
    %p98 = scmp.eq.s32.totalorder %s97, 0
    %s100 = sadd.s32 %s99, 1
    %s101 = scalar_select %p98, %s99, %s100
    %p104 = pneg %p98
    %p105 = scmp.eq.s32.totalorder %s19, 1
    %p106 = por %p104, %p105
    %p107 = scmp.ne.s32.totalorder %s99, %s102
    %p108 = scmp.eq.s32.totalorder %s19, 0
    %p109 = por %p107, %p108
    %p110 = scmp.ne.s32.totalorder %s99, %s102
    %p111 = scmp.eq.s32.totalorder %s24, 1
    %p112 = por %p110, %p111
    %p113 = scmp.ne.s32.totalorder %s102, %s103
    %p114 = scmp.eq.s32.totalorder %s24, 0
    %p115 = por %p113, %p114
    %p116 = scmp.ne.s32.totalorder %s102, %s103
    %p117 = scmp.eq.s32.totalorder %s25, 1
    %p118 = por %p116, %p117
    %p120 = scmp.ne.s32.totalorder %s103, %s119
    %p121 = scmp.eq.s32.totalorder %s25, 0
    %p122 = por %p120, %p121
    %s124 = sadd.s32 %s123, 1
    %p127 = scmp.eq.s32.totalorder %s19, 1
    %p128 = scmp.ne.s32.totalorder %s123, %s125
    %p129 = scmp.eq.s32.totalorder %s19, 0
    %p130 = por %p128, %p129
    %p131 = scmp.ne.s32.totalorder %s123, %s125
    %p132 = scmp.eq.s32.totalorder %s24, 1
    %p133 = por %p131, %p132
    %p134 = scmp.ne.s32.totalorder %s125, %s126
    %p135 = scmp.eq.s32.totalorder %s24, 0
    %p136 = por %p134, %p135
    %p137 = scmp.ne.s32.totalorder %s125, %s126
    %p138 = scmp.eq.s32.totalorder %s25, 1
    %p139 = por %p137, %p138
    %p141 = scmp.ne.s32.totalorder %s126, %s140
    %p142 = scmp.eq.s32.totalorder %s25, 0
    %p143 = por %p141, %p142
    %s145 = sadd.s32 %s144, 1
    %p148 = scmp.eq.s32.totalorder %s19, 1
    %p149 = scmp.ne.s32.totalorder %s144, %s146
    %p150 = scmp.eq.s32.totalorder %s19, 0
    %p151 = por %p149, %p150
    %p152 = scmp.ne.s32.totalorder %s144, %s146
    %p153 = scmp.eq.s32.totalorder %s24, 1
    %p154 = por %p152, %p153
    %p155 = scmp.ne.s32.totalorder %s146, %s147
    %p156 = scmp.eq.s32.totalorder %s24, 0
    %p157 = por %p155, %p156
    %p158 = scmp.ne.s32.totalorder %s146, %s147
    %p159 = scmp.eq.s32.totalorder %s25, 1
    %p160 = por %p158, %p159
    %p162 = scmp.ne.s32.totalorder %s147, %s161
    %p163 = scmp.eq.s32.totalorder %s25, 0
    %p164 = por %p162, %p163
    %s166 = sadd.s32 %s165, 1
    %p169 = scmp.eq.s32.totalorder %s19, 1
    %p170 = scmp.ne.s32.totalorder %s165, %s167
    %p171 = scmp.eq.s32.totalorder %s19, 0
    %p172 = por %p170, %p171
    %p173 = scmp.ne.s32.totalorder %s165, %s167
    %p174 = scmp.eq.s32.totalorder %s24, 1
    %p175 = por %p173, %p174
    %p176 = scmp.ne.s32.totalorder %s167, %s168
    %p177 = scmp.eq.s32.totalorder %s24, 0
    %p178 = por %p176, %p177
    %p179 = scmp.ne.s32.totalorder %s167, %s168
    %p180 = scmp.eq.s32.totalorder %s25, 1
    %p181 = por %p179, %p180
    %p183 = scmp.ne.s32.totalorder %s168, %s182
    %p184 = scmp.eq.s32.totalorder %s25, 0
    %p185 = por %p183, %p184
    %s187 = sadd.s32 %s186, 1
    %p190 = scmp.eq.s32.totalorder %s19, 1
    %p191 = scmp.ne.s32.totalorder %s186, %s188
    %p192 = scmp.eq.s32.totalorder %s19, 0
    %p193 = por %p191, %p192
    %p194 = scmp.ne.s32.totalorder %s186, %s188
    %p195 = scmp.eq.s32.totalorder %s24, 1
    %p196 = por %p194, %p195
    %p197 = scmp.ne.s32.totalorder %s188, %s189
    %p198 = scmp.eq.s32.totalorder %s24, 0
    %p199 = por %p197, %p198
    %p200 = scmp.ne.s32.totalorder %s188, %s189
    %p201 = scmp.eq.s32.totalorder %s25, 1
    %p202 = por %p200, %p201
    %p204 = scmp.ne.s32.totalorder %s189, %s203
    %p205 = scmp.eq.s32.totalorder %s25, 0
    %p206 = por %p204, %p205
    %s208 = sadd.s32 %s207, 1
    %p211 = scmp.eq.s32.totalorder %s19, 1
    %p212 = scmp.ne.s32.totalorder %s207, %s209
    %p213 = scmp.eq.s32.totalorder %s19, 0
    %p214 = por %p212, %p213
    %p215 = scmp.ne.s32.totalorder %s207, %s209
    %p216 = scmp.eq.s32.totalorder %s24, 1
    %p217 = por %p215, %p216
    %p218 = scmp.ne.s32.totalorder %s209, %s210
    %p219 = scmp.eq.s32.totalorder %s24, 0
    %p220 = por %p218, %p219
    %p221 = scmp.ne.s32.totalorder %s209, %s210
    %p222 = scmp.eq.s32.totalorder %s25, 1
    %p223 = por %p221, %p222
    %p225 = scmp.ne.s32.totalorder %s210, %s224
    %p226 = scmp.eq.s32.totalorder %s25, 0
    %p227 = por %p225, %p226
    %s229 = sadd.s32 %s228, 1
    %p232 = scmp.eq.s32.totalorder %s19, 1
    %p233 = scmp.ne.s32.totalorder %s228, %s230
    %p234 = scmp.eq.s32.totalorder %s19, 0
    %p235 = por %p233, %p234
    %p236 = scmp.ne.s32.totalorder %s228, %s230
    %p237 = scmp.eq.s32.totalorder %s24, 1
    %p238 = por %p236, %p237
    %p239 = scmp.ne.s32.totalorder %s230, %s231
    %p240 = scmp.eq.s32.totalorder %s24, 0
    %p241 = por %p239, %p240
    %p242 = scmp.ne.s32.totalorder %s230, %s231
    %p243 = scmp.eq.s32.totalorder %s25, 1
    %p244 = por %p242, %p243
    %p246 = scmp.ne.s32.totalorder %s231, %s245
    %p247 = scmp.eq.s32.totalorder %s25, 0
    %p248 = por %p246, %p247
    %s249 = ssub.s32 %s26, %s38
    %s250 = ssub.s32 %s27, %s34
    %s251 = sor.u32 %s249, %s250
    %p252 = scmp.eq.s32.totalorder %s251, 0
    %s254 = sadd.s32 %s253, 1
    %s255 = scalar_select %p252, %s253, %s254
    %p258 = pneg %p252
    %p259 = scmp.eq.s32.totalorder %s19, 1
    %p260 = por %p258, %p259
    %p261 = scmp.ne.s32.totalorder %s253, %s256
    %p262 = scmp.eq.s32.totalorder %s19, 0
    %p263 = por %p261, %p262
    %p264 = scmp.ne.s32.totalorder %s253, %s256
    %p265 = scmp.eq.s32.totalorder %s24, 1
    %p266 = por %p264, %p265
    %p267 = scmp.ne.s32.totalorder %s256, %s257
    %p268 = scmp.eq.s32.totalorder %s24, 0
    %p269 = por %p267, %p268
    %p270 = scmp.ne.s32.totalorder %s256, %s257
    %p271 = scmp.eq.s32.totalorder %s25, 1
    %p272 = por %p270, %p271
    %p274 = scmp.ne.s32.totalorder %s257, %s273
    %p275 = scmp.eq.s32.totalorder %s25, 0
    %p276 = por %p274, %p275
    %s277 = ssub.s32 %s26, %s38
    %s278 = ssub.s32 %s27, %s34
    %s279 = sor.u32 %s277, %s278
    %p280 = scmp.eq.s32.totalorder %s279, 0
    %s282 = sadd.s32 %s281, 1
    %s283 = scalar_select %p280, %s281, %s282
    %p286 = pneg %p280
    %p287 = scmp.eq.s32.totalorder %s19, 1
    %p288 = por %p286, %p287
    %p289 = scmp.ne.s32.totalorder %s281, %s284
    %p290 = scmp.eq.s32.totalorder %s19, 0
    %p291 = por %p289, %p290
    %p292 = scmp.ne.s32.totalorder %s281, %s284
    %p293 = scmp.eq.s32.totalorder %s24, 1
    %p294 = por %p292, %p293
    %p295 = scmp.ne.s32.totalorder %s284, %s285
    %p296 = scmp.eq.s32.totalorder %s24, 0
    %p297 = por %p295, %p296
    %p298 = scmp.ne.s32.totalorder %s284, %s285
    %p299 = scmp.eq.s32.totalorder %s25, 1
    %p300 = por %p298, %p299
    %p302 = scmp.ne.s32.totalorder %s285, %s301
    %p303 = scmp.eq.s32.totalorder %s25, 0
    %p304 = por %p302, %p303
    %s305 = ssub.s32 %s26, %s38
    %s306 = ssub.s32 %s27, %s34
    %s307 = sor.u32 %s305, %s306
    %p308 = scmp.eq.s32.totalorder %s307, 0
    %s310 = sadd.s32 %s309, 1
    %s311 = scalar_select %p308, %s309, %s310
    %p314 = pneg %p308
    %p315 = scmp.eq.s32.totalorder %s19, 1
    %p316 = por %p314, %p315
    %p317 = scmp.ne.s32.totalorder %s309, %s312
    %p318 = scmp.eq.s32.totalorder %s19, 0
    %p319 = por %p317, %p318
    %p320 = scmp.ne.s32.totalorder %s309, %s312
    %p321 = scmp.eq.s32.totalorder %s24, 1
    %p322 = por %p320, %p321
    %p323 = scmp.ne.s32.totalorder %s312, %s313
    %p324 = scmp.eq.s32.totalorder %s24, 0
    %p325 = por %p323, %p324
    %p326 = scmp.ne.s32.totalorder %s312, %s313
    %p327 = scmp.eq.s32.totalorder %s25, 1
    %p328 = por %p326, %p327
    %p330 = scmp.ne.s32.totalorder %s313, %s329
    %p331 = scmp.eq.s32.totalorder %s25, 0
    %p332 = por %p330, %p331
    %s333 = ssub.s32 %s26, %s38
    %p334 = scmp.eq.s32.totalorder %s333, 0
    %s336 = sadd.s32 %s335, 1
    %s337 = scalar_select %p334, %s335, %s336
    %p340 = pneg %p334
    %p341 = scmp.eq.s32.totalorder %s19, 1
    %p342 = por %p340, %p341
    %p343 = scmp.ne.s32.totalorder %s335, %s338
    %p344 = scmp.eq.s32.totalorder %s19, 0
    %p345 = por %p343, %p344
    %p346 = scmp.ne.s32.totalorder %s335, %s338
    %p347 = scmp.eq.s32.totalorder %s24, 1
    %p348 = por %p346, %p347
    %p349 = scmp.ne.s32.totalorder %s338, %s339
    %p350 = scmp.eq.s32.totalorder %s24, 0
    %p351 = por %p349, %p350
    %p352 = scmp.ne.s32.totalorder %s338, %s339
    %p353 = scmp.eq.s32.totalorder %s25, 1
    %p354 = por %p352, %p353
    %p356 = scmp.ne.s32.totalorder %s339, %s355
    %p357 = scmp.eq.s32.totalorder %s25, 0
    %p358 = por %p356, %p357
    %p359 = scmp.le.s32.totalorder 1, %s19
    %p360 = scmp.lt.s32.totalorder %s19, 3
    %p361 = pnand %p359, %p360
    %p362 = pneg %p361
    // Predicated region
    $region9: #{multitask_forward.3} parent=5 // pred_check
      _
    $region10: #{multitask_forward.3} parent=5 // pred_check_branch
      %364 = sbr.rel (%p361) target = $region12
    $region11: #{multitask_forward.3} parent=5 // pred_region
      %s365 = ssub.s32 %s19, 1
      // Predicated region
      $region13: #{multitask_forward.3} parent=11 // pred_check
        %p366 = pneg %p136
      $region14: #{multitask_forward.3} parent=11 // pred_check_branch
        %368 = sbr.rel (%p366) target = $region16
      $region15: #{multitask_forward.3} parent=11 // pred_region
        _
      $region16: #{multitask_forward.3} parent=11 // pred_fallthru
        _
      // Predicated region
      $region17: #{multitask_forward.3} parent=11 // pred_check
        %p369 = pneg %p157
      $region18: #{multitask_forward.3} parent=11 // pred_check_branch
        %371 = sbr.rel (%p369) target = $region20
      $region19: #{multitask_forward.3} parent=11 // pred_region
        _
      $region20: #{multitask_forward.3} parent=11 // pred_fallthru
        _
      // Predicated region
      $region21: #{multitask_forward.3} parent=11 // pred_check
        %p372 = pneg %p178
      $region22: #{multitask_forward.3} parent=11 // pred_check_branch
        %374 = sbr.rel (%p372) target = $region24
      $region23: #{multitask_forward.3} parent=11 // pred_region
        _
      $region24: #{multitask_forward.3} parent=11 // pred_fallthru
        _
      // Predicated region
      $region25: #{multitask_forward.3} parent=11 // pred_check
        %p375 = pneg %p199
      $region26: #{multitask_forward.3} parent=11 // pred_check_branch
        %377 = sbr.rel (%p375) target = $region28
      $region27: #{multitask_forward.3} parent=11 // pred_region
        _
      $region28: #{multitask_forward.3} parent=11 // pred_fallthru
        _
      // Predicated region
      $region29: #{multitask_forward.3} parent=11 // pred_check
        %p378 = pneg %p220
      $region30: #{multitask_forward.3} parent=11 // pred_check_branch
        %380 = sbr.rel (%p378) target = $region32
      $region31: #{multitask_forward.3} parent=11 // pred_region
        _
      $region32: #{multitask_forward.3} parent=11 // pred_fallthru
        _
      // Predicated region
      $region33: #{multitask_forward.3} parent=11 // pred_check
        %p381 = pneg %p241
      $region34: #{multitask_forward.3} parent=11 // pred_check_branch
        %383 = sbr.rel (%p381) target = $region36
      $region35: #{multitask_forward.3} parent=11 // pred_region
        _
      $region36: #{multitask_forward.3} parent=11 // pred_fallthru
        _
    $region12: #{multitask_forward.3} parent=5 // pred_fallthru
      _
    %p384 = scmp.lt.s32.totalorder %s19, 2
    // Predicated region
    $region37: #{multitask_forward.3} parent=5 // pred_check
      %p385 = pneg %p384
    $region38: #{multitask_forward.3} parent=5 // pred_check_branch
      %387 = sbr.rel (%p385) target = $region40
    $region39: #{multitask_forward.3} parent=5 // pred_region
      // Predicated region
      $region41: #{multitask_forward.3} parent=39 // pred_check
        %p388 = pneg %p53
      $region42: #{multitask_forward.3} parent=39 // pred_check_branch
        %390 = sbr.rel (%p388) target = $region44
      $region43: #{multitask_forward.3} parent=39 // pred_region
        %p391 = scmp.lt.s32.totalorder %s26, 1
        %s392 = scalar_select %p391, %s26, 1
        %p393 = scmp.lt.s32.totalorder %s27, 0
        %s394 = scalar_select %p393, %s27, 0
        %s395 = smul.addr %s392, 4
        %s396 = sadd.s32 %s394, %s395
        %s397 = smul.addr %s396, 8
        %s398 = scalar_lea.vmem %s0, %s397
      $region44: #{multitask_forward.3} parent=39 // pred_fallthru
        _
      // Predicated region
      $region45: #{multitask_forward.3} parent=39 // pred_check
        %p399 = pneg %p81
      $region46: #{multitask_forward.3} parent=39 // pred_check_branch
        %401 = sbr.rel (%p399) target = $region48
      $region47: #{multitask_forward.3} parent=39 // pred_region
        %p402 = scmp.lt.s32.totalorder %s26, 1
        %s403 = scalar_select %p402, %s26, 1
        %p404 = scmp.lt.s32.totalorder %s27, 0
        %s405 = scalar_select %p404, %s27, 0
        %s406 = smul.addr %s403, 4
        %s407 = sadd.s32 %s405, %s406
        %s408 = smul.addr %s407, 4
        %s409 = scalar_lea.vmem %s1, %s408
      $region48: #{multitask_forward.3} parent=39 // pred_fallthru
        _
      // Predicated region
      $region49: #{multitask_forward.3} parent=39 // pred_check
        %p410 = pneg %p109
      $region50: #{multitask_forward.3} parent=39 // pred_check_branch
        %412 = sbr.rel (%p410) target = $region52
      $region51: #{multitask_forward.3} parent=39 // pred_region
        %p413 = scmp.lt.s32.totalorder %s26, 1
        %s414 = scalar_select %p413, %s26, 1
        %p415 = scmp.lt.s32.totalorder %s27, 0
        %s416 = scalar_select %p415, %s27, 0
        %s417 = smul.addr %s414, 4
        %s418 = sadd.s32 %s416, %s417
        %s419 = smul.addr %s418, 2
        %s420 = scalar_lea.vmem %s2, %s419
      $region52: #{multitask_forward.3} parent=39 // pred_fallthru
        _
    $region40: #{multitask_forward.3} parent=5 // pred_fallthru
      _
    %p421 = scmp.le.s32.totalorder 1, %s19
    %p422 = scmp.lt.s32.totalorder %s19, 3
    %p423 = pnand %p421, %p422
    %p424 = pneg %p423
    // Predicated region
    $region53: #{multitask_forward.3} parent=5 // pred_check
      _
    $region54: #{multitask_forward.3} parent=5 // pred_check_branch
      %426 = sbr.rel (%p423) target = $region56
    $region55: #{multitask_forward.3} parent=5 // pred_region
      %s427 = ssub.s32 %s19, 1
      %p428 = scmp.lt.s32.totalorder %s28, 1
      %s429 = scalar_select %p428, %s28, 1
      %p430 = scmp.lt.s32.totalorder %s29, 0
      %s431 = scalar_select %p430, %s29, 0
      %s432 = smul.addr %s429, 4
      %s433 = sadd.s32 %s431, %s432
      %s434 = smul.addr %s433, 8
      %s435 = scalar_lea.vmem %s0, %s434
      %p436 = pneg %p59
      %p437 = pneg %p56
      %p438 = scmp.lt.s32.totalorder %s28, 1
      %s439 = scalar_select %p438, %s28, 1
      %p440 = scmp.lt.s32.totalorder %s29, 0
      %s441 = scalar_select %p440, %s29, 0
      %s442 = smul.addr %s439, 4
      %s443 = sadd.s32 %s441, %s442
      %s444 = smul.addr %s443, 4
      %s445 = scalar_lea.vmem %s1, %s444
      %p446 = pneg %p87
      %p447 = pneg %p84
      %p448 = scmp.lt.s32.totalorder %s28, 1
      %s449 = scalar_select %p448, %s28, 1
      %p450 = scmp.lt.s32.totalorder %s29, 0
      %s451 = scalar_select %p450, %s29, 0
      %s452 = smul.addr %s449, 4
      %s453 = sadd.s32 %s451, %s452
      %s454 = smul.addr %s453, 2
      %s455 = scalar_lea.vmem %s2, %s454
      %p456 = pneg %p115
      %p457 = pneg %p112
      %p458 = pneg %p136
      %p459 = pneg %p133
      %p460 = pneg %p157
      %p461 = pneg %p154
      %p462 = pneg %p178
      %p463 = pneg %p175
      %p464 = pneg %p199
      %p465 = pneg %p196
      %p466 = pneg %p220
      %p467 = pneg %p217
      %p468 = pneg %p241
      %p469 = pneg %p238
      %p470 = pneg %p269
      %p471 = pneg %p266
      %p472 = scmp.lt.s32.totalorder %s28, 1
      %s473 = scalar_select %p472, %s28, 1
      %p474 = scmp.lt.s32.totalorder %s29, 0
      %s475 = scalar_select %p474, %s29, 0
      %s476 = smul.addr %s473, 2
      %s477 = sadd.s32 %s475, %s476
      %s478 = smul.addr %s477, 8
      %s479 = scalar_lea.vmem %s9, %s478
      %p480 = pneg %p297
      %p481 = pneg %p294
      %p482 = scmp.lt.s32.totalorder %s28, 1
      %s483 = scalar_select %p482, %s28, 1
      %p484 = scmp.lt.s32.totalorder %s29, 0
      %s485 = scalar_select %p484, %s29, 0
      %s486 = smul.addr %s483, 2
      %s487 = sadd.s32 %s485, %s486
      %s488 = smul.addr %s487, 4
      %s489 = scalar_lea.vmem %s10, %s488
      %p490 = pneg %p325
      %p491 = pneg %p322
      %p492 = scmp.lt.s32.totalorder %s28, 1
      %s493 = scalar_select %p492, %s28, 1
      %p494 = scmp.lt.s32.totalorder %s29, 0
      %s495 = scalar_select %p494, %s29, 0
      %s496 = smul.addr %s493, 2
      %s497 = sadd.s32 %s495, %s496
      %s498 = smul.addr %s497, 2
      %s499 = scalar_lea.vmem %s11, %s498
      %p500 = pneg %p351
      %p501 = pneg %p348
      %p502 = scmp.lt.s32.totalorder %s28, 1
      %s503 = scalar_select %p502, %s28, 1
      %s504 = smul.addr %s503, 4
      %s505 = scalar_lea.vmem %s12, %s504
      %p506 = scmp.lt.s32.totalorder %s28, 1
      %s507 = scalar_select %p506, %s28, 1
      %p508 = scmp.lt.s32.totalorder %s29, 0
      %s509 = scalar_select %p508, %s29, 0
      %s510 = smul.addr %s507, 4
      %s511 = sadd.s32 %s509, %s510
      %s512 = smul.addr %s511, 8
      %s513 = scalar_lea.vmem %s0, %s512
      %p514 = scmp.lt.s32.totalorder %s28, 1
      %s515 = scalar_select %p514, %s28, 1
      %p516 = scmp.lt.s32.totalorder %s29, 0
      %s517 = scalar_select %p516, %s29, 0
      %s518 = smul.addr %s515, 4
      %s519 = sadd.s32 %s517, %s518
      %s520 = smul.addr %s519, 4
      %s521 = scalar_lea.vmem %s1, %s520
      %p522 = scmp.lt.s32.totalorder %s28, 1
      %s523 = scalar_select %p522, %s28, 1
      %p524 = scmp.lt.s32.totalorder %s29, 0
      %s525 = scalar_select %p524, %s29, 0
      %s526 = smul.addr %s523, 4
      %s527 = sadd.s32 %s525, %s526
      %s528 = smul.addr %s527, 2
      %s529 = scalar_lea.vmem %s2, %s528
      %p530 = scmp.lt.s32.totalorder %s28, 1
      %s531 = scalar_select %p530, %s28, 1
      %p532 = scmp.lt.s32.totalorder %s29, 0
      %s533 = scalar_select %p532, %s29, 0
      %s534 = smul.addr %s531, 2
      %s535 = sadd.s32 %s533, %s534
      %s536 = smul.addr %s535, 8
      %s537 = scalar_lea.vmem %s9, %s536
      %p538 = scmp.lt.s32.totalorder %s28, 1
      %s539 = scalar_select %p538, %s28, 1
      %p540 = scmp.lt.s32.totalorder %s29, 0
      %s541 = scalar_select %p540, %s29, 0
      %s542 = smul.addr %s539, 2
      %s543 = sadd.s32 %s541, %s542
      %s544 = smul.addr %s543, 4
      %s545 = scalar_lea.vmem %s10, %s544
      %p546 = scmp.lt.s32.totalorder %s28, 1
      %s547 = scalar_select %p546, %s28, 1
      %p548 = scmp.lt.s32.totalorder %s29, 0
      %s549 = scalar_select %p548, %s29, 0
      %s550 = smul.addr %s547, 2
      %s551 = sadd.s32 %s549, %s550
      %s552 = smul.addr %s551, 2
      %s553 = scalar_lea.vmem %s11, %s552
      %p554 = scmp.lt.s32.totalorder %s28, 1
      %s555 = scalar_select %p554, %s28, 1
      %s556 = smul.addr %s555, 4
      %s557 = scalar_lea.vmem %s12, %s556
      %v558 = vld [vmem:[%s3] sm:$0x1]
      %v559 = vld [vmem:[%s513] sm:$0xff]
      %s561 = vtos %v558
      %v562 = vstv %s561
      %v564 = vmul.f32 %v562, %v559
      %s565 = scalar_lea.vmem %s513, 8
      %v566 = vld [vmem:[%s565] sm:$0xff]
      %567 = vrot.lane.b32.xlu0 %v558, 127
      %v568 = vpop.permute.xlu0 %567
      %s569 = vtos %v568
      %v570 = vstv %s569
      %v572 = vmul.f32 %v570, %v566
      %v573 = vadd.f32 %v564, %v572
      %s574 = scalar_lea.vmem %s513, 16
      %v575 = vld [vmem:[%s574] sm:$0xff]
      %576 = vrot.lane.b32.xlu0 %v558, 126
      %v577 = vpop.permute.xlu0 %576
      %s578 = vtos %v577
      %v579 = vstv %s578
      %v581 = vmul.f32 %v579, %v575
      %v582 = vadd.f32 %v573, %v581
      %s583 = scalar_lea.vmem %s513, 24
      %v584 = vld [vmem:[%s583] sm:$0xff]
      %585 = vrot.lane.b32.xlu0 %v558, 125
      %v586 = vpop.permute.xlu0 %585
      %s587 = vtos %v586
      %v588 = vstv %s587
      %v590 = vmul.f32 %v588, %v584
      %v591 = vadd.f32 %v582, %v590
      %v592 = vld [vmem:[%s4] sm:$0x1]
      %s594 = vtos %v592
      %v595 = vstv %s594
      %v597 = vadd.f32 %v591, %v595
      %vm598 = vcmask 64512
      %599 = vst.msk [vmem:[%s537] sm:$0xff] %vm598, %v597
      %v600 = vld [vmem:[%s3 + $0x1] sm:$0x1]
      %v601 = vld [vmem:[%s513] sm:$0xff]
      %s603 = vtos %v600
      %v604 = vstv %s603
      %v606 = vmul.f32 %v604, %v601
      %v607 = vld [vmem:[%s565] sm:$0xff]
      %608 = vrot.lane.b32.xlu0 %v600, 127
      %v609 = vpop.permute.xlu0 %608
      %s610 = vtos %v609
      %v611 = vstv %s610
      %v613 = vmul.f32 %v611, %v607
      %v614 = vadd.f32 %v606, %v613
      %v615 = vld [vmem:[%s574] sm:$0xff]
      %616 = vrot.lane.b32.xlu0 %v600, 126
      %v617 = vpop.permute.xlu0 %616
      %s618 = vtos %v617
      %v619 = vstv %s618
      %v621 = vmul.f32 %v619, %v615
      %v622 = vadd.f32 %v614, %v621
      %v623 = vld [vmem:[%s583] sm:$0xff]
      %624 = vrot.lane.b32.xlu0 %v600, 125
      %v625 = vpop.permute.xlu0 %624
      %s626 = vtos %v625
      %v627 = vstv %s626
      %v629 = vmul.f32 %v627, %v623
      %v630 = vadd.f32 %v622, %v629
      %v631 = vld [vmem:[%s4 + $0x1] sm:$0x1]
      %s633 = vtos %v631
      %v634 = vstv %s633
      %v636 = vadd.f32 %v630, %v634
      %s637 = scalar_lea.vmem %s537, 8
      %638 = vst.msk [vmem:[%s637] sm:$0xff] %vm598, %v636
      %v639 = vld [vmem:[%s5] sm:$0x1]
      %v640 = vld [vmem:[%s521] sm:$0xf]
      %s642 = vtos %v639
      %v643 = vstv %s642
      %v645 = vmul.f32 %v643, %v640
      %s646 = scalar_lea.vmem %s521, 4
      %v647 = vld [vmem:[%s646] sm:$0xf]
      %648 = vrot.lane.b32.xlu0 %v639, 127
      %v649 = vpop.permute.xlu0 %648
      %s650 = vtos %v649
      %v651 = vstv %s650
      %v653 = vmul.f32 %v651, %v647
      %v654 = vadd.f32 %v645, %v653
      %s655 = scalar_lea.vmem %s521, 8
      %v656 = vld [vmem:[%s655] sm:$0xf]
      %657 = vrot.lane.b32.xlu0 %v639, 126
      %v658 = vpop.permute.xlu0 %657
      %s659 = vtos %v658
      %v660 = vstv %s659
      %v662 = vmul.f32 %v660, %v656
      %v663 = vadd.f32 %v654, %v662
      %s664 = scalar_lea.vmem %s521, 12
      %v665 = vld [vmem:[%s664] sm:$0xf]
      %666 = vrot.lane.b32.xlu0 %v639, 125
      %v667 = vpop.permute.xlu0 %666
      %s668 = vtos %v667
      %v669 = vstv %s668
      %v671 = vmul.f32 %v669, %v665
      %v672 = vadd.f32 %v663, %v671
      %v673 = vld [vmem:[%s6] sm:$0x1]
      %s675 = vtos %v673
      %v676 = vstv %s675
      %v678 = vadd.f32 %v672, %v676
      %vm679 = vcmask 27648
      %680 = vst.msk [vmem:[%s545] sm:$0xf] %vm679, %v678
      %v681 = vld [vmem:[%s5 + $0x1] sm:$0x1]
      %v682 = vld [vmem:[%s521] sm:$0xf]
      %s684 = vtos %v681
      %v685 = vstv %s684
      %v687 = vmul.f32 %v685, %v682
      %v688 = vld [vmem:[%s646] sm:$0xf]
      %689 = vrot.lane.b32.xlu0 %v681, 127
      %v690 = vpop.permute.xlu0 %689
      %s691 = vtos %v690
      %v692 = vstv %s691
      %v694 = vmul.f32 %v692, %v688
      %v695 = vadd.f32 %v687, %v694
      %v696 = vld [vmem:[%s655] sm:$0xf]
      %697 = vrot.lane.b32.xlu0 %v681, 126
      %v698 = vpop.permute.xlu0 %697
      %s699 = vtos %v698
      %v700 = vstv %s699
      %v702 = vmul.f32 %v700, %v696
      %v703 = vadd.f32 %v695, %v702
      %v704 = vld [vmem:[%s664] sm:$0xf]
      %705 = vrot.lane.b32.xlu0 %v681, 125
      %v706 = vpop.permute.xlu0 %705
      %s707 = vtos %v706
      %v708 = vstv %s707
      %v710 = vmul.f32 %v708, %v704
      %v711 = vadd.f32 %v703, %v710
      %v712 = vld [vmem:[%s6 + $0x1] sm:$0x1]
      %s714 = vtos %v712
      %v715 = vstv %s714
      %v717 = vadd.f32 %v711, %v715
      %s718 = scalar_lea.vmem %s545, 4
      %719 = vst.msk [vmem:[%s718] sm:$0xf] %vm679, %v717
      %v720 = vld [vmem:[%s7] sm:$0x1]
      %v721 = vld [vmem:[%s529] sm:$0x3]
      %s723 = vtos %v720
      %v724 = vstv %s723
      %v726 = vmul.f32 %v724, %v721
      %s727 = scalar_lea.vmem %s529, 2
      %v728 = vld [vmem:[%s727] sm:$0x3]
      %729 = vrot.lane.b32.xlu0 %v720, 127
      %v730 = vpop.permute.xlu0 %729
      %s731 = vtos %v730
      %v732 = vstv %s731
      %v734 = vmul.f32 %v732, %v728
      %v735 = vadd.f32 %v726, %v734
      %s736 = scalar_lea.vmem %s529, 4
      %v737 = vld [vmem:[%s736] sm:$0x3]
      %738 = vrot.lane.b32.xlu0 %v720, 126
      %v739 = vpop.permute.xlu0 %738
      %s740 = vtos %v739
      %v741 = vstv %s740
      %v743 = vmul.f32 %v741, %v737
      %v744 = vadd.f32 %v735, %v743
      %s745 = scalar_lea.vmem %s529, 6
      %v746 = vld [vmem:[%s745] sm:$0x3]
      %747 = vrot.lane.b32.xlu0 %v720, 125
      %v748 = vpop.permute.xlu0 %747
      %s749 = vtos %v748
      %v750 = vstv %s749
      %v752 = vmul.f32 %v750, %v746
      %v753 = vadd.f32 %v744, %v752
      %v754 = vld [vmem:[%s8] sm:$0x1]
      %s756 = vtos %v754
      %v757 = vstv %s756
      %v759 = vadd.f32 %v753, %v757
      %vm760 = vcmask 9216
      %761 = vst.msk [vmem:[%s553] sm:$0x3] %vm760, %v759
      %v762 = vld [vmem:[%s7 + $0x1] sm:$0x1]
      %v763 = vld [vmem:[%s529] sm:$0x3]
      %s765 = vtos %v762
      %v766 = vstv %s765
      %v768 = vmul.f32 %v766, %v763
      %v769 = vld [vmem:[%s727] sm:$0x3]
      %770 = vrot.lane.b32.xlu0 %v762, 127
      %v771 = vpop.permute.xlu0 %770
      %s772 = vtos %v771
      %v773 = vstv %s772
      %v775 = vmul.f32 %v773, %v769
      %v776 = vadd.f32 %v768, %v775
      %v777 = vld [vmem:[%s736] sm:$0x3]
      %778 = vrot.lane.b32.xlu0 %v762, 126
      %v779 = vpop.permute.xlu0 %778
      %s780 = vtos %v779
      %v781 = vstv %s780
      %v783 = vmul.f32 %v781, %v777
      %v784 = vadd.f32 %v776, %v783
      %v785 = vld [vmem:[%s745] sm:$0x3]
      %786 = vrot.lane.b32.xlu0 %v762, 125
      %v787 = vpop.permute.xlu0 %786
      %s788 = vtos %v787
      %v789 = vstv %s788
      %v791 = vmul.f32 %v789, %v785
      %v792 = vadd.f32 %v784, %v791
      %v793 = vld [vmem:[%s8 + $0x1] sm:$0x1]
      %s795 = vtos %v793
      %v796 = vstv %s795
      %v798 = vadd.f32 %v792, %v796
      %s799 = scalar_lea.vmem %s553, 2
      %800 = vst.msk [vmem:[%s799] sm:$0x3] %vm760, %v798
      %p801 = scmp.eq.s32.totalorder %s29, 0
      // Predicated region
      $region57: #{multitask_forward.3} parent=55 // pred_check
        %p802 = pneg %p801
      $region58: #{multitask_forward.3} parent=55 // pred_check_branch
        %804 = sbr.rel (%p802) target = $region60
      $region59: #{multitask_forward.3} parent=55 // pred_region
        %vm805 = vcmask 3072
        %806 = vst.msk [vmem:[%s557] sm:$0xf] %vm805, 0.0
      $region60: #{multitask_forward.3} parent=55 // pred_fallthru
        _
      %v807 = vld [vmem:[%s557] sm:$0xf]
      %v808 = vld [vmem:[%s529] sm:$0x3]
      %v809 = vld [vmem:[%s529 + $0x2] sm:$0x3]
      %v810 = vld [vmem:[%s529 + $0x4] sm:$0x3]
      %v811 = vld [vmem:[%s529 + $0x6] sm:$0x3]
      %v812 = vsel %vm760, %v808, 0.0
      %813 = vadd.xlane.f32.xlu0 %v812
      %v814 = vpop.xlane.xlu0 %813
      %v815 = vsel %vm760, %v809, 0.0
      %816 = vadd.xlane.f32.xlu0 %v815
      %v817 = vpop.xlane.xlu0 %816
      %v818 = vsel %vm760, %v810, 0.0
      %819 = vadd.xlane.f32.xlu0 %v818
      %v820 = vpop.xlane.xlu0 %819
      %v821 = vsel %vm760, %v811, 0.0
      %822 = vadd.xlane.f32.xlu0 %v821
      %v823 = vpop.xlane.xlu0 %822
      %v828 = vlaneseq
      %v829 = vand.u32 %v828, 127
      %v830 = vperm.slane %v814, %v829
      %v831 = vperm.slane %v817, %v829
      %v832 = vperm.slane %v820, %v829
      %v833 = vperm.slane %v823, %v829
      %vm834 = vcmask 1041409
      %v835 = vsel %vm834, %v831, %v830
      %vm836 = vcmask 1042434
      %v837 = vsel %vm836, %v832, %v835
      %vm838 = vcmask 1043459
      %v839 = vsel %vm838, %v833, %v837
      %vm841 = vcmask 11264
      %v842 = vsel %vm841, %v839, 0.0
      %843 = vadd.xlane.f32.xlu0 %v842
      %v844 = vpop.xlane.xlu0 %843
      %v845 = vadd.f32 %v807, %v844
      %vm846 = vcmask 3072
      %847 = vst.msk [vmem:[%s557] sm:$0xf] %vm846, %v845
      // Predicated region
      $region61: #{multitask_forward.3} parent=55 // pred_check
        %p848 = pneg %p801
      $region62: #{multitask_forward.3} parent=55 // pred_check_branch
        %850 = sbr.rel (%p848) target = $region64
      $region63: #{multitask_forward.3} parent=55 // pred_region
        %v851 = vld [vmem:[%s557] sm:$0xf]
        %v852 = vmul.f32 %v851, 0.25
        %853 = vst.msk [vmem:[%s557] sm:$0xf] %vm846, %v852
      $region64: #{multitask_forward.3} parent=55 // pred_fallthru
        _
      %p854 = scmp.lt.s32.totalorder %s28, 1
      %s855 = scalar_select %p854, %s28, 1
      %p856 = scmp.lt.s32.totalorder %s29, 0
      %s857 = scalar_select %p856, %s29, 0
      %s858 = smul.addr %s855, 2
      %s859 = sadd.s32 %s857, %s858
      %s860 = smul.addr %s859, 8
      %s861 = scalar_lea.vmem %s9, %s860
      %p862 = scmp.lt.s32.totalorder %s28, 1
      %s863 = scalar_select %p862, %s28, 1
      %p864 = scmp.lt.s32.totalorder %s29, 0
      %s865 = scalar_select %p864, %s29, 0
      %s866 = smul.addr %s863, 2
      %s867 = sadd.s32 %s865, %s866
      %s868 = smul.addr %s867, 4
      %s869 = scalar_lea.vmem %s10, %s868
      %p870 = scmp.lt.s32.totalorder %s28, 1
      %s871 = scalar_select %p870, %s28, 1
      %p872 = scmp.lt.s32.totalorder %s29, 0
      %s873 = scalar_select %p872, %s29, 0
      %s874 = smul.addr %s871, 2
      %s875 = sadd.s32 %s873, %s874
      %s876 = smul.addr %s875, 2
      %s877 = scalar_lea.vmem %s11, %s876
      %p878 = scmp.lt.s32.totalorder %s28, 1
      %s879 = scalar_select %p878, %s28, 1
      %s880 = smul.addr %s879, 4
      %s881 = scalar_lea.vmem %s12, %s880
      // Predicated region
      $region65: #{multitask_forward.3} parent=55 // pred_check
        %p882 = pneg %p266
      $region66: #{multitask_forward.3} parent=55 // pred_check_branch
        %884 = sbr.rel (%p882) target = $region68
      $region67: #{multitask_forward.3} parent=55 // pred_region
        _
      $region68: #{multitask_forward.3} parent=55 // pred_fallthru
        _
      // Predicated region
      $region69: #{multitask_forward.3} parent=55 // pred_check
        %p885 = pneg %p294
      $region70: #{multitask_forward.3} parent=55 // pred_check_branch
        %887 = sbr.rel (%p885) target = $region72
      $region71: #{multitask_forward.3} parent=55 // pred_region
        _
      $region72: #{multitask_forward.3} parent=55 // pred_fallthru
        _
      // Predicated region
      $region73: #{multitask_forward.3} parent=55 // pred_check
        %p888 = pneg %p322
      $region74: #{multitask_forward.3} parent=55 // pred_check_branch
        %890 = sbr.rel (%p888) target = $region76
      $region75: #{multitask_forward.3} parent=55 // pred_region
        _
      $region76: #{multitask_forward.3} parent=55 // pred_fallthru
        _
      // Predicated region
      $region77: #{multitask_forward.3} parent=55 // pred_check
        %p891 = pneg %p348
      $region78: #{multitask_forward.3} parent=55 // pred_check_branch
        %893 = sbr.rel (%p891) target = $region80
      $region79: #{multitask_forward.3} parent=55 // pred_region
        _
      $region80: #{multitask_forward.3} parent=55 // pred_fallthru
        _
    $region56: #{multitask_forward.3} parent=5 // pred_fallthru
      _
    %p894 = scmp.le.s32.totalorder 2, %s19
    // Predicated region
    $region81: #{multitask_forward.3} parent=5 // pred_check
      %p895 = pneg %p894
    $region82: #{multitask_forward.3} parent=5 // pred_check_branch
      %897 = sbr.rel (%p895) target = $region84
    $region83: #{multitask_forward.3} parent=5 // pred_region
      %s898 = ssub.s32 %s19, 2
      // Predicated region
      $region85: #{multitask_forward.3} parent=83 // pred_check
        %p899 = pneg %p272
      $region86: #{multitask_forward.3} parent=83 // pred_check_branch
        %901 = sbr.rel (%p899) target = $region88
      $region87: #{multitask_forward.3} parent=83 // pred_region
        %p902 = scmp.lt.s32.totalorder %s30, 1
        %s903 = scalar_select %p902, %s30, 1
        %p904 = scmp.lt.s32.totalorder %s31, 0
        %s905 = scalar_select %p904, %s31, 0
        %s906 = smul.addr %s903, 2
        %s907 = sadd.s32 %s905, %s906
        %s908 = smul.addr %s907, 8
        %s909 = scalar_lea.vmem %s9, %s908
      $region88: #{multitask_forward.3} parent=83 // pred_fallthru
        _
      // Predicated region
      $region89: #{multitask_forward.3} parent=83 // pred_check
        %p910 = pneg %p300
      $region90: #{multitask_forward.3} parent=83 // pred_check_branch
        %912 = sbr.rel (%p910) target = $region92
      $region91: #{multitask_forward.3} parent=83 // pred_region
        %p913 = scmp.lt.s32.totalorder %s30, 1
        %s914 = scalar_select %p913, %s30, 1
        %p915 = scmp.lt.s32.totalorder %s31, 0
        %s916 = scalar_select %p915, %s31, 0
        %s917 = smul.addr %s914, 2
        %s918 = sadd.s32 %s916, %s917
        %s919 = smul.addr %s918, 4
        %s920 = scalar_lea.vmem %s10, %s919
      $region92: #{multitask_forward.3} parent=83 // pred_fallthru
        _
      // Predicated region
      $region93: #{multitask_forward.3} parent=83 // pred_check
        %p921 = pneg %p328
      $region94: #{multitask_forward.3} parent=83 // pred_check_branch
        %923 = sbr.rel (%p921) target = $region96
      $region95: #{multitask_forward.3} parent=83 // pred_region
        %p924 = scmp.lt.s32.totalorder %s30, 1
        %s925 = scalar_select %p924, %s30, 1
        %p926 = scmp.lt.s32.totalorder %s31, 0
        %s927 = scalar_select %p926, %s31, 0
        %s928 = smul.addr %s925, 2
        %s929 = sadd.s32 %s927, %s928
        %s930 = smul.addr %s929, 2
        %s931 = scalar_lea.vmem %s11, %s930
      $region96: #{multitask_forward.3} parent=83 // pred_fallthru
        _
      // Predicated region
      $region97: #{multitask_forward.3} parent=83 // pred_check
        %p932 = pneg %p354
      $region98: #{multitask_forward.3} parent=83 // pred_check_branch
        %934 = sbr.rel (%p932) target = $region100
      $region99: #{multitask_forward.3} parent=83 // pred_region
        %p935 = scmp.lt.s32.totalorder %s30, 1
        %s936 = scalar_select %p935, %s30, 1
        %s937 = smul.addr %s936, 4
        %s938 = scalar_lea.vmem %s12, %s937
      $region100: #{multitask_forward.3} parent=83 // pred_fallthru
        _
    $region84: #{multitask_forward.3} parent=5 // pred_fallthru
      _
  $region6: #{multitask_forward.3} parent=0 // loop_footer
    %s23 = sadd.s32 1, %s19
  $region7: #{multitask_forward.3} parent=0 // loop_footer_branch
    %18 = sbr.rel target = $region3
  $region8: #{multitask_forward.3} parent=0 // loop_exit
    _

// kernel: multitask_forward.4
$region0: #{multitask_forward.4}
  #allocation0 [shape = 'u32[]', space=smem, size = 0x4, offset = 0x4, fixed_abs, tag = 'smem constant byte address 0x4 - core index']
  #allocation1 [shape = 'u32[72,128]{1,0:T(1,128)}', space=vmem, size = 0x9000, scoped, tag = 'internal scratch']
  %s0 = inlined_call_operand.vmem [shape: f32[2,2,8,8], index: 0, kind: input, shape index: {}]
  %s1 = inlined_call_operand.vmem [shape: f32[2,2,4,4], index: 1, kind: input, shape index: {}]
  %s2 = inlined_call_operand.vmem [shape: f32[2,2,2,2], index: 2, kind: input, shape index: {}]
  %s3 = inlined_call_operand.vmem [shape: bf16[4,2], index: 3, kind: input, shape index: {}]
  %s4 = inlined_call_operand.vmem [shape: bf16[2,4], index: 4, kind: input, shape index: {}]
  %s5 = inlined_call_operand.vmem [shape: bf16[8,4], index: 5, kind: input, shape index: {}]
  %s6 = inlined_call_operand.vmem [shape: bf16[4,8], index: 6, kind: input, shape index: {}]
  %s7 = inlined_call_operand.vmem [shape: bf16[16,8], index: 7, kind: input, shape index: {}]
  %s8 = inlined_call_operand.vmem [shape: bf16[8,16], index: 8, kind: input, shape index: {}]
  %s9 = inlined_call_operand.hbm [shape: f32[2,1,16,16], index: 9, kind: output, shape index: {0}]
  %s10 = inlined_call_operand.hbm [shape: f32[2,1,16,16], index: 10, kind: output, shape index: {1}]
  %11 = xla_tuple %s9, %s10
  %s12 = sld [smem:[#allocation0]]
  $region77: #{multitask_forward.4} parent=0
    _
  %s14 = ssub.s32 1, %s12
  %s15 = scalar_select 0, %s14, %s12
  $region1: #{multitask_forward.4} parent=0
    #allocation2 [shape = 'u8[16384]{0}', space=vmem, size = 0x4000, scoped, tag = 'output window, operand 0']
    #allocation3 [shape = 's32[2]{0}', space=sflag, size = 0x8, scoped, tag = 'scoped memory for multitask_forward.4']
    #allocation4 [shape = 'u8[16384]{0}', space=vmem, size = 0x4000, scoped, tag = 'output window, operand 1']
    #allocation5 [shape = 's32[2]{0}', space=sflag, size = 0x8, scoped, tag = 'scoped memory for multitask_forward.4']
    %16 = vsyncpa [#allocation3], 0
    %s17 = scalar_lea.sflag [#allocation3], 1
    %18 = vsyncpa %s17, 0
    %19 = vsyncpa [#allocation5], 0
    %s20 = scalar_lea.sflag [#allocation5], 1
    %21 = vsyncpa %s20, 0
    loop: start=0, step=1, limit=4
    $region2: #{multitask_forward.4} parent=1 // loop_pre_header
      _
    $region3: #{multitask_forward.4} parent=1 // loop_header
      %s23 = sphi 0, %s27
      %p24 = scmp.ge.s32.totalorder %s23, 4
      %s30 = sphi 0, %s42
      %s31 = sphi 0, %s38
      %s32 = sphi 0, %s30
      %s33 = sphi 0, %s31
      %s34 = sphi 0, %s32
      %s35 = sphi 0, %s33
      %s47 = sphi 0, %s49
      %s50 = sphi 0, %s47
      %s51 = sphi 0, %s50
      %s67 = sphi 0, %s51
      %s75 = sphi 0, %s77
      %s78 = sphi 0, %s75
      %s79 = sphi 0, %s78
      %s95 = sphi 0, %s79
      %s103 = sphi 0, %s105
      %s106 = sphi 0, %s103
      %s107 = sphi 0, %s106
      %s123 = sphi 0, %s107
      %s127 = sphi 0, %s127
      %s129 = sphi 0, %s127
      %s130 = sphi 0, %s129
      %s144 = sphi 0, %s130
      %s148 = sphi 0, %s148
      %s150 = sphi 0, %s148
      %s151 = sphi 0, %s150
      %s165 = sphi 0, %s151
      %s169 = sphi 0, %s169
      %s171 = sphi 0, %s169
      %s172 = sphi 0, %s171
      %s186 = sphi 0, %s172
      %s190 = sphi 0, %s190
      %s192 = sphi 0, %s190
      %s193 = sphi 0, %s192
      %s207 = sphi 0, %s193
      %s211 = sphi 0, %s211
      %s213 = sphi 0, %s211
      %s214 = sphi 0, %s213
      %s228 = sphi 0, %s214
      %s232 = sphi 0, %s232
      %s234 = sphi 0, %s232
      %s235 = sphi 0, %s234
      %s249 = sphi 0, %s235
      %s257 = sphi 0, %s259
      %s260 = sphi 0, %s257
      %s261 = sphi 0, %s260
      %s277 = sphi 0, %s261
      %s285 = sphi 0, %s287
      %s288 = sphi 0, %s285
      %s289 = sphi 0, %s288
      %s305 = sphi 0, %s289
    $region4: #{multitask_forward.4} parent=1 // loop_header_branch
      %26 = sbr.rel (%p24) target = $region8
    $region5: #{multitask_forward.4} parent=1 // loop_body
      %s28 = ssub.s32 %s23, 1
      %s29 = ssub.s32 %s23, 2
      %s36 = sadd.s32 1, %s31
      %p37 = scmp.ge.s32.totalorder %s36, 1
      %s38 = scalar_select %p37, 0, %s36
      %s39 = sadd.s32 1, %s30
      %s40 = scalar_select %p37, %s39, %s30
      %p41 = scmp.ge.s32.totalorder %s40, 2
      %s42 = scalar_select %p41, 0, %s40
      %s43 = ssub.s32 %s30, %s42
      %s44 = ssub.s32 %s31, %s38
      %s45 = sor.u32 %s43, %s44
      %p46 = scmp.eq.s32.totalorder %s45, 0
      %s48 = sadd.s32 %s47, 1
      %s49 = scalar_select %p46, %s47, %s48
      %p52 = pneg %p46
      %p53 = scmp.eq.s32.totalorder %s23, 1
      %p54 = por %p52, %p53
      %p55 = scmp.ne.s32.totalorder %s47, %s50
      %p56 = scmp.eq.s32.totalorder %s23, 0
      %p57 = por %p55, %p56
      %p58 = scmp.ne.s32.totalorder %s47, %s50
      %p59 = scmp.eq.s32.totalorder %s28, 1
      %p60 = por %p58, %p59
      %p61 = scmp.ne.s32.totalorder %s50, %s51
      %p62 = scmp.eq.s32.totalorder %s28, 0
      %p63 = por %p61, %p62
      %p64 = scmp.ne.s32.totalorder %s50, %s51
      %p65 = scmp.eq.s32.totalorder %s29, 1
      %p66 = por %p64, %p65
      %p68 = scmp.ne.s32.totalorder %s51, %s67
      %p69 = scmp.eq.s32.totalorder %s29, 0
      %p70 = por %p68, %p69
      %s71 = ssub.s32 %s30, %s42
      %s72 = ssub.s32 %s31, %s38
      %s73 = sor.u32 %s71, %s72
      %p74 = scmp.eq.s32.totalorder %s73, 0
      %s76 = sadd.s32 %s75, 1
      %s77 = scalar_select %p74, %s75, %s76
      %p80 = pneg %p74
      %p81 = scmp.eq.s32.totalorder %s23, 1
      %p82 = por %p80, %p81
      %p83 = scmp.ne.s32.totalorder %s75, %s78
      %p84 = scmp.eq.s32.totalorder %s23, 0
      %p85 = por %p83, %p84
      %p86 = scmp.ne.s32.totalorder %s75, %s78
      %p87 = scmp.eq.s32.totalorder %s28, 1
      %p88 = por %p86, %p87
      %p89 = scmp.ne.s32.totalorder %s78, %s79
      %p90 = scmp.eq.s32.totalorder %s28, 0
      %p91 = por %p89, %p90
      %p92 = scmp.ne.s32.totalorder %s78, %s79
      %p93 = scmp.eq.s32.totalorder %s29, 1
      %p94 = por %p92, %p93
      %p96 = scmp.ne.s32.totalorder %s79, %s95
      %p97 = scmp.eq.s32.totalorder %s29, 0
      %p98 = por %p96, %p97
      %s99 = ssub.s32 %s30, %s42
      %s100 = ssub.s32 %s31, %s38
      %s101 = sor.u32 %s99, %s100
      %p102 = scmp.eq.s32.totalorder %s101, 0
      %s104 = sadd.s32 %s103, 1
      %s105 = scalar_select %p102, %s103, %s104
      %p108 = pneg %p102
      %p109 = scmp.eq.s32.totalorder %s23, 1
      %p110 = por %p108, %p109
      %p111 = scmp.ne.s32.totalorder %s103, %s106
      %p112 = scmp.eq.s32.totalorder %s23, 0
      %p113 = por %p111, %p112
      %p114 = scmp.ne.s32.totalorder %s103, %s106
      %p115 = scmp.eq.s32.totalorder %s28, 1
      %p116 = por %p114, %p115
      %p117 = scmp.ne.s32.totalorder %s106, %s107
      %p118 = scmp.eq.s32.totalorder %s28, 0
      %p119 = por %p117, %p118
      %p120 = scmp.ne.s32.totalorder %s106, %s107
      %p121 = scmp.eq.s32.totalorder %s29, 1
      %p122 = por %p120, %p121
      %p124 = scmp.ne.s32.totalorder %s107, %s123
      %p125 = scmp.eq.s32.totalorder %s29, 0
      %p126 = por %p124, %p125
      %s128 = sadd.s32 %s127, 1
      %p131 = scmp.eq.s32.totalorder %s23, 1
      %p132 = scmp.ne.s32.totalorder %s127, %s129
      %p133 = scmp.eq.s32.totalorder %s23, 0
      %p134 = por %p132, %p133
      %p135 = scmp.ne.s32.totalorder %s127, %s129
      %p136 = scmp.eq.s32.totalorder %s28, 1
      %p137 = por %p135, %p136
      %p138 = scmp.ne.s32.totalorder %s129, %s130
      %p139 = scmp.eq.s32.totalorder %s28, 0
      %p140 = por %p138, %p139
      %p141 = scmp.ne.s32.totalorder %s129, %s130
      %p142 = scmp.eq.s32.totalorder %s29, 1
      %p143 = por %p141, %p142
      %p145 = scmp.ne.s32.totalorder %s130, %s144
      %p146 = scmp.eq.s32.totalorder %s29, 0
      %p147 = por %p145, %p146
      %s149 = sadd.s32 %s148, 1
      %p152 = scmp.eq.s32.totalorder %s23, 1
      %p153 = scmp.ne.s32.totalorder %s148, %s150
      %p154 = scmp.eq.s32.totalorder %s23, 0
      %p155 = por %p153, %p154
      %p156 = scmp.ne.s32.totalorder %s148, %s150
      %p157 = scmp.eq.s32.totalorder %s28, 1
      %p158 = por %p156, %p157
      %p159 = scmp.ne.s32.totalorder %s150, %s151
      %p160 = scmp.eq.s32.totalorder %s28, 0
      %p161 = por %p159, %p160
      %p162 = scmp.ne.s32.totalorder %s150, %s151
      %p163 = scmp.eq.s32.totalorder %s29, 1
      %p164 = por %p162, %p163
      %p166 = scmp.ne.s32.totalorder %s151, %s165
      %p167 = scmp.eq.s32.totalorder %s29, 0
      %p168 = por %p166, %p167
      %s170 = sadd.s32 %s169, 1
      %p173 = scmp.eq.s32.totalorder %s23, 1
      %p174 = scmp.ne.s32.totalorder %s169, %s171
      %p175 = scmp.eq.s32.totalorder %s23, 0
      %p176 = por %p174, %p175
      %p177 = scmp.ne.s32.totalorder %s169, %s171
      %p178 = scmp.eq.s32.totalorder %s28, 1
      %p179 = por %p177, %p178
      %p180 = scmp.ne.s32.totalorder %s171, %s172
      %p181 = scmp.eq.s32.totalorder %s28, 0
      %p182 = por %p180, %p181
      %p183 = scmp.ne.s32.totalorder %s171, %s172
      %p184 = scmp.eq.s32.totalorder %s29, 1
      %p185 = por %p183, %p184
      %p187 = scmp.ne.s32.totalorder %s172, %s186
      %p188 = scmp.eq.s32.totalorder %s29, 0
      %p189 = por %p187, %p188
      %s191 = sadd.s32 %s190, 1
      %p194 = scmp.eq.s32.totalorder %s23, 1
      %p195 = scmp.ne.s32.totalorder %s190, %s192
      %p196 = scmp.eq.s32.totalorder %s23, 0
      %p197 = por %p195, %p196
      %p198 = scmp.ne.s32.totalorder %s190, %s192
      %p199 = scmp.eq.s32.totalorder %s28, 1
      %p200 = por %p198, %p199
      %p201 = scmp.ne.s32.totalorder %s192, %s193
      %p202 = scmp.eq.s32.totalorder %s28, 0
      %p203 = por %p201, %p202
      %p204 = scmp.ne.s32.totalorder %s192, %s193
      %p205 = scmp.eq.s32.totalorder %s29, 1
      %p206 = por %p204, %p205
      %p208 = scmp.ne.s32.totalorder %s193, %s207
      %p209 = scmp.eq.s32.totalorder %s29, 0
      %p210 = por %p208, %p209
      %s212 = sadd.s32 %s211, 1
      %p215 = scmp.eq.s32.totalorder %s23, 1
      %p216 = scmp.ne.s32.totalorder %s211, %s213
      %p217 = scmp.eq.s32.totalorder %s23, 0
      %p218 = por %p216, %p217
      %p219 = scmp.ne.s32.totalorder %s211, %s213
      %p220 = scmp.eq.s32.totalorder %s28, 1
      %p221 = por %p219, %p220
      %p222 = scmp.ne.s32.totalorder %s213, %s214
      %p223 = scmp.eq.s32.totalorder %s28, 0
      %p224 = por %p222, %p223
      %p225 = scmp.ne.s32.totalorder %s213, %s214
      %p226 = scmp.eq.s32.totalorder %s29, 1
      %p227 = por %p225, %p226
      %p229 = scmp.ne.s32.totalorder %s214, %s228
      %p230 = scmp.eq.s32.totalorder %s29, 0
      %p231 = por %p229, %p230
      %s233 = sadd.s32 %s232, 1
      %p236 = scmp.eq.s32.totalorder %s23, 1
      %p237 = scmp.ne.s32.totalorder %s232, %s234
      %p238 = scmp.eq.s32.totalorder %s23, 0
      %p239 = por %p237, %p238
      %p240 = scmp.ne.s32.totalorder %s232, %s234
      %p241 = scmp.eq.s32.totalorder %s28, 1
      %p242 = por %p240, %p241
      %p243 = scmp.ne.s32.totalorder %s234, %s235
      %p244 = scmp.eq.s32.totalorder %s28, 0
      %p245 = por %p243, %p244
      %p246 = scmp.ne.s32.totalorder %s234, %s235
      %p247 = scmp.eq.s32.totalorder %s29, 1
      %p248 = por %p246, %p247
      %p250 = scmp.ne.s32.totalorder %s235, %s249
      %p251 = scmp.eq.s32.totalorder %s29, 0
      %p252 = por %p250, %p251
      %s253 = ssub.s32 %s30, %s42
      %s254 = ssub.s32 %s31, %s38
      %s255 = sor.u32 %s253, %s254
      %p256 = scmp.eq.s32.totalorder %s255, 0
      %s258 = sadd.s32 %s257, 1
      %s259 = scalar_select %p256, %s257, %s258
      %p262 = pneg %p256
      %p263 = scmp.eq.s32.totalorder %s23, 1
      %p264 = por %p262, %p263
      %p265 = scmp.ne.s32.totalorder %s257, %s260
      %p266 = scmp.eq.s32.totalorder %s23, 0
      %p267 = por %p265, %p266
      %p268 = scmp.ne.s32.totalorder %s257, %s260
      %p269 = scmp.eq.s32.totalorder %s28, 1
      %p270 = por %p268, %p269
      %p271 = scmp.ne.s32.totalorder %s260, %s261
      %p272 = scmp.eq.s32.totalorder %s28, 0
      %p273 = por %p271, %p272
      %p274 = scmp.ne.s32.totalorder %s260, %s261
      %p275 = scmp.eq.s32.totalorder %s29, 1
      %p276 = por %p274, %p275
      %p278 = scmp.ne.s32.totalorder %s261, %s277
      %p279 = scmp.eq.s32.totalorder %s29, 0
      %p280 = por %p278, %p279
      %s281 = ssub.s32 %s30, %s42
      %s282 = ssub.s32 %s31, %s38
      %s283 = sor.u32 %s281, %s282
      %p284 = scmp.eq.s32.totalorder %s283, 0
      %s286 = sadd.s32 %s285, 1
      %s287 = scalar_select %p284, %s285, %s286
      %p290 = pneg %p284
      %p291 = scmp.eq.s32.totalorder %s23, 1
      %p292 = por %p290, %p291
      %p293 = scmp.ne.s32.totalorder %s285, %s288
      %p294 = scmp.eq.s32.totalorder %s23, 0
      %p295 = por %p293, %p294
      %p296 = scmp.ne.s32.totalorder %s285, %s288
      %p297 = scmp.eq.s32.totalorder %s28, 1
      %p298 = por %p296, %p297
      %p299 = scmp.ne.s32.totalorder %s288, %s289
      %p300 = scmp.eq.s32.totalorder %s28, 0
      %p301 = por %p299, %p300
      %p302 = scmp.ne.s32.totalorder %s288, %s289
      %p303 = scmp.eq.s32.totalorder %s29, 1
      %p304 = por %p302, %p303
      %p306 = scmp.ne.s32.totalorder %s289, %s305
      %p307 = scmp.eq.s32.totalorder %s29, 0
      %p308 = por %p306, %p307
      %p309 = scmp.le.s32.totalorder 1, %s23
      %p310 = scmp.lt.s32.totalorder %s23, 3
      %p311 = pnand %p309, %p310
      %p312 = pneg %p311
      // Predicated region
      $region9: #{multitask_forward.4} parent=5 // pred_check
        _
      $region10: #{multitask_forward.4} parent=5 // pred_check_branch
        %314 = sbr.rel (%p311) target = $region12
      $region11: #{multitask_forward.4} parent=5 // pred_region
        %s315 = ssub.s32 %s23, 1
        // Predicated region
        $region13: #{multitask_forward.4} parent=11 // pred_check
          %p316 = pneg %p140
        $region14: #{multitask_forward.4} parent=11 // pred_check_branch
          %318 = sbr.rel (%p316) target = $region16
        $region15: #{multitask_forward.4} parent=11 // pred_region
          _
        $region16: #{multitask_forward.4} parent=11 // pred_fallthru
          _
        // Predicated region
        $region17: #{multitask_forward.4} parent=11 // pred_check
          %p319 = pneg %p161
        $region18: #{multitask_forward.4} parent=11 // pred_check_branch
          %321 = sbr.rel (%p319) target = $region20
        $region19: #{multitask_forward.4} parent=11 // pred_region
          _
        $region20: #{multitask_forward.4} parent=11 // pred_fallthru
          _
        // Predicated region
        $region21: #{multitask_forward.4} parent=11 // pred_check
          %p322 = pneg %p182
        $region22: #{multitask_forward.4} parent=11 // pred_check_branch
          %324 = sbr.rel (%p322) target = $region24
        $region23: #{multitask_forward.4} parent=11 // pred_region
          _
        $region24: #{multitask_forward.4} parent=11 // pred_fallthru
          _
        // Predicated region
        $region25: #{multitask_forward.4} parent=11 // pred_check
          %p325 = pneg %p203
        $region26: #{multitask_forward.4} parent=11 // pred_check_branch
          %327 = sbr.rel (%p325) target = $region28
        $region27: #{multitask_forward.4} parent=11 // pred_region
          _
        $region28: #{multitask_forward.4} parent=11 // pred_fallthru
          _
        // Predicated region
        $region29: #{multitask_forward.4} parent=11 // pred_check
          %p328 = pneg %p224
        $region30: #{multitask_forward.4} parent=11 // pred_check_branch
          %330 = sbr.rel (%p328) target = $region32
        $region31: #{multitask_forward.4} parent=11 // pred_region
          _
        $region32: #{multitask_forward.4} parent=11 // pred_fallthru
          _
        // Predicated region
        $region33: #{multitask_forward.4} parent=11 // pred_check
          %p331 = pneg %p245
        $region34: #{multitask_forward.4} parent=11 // pred_check_branch
          %333 = sbr.rel (%p331) target = $region36
        $region35: #{multitask_forward.4} parent=11 // pred_region
          _
        $region36: #{multitask_forward.4} parent=11 // pred_fallthru
          _
      $region12: #{multitask_forward.4} parent=5 // pred_fallthru
        _
      %p334 = scmp.lt.s32.totalorder %s23, 2
      // Predicated region
      $region37: #{multitask_forward.4} parent=5 // pred_check
        %p335 = pneg %p334
      $region38: #{multitask_forward.4} parent=5 // pred_check_branch
        %337 = sbr.rel (%p335) target = $region40
      $region39: #{multitask_forward.4} parent=5 // pred_region
        // Predicated region
        $region41: #{multitask_forward.4} parent=39 // pred_check
          %p338 = pneg %p57
        $region42: #{multitask_forward.4} parent=39 // pred_check_branch
          %340 = sbr.rel (%p338) target = $region44
        $region43: #{multitask_forward.4} parent=39 // pred_region
          %p341 = scmp.lt.s32.totalorder %s30, 1
          %s342 = scalar_select %p341, %s30, 1
          %p343 = scmp.lt.s32.totalorder %s31, 0
          %s344 = scalar_select %p343, %s31, 0
          %s345 = smul.addr %s342, 2
          %s346 = sadd.s32 %s344, %s345
          %s347 = smul.addr %s346, 8
          %s348 = scalar_lea.vmem %s0, %s347
        $region44: #{multitask_forward.4} parent=39 // pred_fallthru
          _
        // Predicated region
        $region45: #{multitask_forward.4} parent=39 // pred_check
          %p349 = pneg %p85
        $region46: #{multitask_forward.4} parent=39 // pred_check_branch
          %351 = sbr.rel (%p349) target = $region48
        $region47: #{multitask_forward.4} parent=39 // pred_region
          %p352 = scmp.lt.s32.totalorder %s30, 1
          %s353 = scalar_select %p352, %s30, 1
          %p354 = scmp.lt.s32.totalorder %s31, 0
          %s355 = scalar_select %p354, %s31, 0
          %s356 = smul.addr %s353, 2
          %s357 = sadd.s32 %s355, %s356
          %s358 = smul.addr %s357, 4
          %s359 = scalar_lea.vmem %s1, %s358
        $region48: #{multitask_forward.4} parent=39 // pred_fallthru
          _
        // Predicated region
        $region49: #{multitask_forward.4} parent=39 // pred_check
          %p360 = pneg %p113
        $region50: #{multitask_forward.4} parent=39 // pred_check_branch
          %362 = sbr.rel (%p360) target = $region52
        $region51: #{multitask_forward.4} parent=39 // pred_region
          %p363 = scmp.lt.s32.totalorder %s30, 1
          %s364 = scalar_select %p363, %s30, 1
          %p365 = scmp.lt.s32.totalorder %s31, 0
          %s366 = scalar_select %p365, %s31, 0
          %s367 = smul.addr %s364, 2
          %s368 = sadd.s32 %s366, %s367
          %s369 = smul.addr %s368, 2
          %s370 = scalar_lea.vmem %s2, %s369
        $region52: #{multitask_forward.4} parent=39 // pred_fallthru
          _
      $region40: #{multitask_forward.4} parent=5 // pred_fallthru
        _
      %p371 = scmp.le.s32.totalorder 1, %s23
      %p372 = scmp.lt.s32.totalorder %s23, 3
      %p373 = pnand %p371, %p372
      %p374 = pneg %p373
      // Predicated region
      $region53: #{multitask_forward.4} parent=5 // pred_check
        _
      $region54: #{multitask_forward.4} parent=5 // pred_check_branch
        %376 = sbr.rel (%p373) target = $region56
      $region55: #{multitask_forward.4} parent=5 // pred_region
        %s377 = ssub.s32 %s23, 1
        %p378 = scmp.lt.s32.totalorder %s32, 1
        %s379 = scalar_select %p378, %s32, 1
        %p380 = scmp.lt.s32.totalorder %s33, 0
        %s381 = scalar_select %p380, %s33, 0
        %s382 = smul.addr %s379, 2
        %s383 = sadd.s32 %s381, %s382
        %s384 = smul.addr %s383, 8
        %s385 = scalar_lea.vmem %s0, %s384
        %p386 = pneg %p63
        %p387 = pneg %p60
        %p388 = scmp.lt.s32.totalorder %s32, 1
        %s389 = scalar_select %p388, %s32, 1
        %p390 = scmp.lt.s32.totalorder %s33, 0
        %s391 = scalar_select %p390, %s33, 0
        %s392 = smul.addr %s389, 2
        %s393 = sadd.s32 %s391, %s392
        %s394 = smul.addr %s393, 4
        %s395 = scalar_lea.vmem %s1, %s394
        %p396 = pneg %p91
        %p397 = pneg %p88
        %p398 = scmp.lt.s32.totalorder %s32, 1
        %s399 = scalar_select %p398, %s32, 1
        %p400 = scmp.lt.s32.totalorder %s33, 0
        %s401 = scalar_select %p400, %s33, 0
        %s402 = smul.addr %s399, 2
        %s403 = sadd.s32 %s401, %s402
        %s404 = smul.addr %s403, 2
        %s405 = scalar_lea.vmem %s2, %s404
        %p406 = pneg %p119
        %p407 = pneg %p116
        %p408 = pneg %p140
        %p409 = pneg %p137
        %p410 = pneg %p161
        %p411 = pneg %p158
        %p412 = pneg %p182
        %p413 = pneg %p179
        %p414 = pneg %p203
        %p415 = pneg %p200
        %p416 = pneg %p224
        %p417 = pneg %p221
        %p418 = pneg %p245
        %p419 = pneg %p242
        %p420 = pneg %p273
        %p421 = pneg %p270
        %s422 = sand.u32 %s260, 1
        %s423 = scalar_lea.sflag [#allocation3], %s422
        %s424 = sand.u32 %s260, 1
        %s425 = smul.addr %s424, 16
        %s426 = scalar_lea.vmem [#allocation2], %s425
        %p427 = pneg %p301
        %p428 = pneg %p298
        %s429 = sand.u32 %s288, 1
        %s430 = scalar_lea.sflag [#allocation5], %s429
        %s431 = sand.u32 %s288, 1
        %s432 = smul.addr %s431, 16
        %s433 = scalar_lea.vmem [#allocation4], %s432
        %p434 = scmp.lt.s32.totalorder %s32, 1
        %s435 = scalar_select %p434, %s32, 1
        %p436 = scmp.lt.s32.totalorder %s33, 0
        %s437 = scalar_select %p436, %s33, 0
        %s438 = smul.addr %s435, 2
        %s439 = sadd.s32 %s437, %s438
        %s440 = smul.addr %s439, 8
        %s441 = scalar_lea.vmem %s0, %s440
        %p442 = scmp.lt.s32.totalorder %s32, 1
        %s443 = scalar_select %p442, %s32, 1
        %p444 = scmp.lt.s32.totalorder %s33, 0
        %s445 = scalar_select %p444, %s33, 0
        %s446 = smul.addr %s443, 2
        %s447 = sadd.s32 %s445, %s446
        %s448 = smul.addr %s447, 4
        %s449 = scalar_lea.vmem %s1, %s448
        %p450 = scmp.lt.s32.totalorder %s32, 1
        %s451 = scalar_select %p450, %s32, 1
        %p452 = scmp.lt.s32.totalorder %s33, 0
        %s453 = scalar_select %p452, %s33, 0
        %s454 = smul.addr %s451, 2
        %s455 = sadd.s32 %s453, %s454
        %s456 = smul.addr %s455, 2
        %s457 = scalar_lea.vmem %s2, %s456
        %s458 = smul.u32 2, %s33
        %s459 = smul.u32 2, %s33
        %v461 = vld [vmem:[%s457] sm:$0x3]
        %v462 = vld [vmem:[%s449] sm:$0xf]
        %v463 = vld [vmem:[%s3] sm:$0x3]
        %v464 = vpack.c.bf16 %v461, %v461
        %vm465 = vcmask 15360
        %v467 = vsel %vm465, %v463, 0
        %vm469 = vcmask 1040384
        %v471 = vsel %vm469, %v464, 0
        %473 = vmatpush.bf16.msra.mxu0 0
        %474 = vmatpush.bf16.msra.mxu0 0
        %475 = vmatpush.bf16.msra.mxu0 0
        %476 = vmatpush.bf16.msra.mxu0 0
        %477 = vmatpush.bf16.msra.mxu0 0
        %478 = vmatpush.bf16.msra.mxu0 0
        %479 = vmatpush.bf16.msra.mxu0 0
        %480 = vmatpush.bf16.msra.mxu0 %v471
        %481 = vmatmul.bf16.gmra.mxu0 %v467
        %v482 = vpop.f32.mrf.mxu0
        %v483 = vadd.f32 0.0, %v482
        %v484 = vpop.f32.mrf.mxu0
        %485 = vdwg.mxu0
        %v486 = vpack.c.bf16 %v483, %v483
        %v487 = vld [vmem:[%s4] sm:$0x1]
        %v489 = vsel %vm465, %v486, 0
        %v492 = vsel %vm469, %v487, 0
        %494 = vmatpush.bf16.msra.mxu0 0
        %495 = vmatpush.bf16.msra.mxu0 0
        %496 = vmatpush.bf16.msra.mxu0 0
        %497 = vmatpush.bf16.msra.mxu0 0
        %498 = vmatpush.bf16.msra.mxu0 0
        %499 = vmatpush.bf16.msra.mxu0 0
        %500 = vmatpush.bf16.msra.mxu0 0
        %501 = vmatpush.bf16.msra.mxu0 %v492
        %502 = vmatmul.bf16.gmra.mxu0 %v489
        %v503 = vpop.f32.mrf.mxu0
        %v504 = vadd.f32 0.0, %v503
        %v505 = vpop.f32.mrf.mxu0
        %506 = vdwg.mxu0
        %v507 = vadd.f32 %v462, %v504
        %v508 = vld [vmem:[%s441] sm:$0xff]
        %v509 = vld [vmem:[%s5] sm:$0xf]
        %v510 = vpack.c.bf16 %v507, %v507
        %vm511 = vcmask 31744
        %v513 = vsel %vm511, %v509, 0
        %vm515 = vcmask 1041408
        %v517 = vsel %vm515, %v510, 0
        %519 = vmatpush.bf16.msra.mxu0 0
        %520 = vmatpush.bf16.msra.mxu0 0
        %521 = vmatpush.bf16.msra.mxu0 0
        %522 = vmatpush.bf16.msra.mxu0 0
        %523 = vmatpush.bf16.msra.mxu0 0
        %524 = vmatpush.bf16.msra.mxu0 0
        %525 = vmatpush.bf16.msra.mxu0 0
        %526 = vmatpush.bf16.msra.mxu0 %v517
        %527 = vmatmul.bf16.gmra.mxu0 %v513
        %v528 = vpop.f32.mrf.mxu0
        %v529 = vadd.f32 0.0, %v528
        %v530 = vpop.f32.mrf.mxu0
        %531 = vdwg.mxu0
        %v532 = vpack.c.bf16 %v529, %v529
        %v533 = vld [vmem:[%s6] sm:$0x3]
        %v535 = vsel %vm511, %v532, 0
        %v538 = vsel %vm515, %v533, 0
        %540 = vmatpush.bf16.msra.mxu0 0
        %541 = vmatpush.bf16.msra.mxu0 0
        %542 = vmatpush.bf16.msra.mxu0 0
        %543 = vmatpush.bf16.msra.mxu0 0
        %544 = vmatpush.bf16.msra.mxu0 0
        %545 = vmatpush.bf16.msra.mxu0 0
        %546 = vmatpush.bf16.msra.mxu0 0
        %547 = vmatpush.bf16.msra.mxu0 %v538
        %548 = vmatmul.bf16.gmra.mxu0 %v535
        %v549 = vpop.f32.mrf.mxu0
        %v550 = vadd.f32 0.0, %v549
        %v551 = vpop.f32.mrf.mxu0
        %552 = vdwg.mxu0
        %v553 = vadd.f32 %v508, %v550
        %v554 = vld [vmem:[%s7] sm:$0xf]
        %v555 = vld [vmem:[%s7 + $0x4] sm:$0xf]
        %v556 = vpack.c.bf16 %v553, %v553
        %v559 = vunpack.c.l.b16 %v554
        %v560 = vunpack.c.l.b16 %v555
        %v561 = vpack.c.b16 %v560, %v559
        %vm562 = vcmask 64512
        %v564 = vsel %vm562, %v561, 0
        %vm566 = vcmask 1043456
        %v568 = vsel %vm566, %v556, 0
        %570 = vmatpush.bf16.msra.mxu0 0
        %571 = vmatpush.bf16.msra.mxu0 0
        %572 = vmatpush.bf16.msra.mxu0 0
        %573 = vmatpush.bf16.msra.mxu0 0
        %574 = vmatpush.bf16.msra.mxu0 0
        %575 = vmatpush.bf16.msra.mxu0 0
        %576 = vmatpush.bf16.msra.mxu0 0
        %577 = vmatpush.bf16.msra.mxu0 %v568
        %578 = vmatmul.bf16.gmra.mxu0 %v564
        %v579 = vpop.f32.mrf.mxu0
        %v580 = vadd.f32 0.0, %v579
        %v581 = vpop.f32.mrf.mxu0
        %v582 = vadd.f32 0.0, %v581
        %583 = vdwg.mxu0
        %v584 = vpack.c.bf16 %v582, %v580
        %v585 = vld [vmem:[%s8] sm:$0xf]
        %v587 = vsel %vm562, %v584, 0
        %v590 = vsel %vm566, %v585, 0
        %592 = vmatpush.bf16.msra.mxu0 0
        %593 = vmatpush.bf16.msra.mxu0 0
        %594 = vmatpush.bf16.msra.mxu0 0
        %595 = vmatpush.bf16.msra.mxu0 0
        %596 = vmatpush.bf16.msra.mxu0 0
        %597 = vmatpush.bf16.msra.mxu0 0
        %598 = vmatpush.bf16.msra.mxu0 0
        %599 = vmatpush.bf16.msra.mxu0 %v590
        %600 = vmatmul.bf16.gmra.mxu0 %v587
        %v601 = vpop.f32.mrf.mxu0
        %v602 = vadd.f32 0.0, %v601
        %v603 = vpop.f32.mrf.mxu0
        %v604 = vadd.f32 0.0, %v603
        %605 = vdwg.mxu0
        %vm606 = vcmask 130048
        %607 = vst.msk [vmem:[%s426] sm:$0xff] %vm606, %v602
        %608 = vst.msk [vmem:[%s426 + $0x8] sm:$0xff] %vm606, %v604
        %s609 = scalar_lea.vmem %s457, 2
        %v610 = vld [vmem:[%s609] sm:$0x3]
        %s611 = scalar_lea.vmem %s449, 4
        %v612 = vld [vmem:[%s611] sm:$0xf]
        %v613 = vld [vmem:[%s3] sm:$0x3]
        %v614 = vpack.c.bf16 %v610, %v610
        %v616 = vsel %vm465, %v613, 0
        %v619 = vsel %vm469, %v614, 0
        %621 = vmatpush.bf16.msra.mxu0 0
        %622 = vmatpush.bf16.msra.mxu0 0
        %623 = vmatpush.bf16.msra.mxu0 0
        %624 = vmatpush.bf16.msra.mxu0 0
        %625 = vmatpush.bf16.msra.mxu0 0
        %626 = vmatpush.bf16.msra.mxu0 0
        %627 = vmatpush.bf16.msra.mxu0 0
        %628 = vmatpush.bf16.msra.mxu0 %v619
        %629 = vmatmul.bf16.gmra.mxu0 %v616
        %v630 = vpop.f32.mrf.mxu0
        %v631 = vadd.f32 0.0, %v630
        %v632 = vpop.f32.mrf.mxu0
        %633 = vdwg.mxu0
        %v634 = vpack.c.bf16 %v631, %v631
        %v635 = vld [vmem:[%s4] sm:$0x1]
        %v637 = vsel %vm465, %v634, 0
        %v640 = vsel %vm469, %v635, 0
        %642 = vmatpush.bf16.msra.mxu0 0
        %643 = vmatpush.bf16.msra.mxu0 0
        %644 = vmatpush.bf16.msra.mxu0 0
        %645 = vmatpush.bf16.msra.mxu0 0
        %646 = vmatpush.bf16.msra.mxu0 0
        %647 = vmatpush.bf16.msra.mxu0 0
        %648 = vmatpush.bf16.msra.mxu0 0
        %649 = vmatpush.bf16.msra.mxu0 %v640
        %650 = vmatmul.bf16.gmra.mxu0 %v637
        %v651 = vpop.f32.mrf.mxu0
        %v652 = vadd.f32 0.0, %v651
        %v653 = vpop.f32.mrf.mxu0
        %654 = vdwg.mxu0
        %v655 = vadd.f32 %v612, %v652
        %s656 = scalar_lea.vmem %s441, 8
        %v657 = vld [vmem:[%s656] sm:$0xff]
        %v658 = vld [vmem:[%s5] sm:$0xf]
        %v659 = vpack.c.bf16 %v655, %v655
        %v661 = vsel %vm511, %v658, 0
        %v664 = vsel %vm515, %v659, 0
        %666 = vmatpush.bf16.msra.mxu0 0
        %667 = vmatpush.bf16.msra.mxu0 0
        %668 = vmatpush.bf16.msra.mxu0 0
        %669 = vmatpush.bf16.msra.mxu0 0
        %670 = vmatpush.bf16.msra.mxu0 0
        %671 = vmatpush.bf16.msra.mxu0 0
        %672 = vmatpush.bf16.msra.mxu0 0
        %673 = vmatpush.bf16.msra.mxu0 %v664
        %674 = vmatmul.bf16.gmra.mxu0 %v661
        %v675 = vpop.f32.mrf.mxu0
        %v676 = vadd.f32 0.0, %v675
        %v677 = vpop.f32.mrf.mxu0
        %678 = vdwg.mxu0
        %v679 = vpack.c.bf16 %v676, %v676
        %v680 = vld [vmem:[%s6] sm:$0x3]
        %v682 = vsel %vm511, %v679, 0
        %v685 = vsel %vm515, %v680, 0
        %687 = vmatpush.bf16.msra.mxu0 0
        %688 = vmatpush.bf16.msra.mxu0 0
        %689 = vmatpush.bf16.msra.mxu0 0
        %690 = vmatpush.bf16.msra.mxu0 0
        %691 = vmatpush.bf16.msra.mxu0 0
        %692 = vmatpush.bf16.msra.mxu0 0
        %693 = vmatpush.bf16.msra.mxu0 0
        %694 = vmatpush.bf16.msra.mxu0 %v685
        %695 = vmatmul.bf16.gmra.mxu0 %v682
        %v696 = vpop.f32.mrf.mxu0
        %v697 = vadd.f32 0.0, %v696
        %v698 = vpop.f32.mrf.mxu0
        %699 = vdwg.mxu0
        %v700 = vadd.f32 %v657, %v697
        %v701 = vld [vmem:[%s7] sm:$0xf]
        %v702 = vld [vmem:[%s7 + $0x4] sm:$0xf]
        %v703 = vpack.c.bf16 %v700, %v700
        %v706 = vunpack.c.l.b16 %v701
        %v707 = vunpack.c.l.b16 %v702
        %v708 = vpack.c.b16 %v707, %v706
        %v710 = vsel %vm562, %v708, 0
        %v713 = vsel %vm566, %v703, 0
        %715 = vmatpush.bf16.msra.mxu0 0
        %716 = vmatpush.bf16.msra.mxu0 0
        %717 = vmatpush.bf16.msra.mxu0 0
        %718 = vmatpush.bf16.msra.mxu0 0
        %719 = vmatpush.bf16.msra.mxu0 0
        %720 = vmatpush.bf16.msra.mxu0 0
        %721 = vmatpush.bf16.msra.mxu0 0
        %722 = vmatpush.bf16.msra.mxu0 %v713
        %723 = vmatmul.bf16.gmra.mxu0 %v710
        %v724 = vpop.f32.mrf.mxu0
        %v725 = vadd.f32 0.0, %v724
        %v726 = vpop.f32.mrf.mxu0
        %v727 = vadd.f32 0.0, %v726
        %728 = vdwg.mxu0
        %v729 = vpack.c.bf16 %v727, %v725
        %v730 = vld [vmem:[%s8] sm:$0xf]
        %v732 = vsel %vm562, %v729, 0
        %v735 = vsel %vm566, %v730, 0
        %737 = vmatpush.bf16.msra.mxu0 0
        %738 = vmatpush.bf16.msra.mxu0 0
        %739 = vmatpush.bf16.msra.mxu0 0
        %740 = vmatpush.bf16.msra.mxu0 0
        %741 = vmatpush.bf16.msra.mxu0 0
        %742 = vmatpush.bf16.msra.mxu0 0
        %743 = vmatpush.bf16.msra.mxu0 0
        %744 = vmatpush.bf16.msra.mxu0 %v735
        %745 = vmatmul.bf16.gmra.mxu0 %v732
        %v746 = vpop.f32.mrf.mxu0
        %v747 = vadd.f32 0.0, %v746
        %v748 = vpop.f32.mrf.mxu0
        %v749 = vadd.f32 0.0, %v748
        %750 = vdwg.mxu0
        %751 = vst.msk [vmem:[%s433] sm:$0xff] %vm606, %v747
        %752 = vst.msk [vmem:[%s433 + $0x8] sm:$0xff] %vm606, %v749
        %s753 = sand.u32 %s260, 1
        %s754 = scalar_lea.sflag [#allocation3], %s753
        %s755 = sand.u32 %s260, 1
        %s756 = smul.addr %s755, 16
        %s757 = scalar_lea.vmem [#allocation2], %s756
        %s758 = sand.u32 %s288, 1
        %s759 = scalar_lea.sflag [#allocation5], %s758
        %s760 = sand.u32 %s288, 1
        %s761 = smul.addr %s760, 16
        %s762 = scalar_lea.vmem [#allocation4], %s761
        // Predicated region
        $region57: #{multitask_forward.4} parent=55 // pred_check
          %p763 = pneg %p270
        $region58: #{multitask_forward.4} parent=55 // pred_check_branch
          %765 = sbr.rel (%p763) target = $region60
        $region59: #{multitask_forward.4} parent=55 // pred_region
          %s766 = smul.u32 2, %s33
          %768 = vsyncadd %s754, 0
          %s769 = smul.addr %s32, 2
          %s770 = sadd.s32 %s766, %s769
          %s771 = smul.addr %s770, 8
          %s772 = scalar_lea.hbm %s9, %s771
          %s773 = sshll.u32 %s757, 4
          %s774 = int_to_ptr.vmem [resolvable:$true] %s773
          %s775 = sshll.u32 %s772, 4
          %s776 = int_to_ptr.hbm [resolvable:$true] %s775
          %781 = dma.vmem_to_hbm [thread:$0]  %s774, 256, %s776, %s754, 128, 128, 8
        $region60: #{multitask_forward.4} parent=55 // pred_fallthru
          _
        // Predicated region
        $region61: #{multitask_forward.4} parent=55 // pred_check
          %p782 = pneg %p298
        $region62: #{multitask_forward.4} parent=55 // pred_check_branch
          %784 = sbr.rel (%p782) target = $region64
        $region63: #{multitask_forward.4} parent=55 // pred_region
          %s785 = smul.u32 2, %s33
          %787 = vsyncadd %s759, 0
          %s788 = smul.addr %s32, 2
          %s789 = sadd.s32 %s785, %s788
          %s790 = smul.addr %s789, 8
          %s791 = scalar_lea.hbm %s10, %s790
          %s792 = sshll.u32 %s762, 4
          %s793 = int_to_ptr.vmem [resolvable:$true] %s792
          %s794 = sshll.u32 %s791, 4
          %s795 = int_to_ptr.hbm [resolvable:$true] %s794
          %800 = dma.vmem_to_hbm [thread:$0]  %s793, 256, %s795, %s759, 128, 128, 8
        $region64: #{multitask_forward.4} parent=55 // pred_fallthru
          _
      $region56: #{multitask_forward.4} parent=5 // pred_fallthru
        _
      %p801 = scmp.le.s32.totalorder 2, %s23
      // Predicated region
      $region65: #{multitask_forward.4} parent=5 // pred_check
        %p802 = pneg %p801
      $region66: #{multitask_forward.4} parent=5 // pred_check_branch
        %804 = sbr.rel (%p802) target = $region68
      $region67: #{multitask_forward.4} parent=5 // pred_region
        %s805 = ssub.s32 %s23, 2
        // Predicated region
        $region69: #{multitask_forward.4} parent=67 // pred_check
          %p806 = pneg %p276
        $region70: #{multitask_forward.4} parent=67 // pred_check_branch
          %808 = sbr.rel (%p806) target = $region72
        $region71: #{multitask_forward.4} parent=67 // pred_region
          %s809 = sand.u32 %s261, 1
          %s810 = scalar_lea.sflag [#allocation3], %s809
          %s811 = sand.u32 %s261, 1
          %s812 = smul.addr %s811, 16
          %s813 = scalar_lea.vmem [#allocation2], %s812
          %815 = dma.done %s810, 256
        $region72: #{multitask_forward.4} parent=67 // pred_fallthru
          _
        // Predicated region
        $region73: #{multitask_forward.4} parent=67 // pred_check
          %p816 = pneg %p304
        $region74: #{multitask_forward.4} parent=67 // pred_check_branch
          %818 = sbr.rel (%p816) target = $region76
        $region75: #{multitask_forward.4} parent=67 // pred_region
          %s819 = sand.u32 %s289, 1
          %s820 = scalar_lea.sflag [#allocation5], %s819
          %s821 = sand.u32 %s289, 1
          %s822 = smul.addr %s821, 16
          %s823 = scalar_lea.vmem [#allocation4], %s822
          %825 = dma.done %s820, 256
        $region76: #{multitask_forward.4} parent=67 // pred_fallthru
          _
      $region68: #{multitask_forward.4} parent=5 // pred_fallthru
        _
    $region6: #{multitask_forward.4} parent=1 // loop_footer
      %s27 = sadd.s32 1, %s23
    $region7: #{multitask_forward.4} parent=1 // loop_footer_branch
      %22 = sbr.rel target = $region3
    $region8: #{multitask_forward.4} parent=1 // loop_exit
      _
    %826 = vsyncpa [#allocation3], 1
    %s827 = scalar_lea.sflag [#allocation3], 1
    %828 = vsyncpa %s827, 1
    %829 = vsyncpa [#allocation5], 1
    %s830 = scalar_lea.sflag [#allocation5], 1
    %831 = vsyncpa %s830, 1

// kernel: multitask_forward.5
$region0: #{multitask_forward.5}
  #allocation0 [shape = 'u32[]', space=smem, size = 0x4, offset = 0x4, fixed_abs, tag = 'smem constant byte address 0x4 - core index']
  #allocation1 [shape = 'u32[72,128]{1,0:T(1,128)}', space=vmem, size = 0x9000, scoped, tag = 'internal scratch']
  %s0 = inlined_call_operand.vmem [shape: f32[2,4], index: 0, kind: input, shape index: {}]
  %s1 = inlined_call_operand.vmem [shape: f32[4,576], index: 1, kind: input, shape index: {}]
  %s2 = inlined_call_operand.vmem [shape: f32[1,576], index: 2, kind: input, shape index: {}]
  %s3 = inlined_call_operand.vmem [shape: bf16[576,1024], index: 3, kind: input, shape index: {}]
  %s4 = inlined_call_operand.vmem [shape: f32[1,1024], index: 4, kind: input, shape index: {}]
  %s5 = inlined_call_operand.vmem [shape: f32[1024,3], index: 5, kind: input, shape index: {}]
  %s6 = inlined_call_operand.vmem [shape: f32[1,3], index: 6, kind: input, shape index: {}]
  %s7 = inlined_call_operand.hbm [shape: f32[2,3], index: 7, kind: output, shape index: {}]
  %s8 = sld [smem:[#allocation0]]
  $region38: #{multitask_forward.5} parent=0
    _
  %s10 = ssub.s32 1, %s8
  %s11 = scalar_select 0, %s10, %s8
  $region1: #{multitask_forward.5} parent=0
    #allocation2 [shape = 'u8[1024]{0}', space=vmem, size = 0x400, scoped, tag = 'output window, operand 0, single buffered']
    #allocation3 [shape = 's32[1]{0}', space=sflag, size = 0x4, scoped, tag = 'scoped memory for multitask_forward.5']
    %12 = vsyncpa [#allocation3], 0
    // Predicated region
    $region2: #{multitask_forward.5} parent=1 // pred_check
      _
    $region3: #{multitask_forward.5} parent=1 // pred_check_branch
      %14 = sbr.rel (0) target = $region5
    $region4: #{multitask_forward.5} parent=1 // pred_region
      _
    $region5: #{multitask_forward.5} parent=1 // pred_fallthru
      _
    // Predicated region
    $region6: #{multitask_forward.5} parent=1 // pred_check
      _
    $region7: #{multitask_forward.5} parent=1 // pred_check_branch
      %16 = sbr.rel (0) target = $region9
    $region8: #{multitask_forward.5} parent=1 // pred_region
      _
    $region9: #{multitask_forward.5} parent=1 // pred_fallthru
      _
    // Predicated region
    $region10: #{multitask_forward.5} parent=1 // pred_check
      _
    $region11: #{multitask_forward.5} parent=1 // pred_check_branch
      %18 = sbr.rel (0) target = $region13
    $region12: #{multitask_forward.5} parent=1 // pred_region
      _
    $region13: #{multitask_forward.5} parent=1 // pred_fallthru
      _
    // Predicated region
    $region14: #{multitask_forward.5} parent=1 // pred_check
      _
    $region15: #{multitask_forward.5} parent=1 // pred_check_branch
      %20 = sbr.rel (0) target = $region17
    $region16: #{multitask_forward.5} parent=1 // pred_region
      _
    $region17: #{multitask_forward.5} parent=1 // pred_fallthru
      _
    // Predicated region
    $region18: #{multitask_forward.5} parent=1 // pred_check
      _
    $region19: #{multitask_forward.5} parent=1 // pred_check_branch
      %22 = sbr.rel (0) target = $region21
    $region20: #{multitask_forward.5} parent=1 // pred_region
      _
    $region21: #{multitask_forward.5} parent=1 // pred_fallthru
      _
    // Predicated region
    $region22: #{multitask_forward.5} parent=1 // pred_check
      _
    $region23: #{multitask_forward.5} parent=1 // pred_check_branch
      %24 = sbr.rel (0) target = $region25
    $region24: #{multitask_forward.5} parent=1 // pred_region
      _
    $region25: #{multitask_forward.5} parent=1 // pred_fallthru
      _
    // Predicated region
    $region26: #{multitask_forward.5} parent=1 // pred_check
      _
    $region27: #{multitask_forward.5} parent=1 // pred_check_branch
      %26 = sbr.rel (0) target = $region29
    $region28: #{multitask_forward.5} parent=1 // pred_region
      _
    $region29: #{multitask_forward.5} parent=1 // pred_fallthru
      _
    %v28 = vld [vmem:[%s0] sm:$0x3]
    %v29 = vld [vmem:[%s1] sm:$0xff]
    %v30 = vld [vmem:[%s1 + $0x8] sm:$0xff]
    %v31 = vld [vmem:[%s1 + $0x10] sm:$0xf]
    %v32 = vld [vmem:[%s2] sm:$0x1f]
    %v34 = vperm.slane %v32, 0
    %v35 = vperm.slane %v32, 1
    %v36 = vperm.slane %v32, 2
    %v37 = vperm.slane %v32, 3
    %v38 = vperm.slane %v32, 4
    %47 = vst [vmem:[#allocation1] ss:$2 sm:$0xff] %v29
    %s48 = scalar_lea.vmem [#allocation1], 16
    %49 = vst [vmem:[%s48] ss:$2 sm:$0xff] %v30
    %s50 = scalar_lea.vmem [#allocation1], 32
    %51 = vst [vmem:[%s50] ss:$2 sm:$0xff] %v31
    %v52 = vld.sshfl [vmem:[#allocation1] sm:$0xff pattern:$0x75316420]
    %v53 = vld.sshfl [vmem:[#allocation1 + $0x8] sm:$0xff pattern:$0x75316420]
    %v54 = vld.sshfl [vmem:[#allocation1 + $0x10] sm:$0xff pattern:$0x75316420]
    %v55 = vld.sshfl [vmem:[#allocation1 + $0x18] sm:$0xff pattern:$0x75316420]
    %v56 = vld.sshfl [vmem:[#allocation1 + $0x20] sm:$0xff pattern:$0x75316420]
    %vm57 = vcmask 31744
    %v59 = vsel %vm57, %v28, 0
    %vm61 = vcmask 1043456
    %v62 = vsel %vm61, %v52, 0
    %v64 = vsel %vm61, %v53, 0
    %v66 = vsel %vm61, %v54, 0
    %v68 = vsel %vm61, %v55, 0
    %v70 = vsel %vm61, %v56, 0
    %72 = vmatpush.msra.mxu0 0.0
    %73 = vmatpush.msra.mxu0 0.0
    %74 = vmatpush.msra.mxu0 0.0
    %75 = vmatpush.msra.mxu0 0.0
    %76 = vmatpush.msra.mxu0 0.0
    %77 = vmatpush.msra.mxu0 0.0
    %78 = vmatpush.msra.mxu0 0.0
    %79 = vmatpush.msra.mxu0 0.0
    %80 = vmatpush.msra.mxu0 0.0
    %81 = vmatpush.msra.mxu0 0.0
    %82 = vmatpush.msra.mxu0 0.0
    %83 = vmatpush.msra.mxu0 0.0
    %84 = vmatpush.msra.mxu0 0.0
    %85 = vmatpush.msra.mxu0 0.0
    %86 = vmatpush.msra.mxu0 0.0
    %87 = vmatpush.msra.mxu0 %v62
    %88 = vmatmul.f32.gmra.mxu0 %v59
    %v89 = vpop.f32.mrf.mxu0
    %v90 = vadd.f32 %v34, %v89
    %91 = vdwg.mxu0
    %92 = vmatpush.msra.mxu0 0.0
    %93 = vmatpush.msra.mxu0 0.0
    %94 = vmatpush.msra.mxu0 0.0
    %95 = vmatpush.msra.mxu0 0.0
    %96 = vmatpush.msra.mxu0 0.0
    %97 = vmatpush.msra.mxu0 0.0
    %98 = vmatpush.msra.mxu0 0.0
    %99 = vmatpush.msra.mxu0 0.0
    %100 = vmatpush.msra.mxu0 0.0
    %101 = vmatpush.msra.mxu0 0.0
    %102 = vmatpush.msra.mxu0 0.0
    %103 = vmatpush.msra.mxu0 0.0
    %104 = vmatpush.msra.mxu0 0.0
    %105 = vmatpush.msra.mxu0 0.0
    %106 = vmatpush.msra.mxu0 0.0
    %107 = vmatpush.msra.mxu0 %v64
    %108 = vmatmul.f32.gmra.mxu0 %v59
    %v109 = vpop.f32.mrf.mxu0
    %v110 = vadd.f32 %v35, %v109
    %111 = vdwg.mxu0
    %112 = vmatpush.msra.mxu0 0.0
    %113 = vmatpush.msra.mxu0 0.0
    %114 = vmatpush.msra.mxu0 0.0
    %115 = vmatpush.msra.mxu0 0.0
    %116 = vmatpush.msra.mxu0 0.0
    %117 = vmatpush.msra.mxu0 0.0
    %118 = vmatpush.msra.mxu0 0.0
    %119 = vmatpush.msra.mxu0 0.0
    %120 = vmatpush.msra.mxu0 0.0
    %121 = vmatpush.msra.mxu0 0.0
    %122 = vmatpush.msra.mxu0 0.0
    %123 = vmatpush.msra.mxu0 0.0
    %124 = vmatpush.msra.mxu0 0.0
    %125 = vmatpush.msra.mxu0 0.0
    %126 = vmatpush.msra.mxu0 0.0
    %127 = vmatpush.msra.mxu0 %v66
    %128 = vmatmul.f32.gmra.mxu0 %v59
    %v129 = vpop.f32.mrf.mxu0
    %v130 = vadd.f32 %v36, %v129
    %131 = vdwg.mxu0
    %132 = vmatpush.msra.mxu0 0.0
    %133 = vmatpush.msra.mxu0 0.0
    %134 = vmatpush.msra.mxu0 0.0
    %135 = vmatpush.msra.mxu0 0.0
    %136 = vmatpush.msra.mxu0 0.0
    %137 = vmatpush.msra.mxu0 0.0
    %138 = vmatpush.msra.mxu0 0.0
    %139 = vmatpush.msra.mxu0 0.0
    %140 = vmatpush.msra.mxu0 0.0
    %141 = vmatpush.msra.mxu0 0.0
    %142 = vmatpush.msra.mxu0 0.0
    %143 = vmatpush.msra.mxu0 0.0
    %144 = vmatpush.msra.mxu0 0.0
    %145 = vmatpush.msra.mxu0 0.0
    %146 = vmatpush.msra.mxu0 0.0
    %147 = vmatpush.msra.mxu0 %v68
    %148 = vmatmul.f32.gmra.mxu0 %v59
    %v149 = vpop.f32.mrf.mxu0
    %v150 = vadd.f32 %v37, %v149
    %151 = vdwg.mxu0
    %152 = vmatpush.msra.mxu0 0.0
    %153 = vmatpush.msra.mxu0 0.0
    %154 = vmatpush.msra.mxu0 0.0
    %155 = vmatpush.msra.mxu0 0.0
    %156 = vmatpush.msra.mxu0 0.0
    %157 = vmatpush.msra.mxu0 0.0
    %158 = vmatpush.msra.mxu0 0.0
    %159 = vmatpush.msra.mxu0 0.0
    %160 = vmatpush.msra.mxu0 0.0
    %161 = vmatpush.msra.mxu0 0.0
    %162 = vmatpush.msra.mxu0 0.0
    %163 = vmatpush.msra.mxu0 0.0
    %164 = vmatpush.msra.mxu0 0.0
    %165 = vmatpush.msra.mxu0 0.0
    %166 = vmatpush.msra.mxu0 0.0
    %167 = vmatpush.msra.mxu0 %v70
    %168 = vmatmul.f32.gmra.mxu0 %v59
    %v169 = vpop.f32.mrf.mxu0
    %v170 = vadd.f32 %v38, %v169
    %171 = vdwg.mxu0
    %v172 = vpack.c.bf16 %v90, %v90
    %v173 = vpack.c.bf16 %v110, %v110
    %v174 = vpack.c.bf16 %v130, %v130
    %v175 = vpack.c.bf16 %v150, %v150
    %v176 = vpack.c.bf16 %v170, %v170
    %v177 = vld [vmem:[%s3] sm:$0xff]
    %v178 = vld [vmem:[%s3 + $0x8] sm:$0xff]
    %v179 = vld [vmem:[%s3 + $0x10] sm:$0xff]
    %v180 = vld [vmem:[%s3 + $0x18] sm:$0xff]
    %v181 = vld [vmem:[%s3 + $0x20] sm:$0xff]
    %v182 = vld [vmem:[%s3 + $0x28] sm:$0xff]
    %v183 = vld [vmem:[%s3 + $0x30] sm:$0xff]
    %v184 = vld [vmem:[%s3 + $0x38] sm:$0xff]
    %v185 = vld [vmem:[%s3 + $0x40] sm:$0xff]
    %v186 = vld [vmem:[%s3 + $0x48] sm:$0xff]
    %v187 = vld [vmem:[%s3 + $0x50] sm:$0xff]
    %v188 = vld [vmem:[%s3 + $0x58] sm:$0xff]
    %v189 = vld [vmem:[%s3 + $0x60] sm:$0xff]
    %v190 = vld [vmem:[%s3 + $0x68] sm:$0xff]
    %v191 = vld [vmem:[%s3 + $0x70] sm:$0xff]
    %v192 = vld [vmem:[%s3 + $0x78] sm:$0xff]
    %v193 = vld [vmem:[%s3 + $0x80] sm:$0xff]
    %v194 = vld [vmem:[%s3 + $0x88] sm:$0xff]
    %v195 = vld [vmem:[%s3 + $0x90] sm:$0xff]
    %v196 = vld [vmem:[%s3 + $0x98] sm:$0xff]
    %v197 = vld [vmem:[%s3 + $0xa0] sm:$0xff]
    %v198 = vld [vmem:[%s3 + $0xa8] sm:$0xff]
    %v199 = vld [vmem:[%s3 + $0xb0] sm:$0xff]
    %v200 = vld [vmem:[%s3 + $0xb8] sm:$0xff]
    %v201 = vld [vmem:[%s3 + $0xc0] sm:$0xff]
    %v202 = vld [vmem:[%s3 + $0xc8] sm:$0xff]
    %v203 = vld [vmem:[%s3 + $0xd0] sm:$0xff]
    %v204 = vld [vmem:[%s3 + $0xd8] sm:$0xff]
    %v205 = vld [vmem:[%s3 + $0xe0] sm:$0xff]
    %v206 = vld [vmem:[%s3 + $0xe8] sm:$0xff]
    %v207 = vld [vmem:[%s3 + $0xf0] sm:$0xff]
    %v208 = vld [vmem:[%s3 + $0xf8] sm:$0xff]
    %v209 = vld [vmem:[%s3 + $0x100] sm:$0xff]
    %v210 = vld [vmem:[%s3 + $0x108] sm:$0xff]
    %v211 = vld [vmem:[%s3 + $0x110] sm:$0xff]
    %v212 = vld [vmem:[%s3 + $0x118] sm:$0xff]
    %v213 = vld [vmem:[%s3 + $0x120] sm:$0xff]
    %v214 = vld [vmem:[%s3 + $0x128] sm:$0xff]
    %v215 = vld [vmem:[%s3 + $0x130] sm:$0xff]
    %v216 = vld [vmem:[%s3 + $0x138] sm:$0xff]
    %v217 = vld [vmem:[%s3 + $0x140] sm:$0xff]
    %v218 = vld [vmem:[%s3 + $0x148] sm:$0xff]
    %v219 = vld [vmem:[%s3 + $0x150] sm:$0xff]
    %v220 = vld [vmem:[%s3 + $0x158] sm:$0xff]
    %v221 = vld [vmem:[%s3 + $0x160] sm:$0xff]
    %v222 = vld [vmem:[%s3 + $0x168] sm:$0xff]
    %v223 = vld [vmem:[%s3 + $0x170] sm:$0xff]
    %v224 = vld [vmem:[%s3 + $0x178] sm:$0xff]
    %v225 = vld [vmem:[%s3 + $0x180] sm:$0xff]
    %v226 = vld [vmem:[%s3 + $0x188] sm:$0xff]
    %v227 = vld [vmem:[%s3 + $0x190] sm:$0xff]
    %v228 = vld [vmem:[%s3 + $0x198] sm:$0xff]
    %v229 = vld [vmem:[%s3 + $0x1a0] sm:$0xff]
    %v230 = vld [vmem:[%s3 + $0x1a8] sm:$0xff]
    %v231 = vld [vmem:[%s3 + $0x1b0] sm:$0xff]
    %v232 = vld [vmem:[%s3 + $0x1b8] sm:$0xff]
    %v233 = vld [vmem:[%s3 + $0x1c0] sm:$0xff]
    %v234 = vld [vmem:[%s3 + $0x1c8] sm:$0xff]
    %v235 = vld [vmem:[%s3 + $0x1d0] sm:$0xff]
    %v236 = vld [vmem:[%s3 + $0x1d8] sm:$0xff]
    %v237 = vld [vmem:[%s3 + $0x1e0] sm:$0xff]
    %v238 = vld [vmem:[%s3 + $0x1e8] sm:$0xff]
    %v239 = vld [vmem:[%s3 + $0x1f0] sm:$0xff]
    %v240 = vld [vmem:[%s3 + $0x1f8] sm:$0xff]
    %v241 = vld [vmem:[%s3 + $0x200] sm:$0xff]
    %v242 = vld [vmem:[%s3 + $0x208] sm:$0xff]
    %v243 = vld [vmem:[%s3 + $0x210] sm:$0xff]
    %v244 = vld [vmem:[%s3 + $0x218] sm:$0xff]
    %v245 = vld [vmem:[%s3 + $0x220] sm:$0xff]
    %v246 = vld [vmem:[%s3 + $0x228] sm:$0xff]
    %v247 = vld [vmem:[%s3 + $0x230] sm:$0xff]
    %v248 = vld [vmem:[%s3 + $0x238] sm:$0xff]
    %v249 = vld [vmem:[%s3 + $0x240] sm:$0xff]
    %v250 = vld [vmem:[%s3 + $0x248] sm:$0xff]
    %v251 = vld [vmem:[%s3 + $0x250] sm:$0xff]
    %v252 = vld [vmem:[%s3 + $0x258] sm:$0xff]
    %v253 = vld [vmem:[%s3 + $0x260] sm:$0xff]
    %v254 = vld [vmem:[%s3 + $0x268] sm:$0xff]
    %v255 = vld [vmem:[%s3 + $0x270] sm:$0xff]
    %v256 = vld [vmem:[%s3 + $0x278] sm:$0xff]
    %v257 = vld [vmem:[%s3 + $0x280] sm:$0xff]
    %v258 = vld [vmem:[%s3 + $0x288] sm:$0xff]
    %v259 = vld [vmem:[%s3 + $0x290] sm:$0xff]
    %v260 = vld [vmem:[%s3 + $0x298] sm:$0xff]
    %v261 = vld [vmem:[%s3 + $0x2a0] sm:$0xff]
    %v262 = vld [vmem:[%s3 + $0x2a8] sm:$0xff]
    %v263 = vld [vmem:[%s3 + $0x2b0] sm:$0xff]
    %v264 = vld [vmem:[%s3 + $0x2b8] sm:$0xff]
    %v265 = vld [vmem:[%s3 + $0x2c0] sm:$0xff]
    %v266 = vld [vmem:[%s3 + $0x2c8] sm:$0xff]
    %v267 = vld [vmem:[%s3 + $0x2d0] sm:$0xff]
    %v268 = vld [vmem:[%s3 + $0x2d8] sm:$0xff]
    %v269 = vld [vmem:[%s3 + $0x2e0] sm:$0xff]
    %v270 = vld [vmem:[%s3 + $0x2e8] sm:$0xff]
    %v271 = vld [vmem:[%s3 + $0x2f0] sm:$0xff]
    %v272 = vld [vmem:[%s3 + $0x2f8] sm:$0xff]
    %v273 = vld [vmem:[%s3 + $0x300] sm:$0xff]
    %v274 = vld [vmem:[%s3 + $0x308] sm:$0xff]
    %v275 = vld [vmem:[%s3 + $0x310] sm:$0xff]
    %v276 = vld [vmem:[%s3 + $0x318] sm:$0xff]
    %v277 = vld [vmem:[%s3 + $0x320] sm:$0xff]
    %v278 = vld [vmem:[%s3 + $0x328] sm:$0xff]
    %v279 = vld [vmem:[%s3 + $0x330] sm:$0xff]
    %v280 = vld [vmem:[%s3 + $0x338] sm:$0xff]
    %v281 = vld [vmem:[%s3 + $0x340] sm:$0xff]
    %v282 = vld [vmem:[%s3 + $0x348] sm:$0xff]
    %v283 = vld [vmem:[%s3 + $0x350] sm:$0xff]
    %v284 = vld [vmem:[%s3 + $0x358] sm:$0xff]
    %v285 = vld [vmem:[%s3 + $0x360] sm:$0xff]
    %v286 = vld [vmem:[%s3 + $0x368] sm:$0xff]
    %v287 = vld [vmem:[%s3 + $0x370] sm:$0xff]
    %v288 = vld [vmem:[%s3 + $0x378] sm:$0xff]
    %v289 = vld [vmem:[%s3 + $0x380] sm:$0xff]
    %v290 = vld [vmem:[%s3 + $0x388] sm:$0xff]
    %v291 = vld [vmem:[%s3 + $0x390] sm:$0xff]
    %v292 = vld [vmem:[%s3 + $0x398] sm:$0xff]
    %v293 = vld [vmem:[%s3 + $0x3a0] sm:$0xff]
    %v294 = vld [vmem:[%s3 + $0x3a8] sm:$0xff]
    %v295 = vld [vmem:[%s3 + $0x3b0] sm:$0xff]
    %v296 = vld [vmem:[%s3 + $0x3b8] sm:$0xff]
    %v297 = vld [vmem:[%s3 + $0x3c0] sm:$0xff]
    %v298 = vld [vmem:[%s3 + $0x3c8] sm:$0xff]
    %v299 = vld [vmem:[%s3 + $0x3d0] sm:$0xff]
    %v300 = vld [vmem:[%s3 + $0x3d8] sm:$0xff]
    %v301 = vld [vmem:[%s3 + $0x3e0] sm:$0xff]
    %v302 = vld [vmem:[%s3 + $0x3e8] sm:$0xff]
    %v303 = vld [vmem:[%s3 + $0x3f0] sm:$0xff]
    %v304 = vld [vmem:[%s3 + $0x3f8] sm:$0xff]
    %v305 = vld [vmem:[%s3 + $0x400] sm:$0xff]
    %v306 = vld [vmem:[%s3 + $0x408] sm:$0xff]
    %v307 = vld [vmem:[%s3 + $0x410] sm:$0xff]
    %v308 = vld [vmem:[%s3 + $0x418] sm:$0xff]
    %v309 = vld [vmem:[%s3 + $0x420] sm:$0xff]
    %v310 = vld [vmem:[%s3 + $0x428] sm:$0xff]
    %v311 = vld [vmem:[%s3 + $0x430] sm:$0xff]
    %v312 = vld [vmem:[%s3 + $0x438] sm:$0xff]
    %v313 = vld [vmem:[%s3 + $0x440] sm:$0xff]
    %v314 = vld [vmem:[%s3 + $0x448] sm:$0xff]
    %v315 = vld [vmem:[%s3 + $0x450] sm:$0xff]
    %v316 = vld [vmem:[%s3 + $0x458] sm:$0xff]
    %v317 = vld [vmem:[%s3 + $0x460] sm:$0xff]
    %v318 = vld [vmem:[%s3 + $0x468] sm:$0xff]
    %v319 = vld [vmem:[%s3 + $0x470] sm:$0xff]
    %v320 = vld [vmem:[%s3 + $0x478] sm:$0xff]
    %v321 = vld [vmem:[%s3 + $0x480] sm:$0xff]
    %v322 = vld [vmem:[%s3 + $0x488] sm:$0xff]
    %v323 = vld [vmem:[%s3 + $0x490] sm:$0xff]
    %v324 = vld [vmem:[%s3 + $0x498] sm:$0xff]
    %v325 = vld [vmem:[%s3 + $0x4a0] sm:$0xff]
    %v326 = vld [vmem:[%s3 + $0x4a8] sm:$0xff]
    %v327 = vld [vmem:[%s3 + $0x4b0] sm:$0xff]
    %v328 = vld [vmem:[%s3 + $0x4b8] sm:$0xff]
    %v329 = vld [vmem:[%s3 + $0x4c0] sm:$0xff]
    %v330 = vld [vmem:[%s3 + $0x4c8] sm:$0xff]
    %v331 = vld [vmem:[%s3 + $0x4d0] sm:$0xff]
    %v332 = vld [vmem:[%s3 + $0x4d8] sm:$0xff]
    %v333 = vld [vmem:[%s3 + $0x4e0] sm:$0xff]
    %v334 = vld [vmem:[%s3 + $0x4e8] sm:$0xff]
    %v335 = vld [vmem:[%s3 + $0x4f0] sm:$0xff]
    %v336 = vld [vmem:[%s3 + $0x4f8] sm:$0xff]
    %v337 = vld [vmem:[%s3 + $0x500] sm:$0xff]
    %v338 = vld [vmem:[%s3 + $0x508] sm:$0xff]
    %v339 = vld [vmem:[%s3 + $0x510] sm:$0xff]
    %v340 = vld [vmem:[%s3 + $0x518] sm:$0xff]
    %v341 = vld [vmem:[%s3 + $0x520] sm:$0xff]
    %v342 = vld [vmem:[%s3 + $0x528] sm:$0xff]
    %v343 = vld [vmem:[%s3 + $0x530] sm:$0xff]
    %v344 = vld [vmem:[%s3 + $0x538] sm:$0xff]
    %v345 = vld [vmem:[%s3 + $0x540] sm:$0xff]
    %v346 = vld [vmem:[%s3 + $0x548] sm:$0xff]
    %v347 = vld [vmem:[%s3 + $0x550] sm:$0xff]
    %v348 = vld [vmem:[%s3 + $0x558] sm:$0xff]
    %v349 = vld [vmem:[%s3 + $0x560] sm:$0xff]
    %v350 = vld [vmem:[%s3 + $0x568] sm:$0xff]
    %v351 = vld [vmem:[%s3 + $0x570] sm:$0xff]
    %v352 = vld [vmem:[%s3 + $0x578] sm:$0xff]
    %v353 = vld [vmem:[%s3 + $0x580] sm:$0xff]
    %v354 = vld [vmem:[%s3 + $0x588] sm:$0xff]
    %v355 = vld [vmem:[%s3 + $0x590] sm:$0xff]
    %v356 = vld [vmem:[%s3 + $0x598] sm:$0xff]
    %v357 = vld [vmem:[%s3 + $0x5a0] sm:$0xff]
    %v358 = vld [vmem:[%s3 + $0x5a8] sm:$0xff]
    %v359 = vld [vmem:[%s3 + $0x5b0] sm:$0xff]
    %v360 = vld [vmem:[%s3 + $0x5b8] sm:$0xff]
    %v361 = vld [vmem:[%s3 + $0x5c0] sm:$0xff]
    %v362 = vld [vmem:[%s3 + $0x5c8] sm:$0xff]
    %v363 = vld [vmem:[%s3 + $0x5d0] sm:$0xff]
    %v364 = vld [vmem:[%s3 + $0x5d8] sm:$0xff]
    %v365 = vld [vmem:[%s3 + $0x5e0] sm:$0xff]
    %v366 = vld [vmem:[%s3 + $0x5e8] sm:$0xff]
    %v367 = vld [vmem:[%s3 + $0x5f0] sm:$0xff]
    %v368 = vld [vmem:[%s3 + $0x5f8] sm:$0xff]
    %v369 = vld [vmem:[%s3 + $0x600] sm:$0xff]
    %v370 = vld [vmem:[%s3 + $0x608] sm:$0xff]
    %v371 = vld [vmem:[%s3 + $0x610] sm:$0xff]
    %v372 = vld [vmem:[%s3 + $0x618] sm:$0xff]
    %v373 = vld [vmem:[%s3 + $0x620] sm:$0xff]
    %v374 = vld [vmem:[%s3 + $0x628] sm:$0xff]
    %v375 = vld [vmem:[%s3 + $0x630] sm:$0xff]
    %v376 = vld [vmem:[%s3 + $0x638] sm:$0xff]
    %v377 = vld [vmem:[%s3 + $0x640] sm:$0xff]
    %v378 = vld [vmem:[%s3 + $0x648] sm:$0xff]
    %v379 = vld [vmem:[%s3 + $0x650] sm:$0xff]
    %v380 = vld [vmem:[%s3 + $0x658] sm:$0xff]
    %v381 = vld [vmem:[%s3 + $0x660] sm:$0xff]
    %v382 = vld [vmem:[%s3 + $0x668] sm:$0xff]
    %v383 = vld [vmem:[%s3 + $0x670] sm:$0xff]
    %v384 = vld [vmem:[%s3 + $0x678] sm:$0xff]
    %v385 = vld [vmem:[%s3 + $0x680] sm:$0xff]
    %v386 = vld [vmem:[%s3 + $0x688] sm:$0xff]
    %v387 = vld [vmem:[%s3 + $0x690] sm:$0xff]
    %v388 = vld [vmem:[%s3 + $0x698] sm:$0xff]
    %v389 = vld [vmem:[%s3 + $0x6a0] sm:$0xff]
    %v390 = vld [vmem:[%s3 + $0x6a8] sm:$0xff]
    %v391 = vld [vmem:[%s3 + $0x6b0] sm:$0xff]
    %v392 = vld [vmem:[%s3 + $0x6b8] sm:$0xff]
    %v393 = vld [vmem:[%s3 + $0x6c0] sm:$0xff]
    %v394 = vld [vmem:[%s3 + $0x6c8] sm:$0xff]
    %v395 = vld [vmem:[%s3 + $0x6d0] sm:$0xff]
    %v396 = vld [vmem:[%s3 + $0x6d8] sm:$0xff]
    %v397 = vld [vmem:[%s3 + $0x6e0] sm:$0xff]
    %v398 = vld [vmem:[%s3 + $0x6e8] sm:$0xff]
    %v399 = vld [vmem:[%s3 + $0x6f0] sm:$0xff]
    %v400 = vld [vmem:[%s3 + $0x6f8] sm:$0xff]
    %v401 = vld [vmem:[%s3 + $0x700] sm:$0xff]
    %v402 = vld [vmem:[%s3 + $0x708] sm:$0xff]
    %v403 = vld [vmem:[%s3 + $0x710] sm:$0xff]
    %v404 = vld [vmem:[%s3 + $0x718] sm:$0xff]
    %v405 = vld [vmem:[%s3 + $0x720] sm:$0xff]
    %v406 = vld [vmem:[%s3 + $0x728] sm:$0xff]
    %v407 = vld [vmem:[%s3 + $0x730] sm:$0xff]
    %v408 = vld [vmem:[%s3 + $0x738] sm:$0xff]
    %v409 = vld [vmem:[%s3 + $0x740] sm:$0xff]
    %v410 = vld [vmem:[%s3 + $0x748] sm:$0xff]
    %v411 = vld [vmem:[%s3 + $0x750] sm:$0xff]
    %v412 = vld [vmem:[%s3 + $0x758] sm:$0xff]
    %v413 = vld [vmem:[%s3 + $0x760] sm:$0xff]
    %v414 = vld [vmem:[%s3 + $0x768] sm:$0xff]
    %v415 = vld [vmem:[%s3 + $0x770] sm:$0xff]
    %v416 = vld [vmem:[%s3 + $0x778] sm:$0xff]
    %v417 = vld [vmem:[%s3 + $0x780] sm:$0xff]
    %v418 = vld [vmem:[%s3 + $0x788] sm:$0xff]
    %v419 = vld [vmem:[%s3 + $0x790] sm:$0xff]
    %v420 = vld [vmem:[%s3 + $0x798] sm:$0xff]
    %v421 = vld [vmem:[%s3 + $0x7a0] sm:$0xff]
    %v422 = vld [vmem:[%s3 + $0x7a8] sm:$0xff]
    %v423 = vld [vmem:[%s3 + $0x7b0] sm:$0xff]
    %v424 = vld [vmem:[%s3 + $0x7b8] sm:$0xff]
    %v425 = vld [vmem:[%s3 + $0x7c0] sm:$0xff]
    %v426 = vld [vmem:[%s3 + $0x7c8] sm:$0xff]
    %v427 = vld [vmem:[%s3 + $0x7d0] sm:$0xff]
    %v428 = vld [vmem:[%s3 + $0x7d8] sm:$0xff]
    %v429 = vld [vmem:[%s3 + $0x7e0] sm:$0xff]
    %v430 = vld [vmem:[%s3 + $0x7e8] sm:$0xff]
    %v431 = vld [vmem:[%s3 + $0x7f0] sm:$0xff]
    %v432 = vld [vmem:[%s3 + $0x7f8] sm:$0xff]
    %v433 = vld [vmem:[%s3 + $0x800] sm:$0xff]
    %v434 = vld [vmem:[%s3 + $0x808] sm:$0xff]
    %v435 = vld [vmem:[%s3 + $0x810] sm:$0xff]
    %v436 = vld [vmem:[%s3 + $0x818] sm:$0xff]
    %v437 = vld [vmem:[%s3 + $0x820] sm:$0xff]
    %v438 = vld [vmem:[%s3 + $0x828] sm:$0xff]
    %v439 = vld [vmem:[%s3 + $0x830] sm:$0xff]
    %v440 = vld [vmem:[%s3 + $0x838] sm:$0xff]
    %v441 = vld [vmem:[%s3 + $0x840] sm:$0xff]
    %v442 = vld [vmem:[%s3 + $0x848] sm:$0xff]
    %v443 = vld [vmem:[%s3 + $0x850] sm:$0xff]
    %v444 = vld [vmem:[%s3 + $0x858] sm:$0xff]
    %v445 = vld [vmem:[%s3 + $0x860] sm:$0xff]
    %v446 = vld [vmem:[%s3 + $0x868] sm:$0xff]
    %v447 = vld [vmem:[%s3 + $0x870] sm:$0xff]
    %v448 = vld [vmem:[%s3 + $0x878] sm:$0xff]
    %v449 = vld [vmem:[%s3 + $0x880] sm:$0xff]
    %v450 = vld [vmem:[%s3 + $0x888] sm:$0xff]
    %v451 = vld [vmem:[%s3 + $0x890] sm:$0xff]
    %v452 = vld [vmem:[%s3 + $0x898] sm:$0xff]
    %v453 = vld [vmem:[%s3 + $0x8a0] sm:$0xff]
    %v454 = vld [vmem:[%s3 + $0x8a8] sm:$0xff]
    %v455 = vld [vmem:[%s3 + $0x8b0] sm:$0xff]
    %v456 = vld [vmem:[%s3 + $0x8b8] sm:$0xff]
    %v457 = vld [vmem:[%s3 + $0x8c0] sm:$0xff]
    %v458 = vld [vmem:[%s3 + $0x8c8] sm:$0xff]
    %v459 = vld [vmem:[%s3 + $0x8d0] sm:$0xff]
    %v460 = vld [vmem:[%s3 + $0x8d8] sm:$0xff]
    %v461 = vld [vmem:[%s3 + $0x8e0] sm:$0xff]
    %v462 = vld [vmem:[%s3 + $0x8e8] sm:$0xff]
    %v463 = vld [vmem:[%s3 + $0x8f0] sm:$0xff]
    %v464 = vld [vmem:[%s3 + $0x8f8] sm:$0xff]
    %v465 = vld [vmem:[%s4] sm:$0xff]
    %v467 = vperm.slane %v465, 0
    %v468 = vperm.slane %v465, 1
    %v469 = vperm.slane %v465, 2
    %v470 = vperm.slane %v465, 3
    %v471 = vperm.slane %v465, 4
    %v472 = vperm.slane %v465, 5
    %v473 = vperm.slane %v465, 6
    %v474 = vperm.slane %v465, 7
    %v771 = vunpack.c.l.b16 %v177
    %v772 = vunpack.c.h.b16 %v177
    %v773 = vunpack.c.l.b16 %v178
    %v774 = vunpack.c.h.b16 %v178
    %v775 = vunpack.c.l.b16 %v179
    %v776 = vunpack.c.h.b16 %v179
    %v777 = vunpack.c.l.b16 %v180
    %v778 = vunpack.c.h.b16 %v180
    %v779 = vunpack.c.l.b16 %v181
    %v780 = vunpack.c.h.b16 %v181
    %v781 = vunpack.c.l.b16 %v182
    %v782 = vunpack.c.h.b16 %v182
    %v783 = vunpack.c.l.b16 %v183
    %v784 = vunpack.c.h.b16 %v183
    %v785 = vunpack.c.l.b16 %v184
    %v786 = vunpack.c.h.b16 %v184
    %v787 = vunpack.c.l.b16 %v185
    %v788 = vunpack.c.h.b16 %v185
    %v789 = vunpack.c.l.b16 %v186
    %v790 = vunpack.c.h.b16 %v186
    %v791 = vunpack.c.l.b16 %v187
    %v792 = vunpack.c.h.b16 %v187
    %v793 = vunpack.c.l.b16 %v188
    %v794 = vunpack.c.h.b16 %v188
    %v795 = vunpack.c.l.b16 %v189
    %v796 = vunpack.c.h.b16 %v189
    %v797 = vunpack.c.l.b16 %v190
    %v798 = vunpack.c.h.b16 %v190
    %v799 = vunpack.c.l.b16 %v191
    %v800 = vunpack.c.h.b16 %v191
    %v801 = vunpack.c.l.b16 %v192
    %v802 = vunpack.c.h.b16 %v192
    %v803 = vunpack.c.l.b16 %v193
    %v804 = vunpack.c.h.b16 %v193
    %v805 = vunpack.c.l.b16 %v194
    %v806 = vunpack.c.h.b16 %v194
    %v807 = vunpack.c.l.b16 %v195
    %v808 = vunpack.c.h.b16 %v195
    %v809 = vunpack.c.l.b16 %v196
    %v810 = vunpack.c.h.b16 %v196
    %v811 = vunpack.c.l.b16 %v197
    %v812 = vunpack.c.h.b16 %v197
    %v813 = vunpack.c.l.b16 %v198
    %v814 = vunpack.c.h.b16 %v198
    %v815 = vunpack.c.l.b16 %v199
    %v816 = vunpack.c.h.b16 %v199
    %v817 = vunpack.c.l.b16 %v200
    %v818 = vunpack.c.h.b16 %v200
    %v819 = vunpack.c.l.b16 %v201
    %v820 = vunpack.c.h.b16 %v201
    %v821 = vunpack.c.l.b16 %v202
    %v822 = vunpack.c.h.b16 %v202
    %v823 = vunpack.c.l.b16 %v203
    %v824 = vunpack.c.h.b16 %v203
    %v825 = vunpack.c.l.b16 %v204
    %v826 = vunpack.c.h.b16 %v204
    %v827 = vunpack.c.l.b16 %v205
    %v828 = vunpack.c.h.b16 %v205
    %v829 = vunpack.c.l.b16 %v206
    %v830 = vunpack.c.h.b16 %v206
    %v831 = vunpack.c.l.b16 %v207
    %v832 = vunpack.c.h.b16 %v207
    %v833 = vunpack.c.l.b16 %v208
    %v834 = vunpack.c.h.b16 %v208
    %v835 = vunpack.c.l.b16 %v209
    %v836 = vunpack.c.h.b16 %v209
    %v837 = vunpack.c.l.b16 %v210
    %v838 = vunpack.c.h.b16 %v210
    %v839 = vunpack.c.l.b16 %v211
    %v840 = vunpack.c.h.b16 %v211
    %v841 = vunpack.c.l.b16 %v212
    %v842 = vunpack.c.h.b16 %v212
    %v843 = vunpack.c.l.b16 %v213
    %v844 = vunpack.c.h.b16 %v213
    %v845 = vunpack.c.l.b16 %v214
    %v846 = vunpack.c.h.b16 %v214
    %v847 = vunpack.c.l.b16 %v215
    %v848 = vunpack.c.h.b16 %v215
    %v849 = vunpack.c.l.b16 %v216
    %v850 = vunpack.c.h.b16 %v216
    %v851 = vunpack.c.l.b16 %v217
    %v852 = vunpack.c.h.b16 %v217
    %v853 = vunpack.c.l.b16 %v218
    %v854 = vunpack.c.h.b16 %v218
    %v855 = vunpack.c.l.b16 %v219
    %v856 = vunpack.c.h.b16 %v219
    %v857 = vunpack.c.l.b16 %v220
    %v858 = vunpack.c.h.b16 %v220
    %v859 = vunpack.c.l.b16 %v221
    %v860 = vunpack.c.h.b16 %v221
    %v861 = vunpack.c.l.b16 %v222
    %v862 = vunpack.c.h.b16 %v222
    %v863 = vunpack.c.l.b16 %v223
    %v864 = vunpack.c.h.b16 %v223
    %v865 = vunpack.c.l.b16 %v224
    %v866 = vunpack.c.h.b16 %v224
    %v867 = vunpack.c.l.b16 %v225
    %v868 = vunpack.c.h.b16 %v225
    %v869 = vunpack.c.l.b16 %v226
    %v870 = vunpack.c.h.b16 %v226
    %v871 = vunpack.c.l.b16 %v227
    %v872 = vunpack.c.h.b16 %v227
    %v873 = vunpack.c.l.b16 %v228
    %v874 = vunpack.c.h.b16 %v228
    %v875 = vunpack.c.l.b16 %v229
    %v876 = vunpack.c.h.b16 %v229
    %v877 = vunpack.c.l.b16 %v230
    %v878 = vunpack.c.h.b16 %v230
    %v879 = vunpack.c.l.b16 %v231
    %v880 = vunpack.c.h.b16 %v231
    %v881 = vunpack.c.l.b16 %v232
    %v882 = vunpack.c.h.b16 %v232
    %v883 = vunpack.c.l.b16 %v233
    %v884 = vunpack.c.h.b16 %v233
    %v885 = vunpack.c.l.b16 %v234
    %v886 = vunpack.c.h.b16 %v234
    %v887 = vunpack.c.l.b16 %v235
    %v888 = vunpack.c.h.b16 %v235
    %v889 = vunpack.c.l.b16 %v236
    %v890 = vunpack.c.h.b16 %v236
    %v891 = vunpack.c.l.b16 %v237
    %v892 = vunpack.c.h.b16 %v237
    %v893 = vunpack.c.l.b16 %v238
    %v894 = vunpack.c.h.b16 %v238
    %v895 = vunpack.c.l.b16 %v239
    %v896 = vunpack.c.h.b16 %v239
    %v897 = vunpack.c.l.b16 %v240
    %v898 = vunpack.c.h.b16 %v240
    %v899 = vunpack.c.l.b16 %v241
    %v900 = vunpack.c.h.b16 %v241
    %v901 = vunpack.c.l.b16 %v242
    %v902 = vunpack.c.h.b16 %v242
    %v903 = vunpack.c.l.b16 %v243
    %v904 = vunpack.c.h.b16 %v243
    %v905 = vunpack.c.l.b16 %v244
    %v906 = vunpack.c.h.b16 %v244
    %v907 = vunpack.c.l.b16 %v245
    %v908 = vunpack.c.h.b16 %v245
    %v909 = vunpack.c.l.b16 %v246
    %v910 = vunpack.c.h.b16 %v246
    %v911 = vunpack.c.l.b16 %v247
    %v912 = vunpack.c.h.b16 %v247
    %v913 = vunpack.c.l.b16 %v248
    %v914 = vunpack.c.h.b16 %v248
    %v915 = vunpack.c.l.b16 %v249
    %v916 = vunpack.c.h.b16 %v249
    %v917 = vunpack.c.l.b16 %v250
    %v918 = vunpack.c.h.b16 %v250
    %v919 = vunpack.c.l.b16 %v251
    %v920 = vunpack.c.h.b16 %v251
    %v921 = vunpack.c.l.b16 %v252
    %v922 = vunpack.c.h.b16 %v252
    %v923 = vunpack.c.l.b16 %v253
    %v924 = vunpack.c.h.b16 %v253
    %v925 = vunpack.c.l.b16 %v254
    %v926 = vunpack.c.h.b16 %v254
    %v927 = vunpack.c.l.b16 %v255
    %v928 = vunpack.c.h.b16 %v255
    %v929 = vunpack.c.l.b16 %v256
    %v930 = vunpack.c.h.b16 %v256
    %v931 = vunpack.c.l.b16 %v257
    %v932 = vunpack.c.h.b16 %v257
    %v933 = vunpack.c.l.b16 %v258
    %v934 = vunpack.c.h.b16 %v258
    %v935 = vunpack.c.l.b16 %v259
    %v936 = vunpack.c.h.b16 %v259
    %v937 = vunpack.c.l.b16 %v260
    %v938 = vunpack.c.h.b16 %v260
    %v939 = vunpack.c.l.b16 %v261
    %v940 = vunpack.c.h.b16 %v261
    %v941 = vunpack.c.l.b16 %v262
    %v942 = vunpack.c.h.b16 %v262
    %v943 = vunpack.c.l.b16 %v263
    %v944 = vunpack.c.h.b16 %v263
    %v945 = vunpack.c.l.b16 %v264
    %v946 = vunpack.c.h.b16 %v264
    %v947 = vunpack.c.l.b16 %v265
    %v948 = vunpack.c.h.b16 %v265
    %v949 = vunpack.c.l.b16 %v266
    %v950 = vunpack.c.h.b16 %v266
    %v951 = vunpack.c.l.b16 %v267
    %v952 = vunpack.c.h.b16 %v267
    %v953 = vunpack.c.l.b16 %v268
    %v954 = vunpack.c.h.b16 %v268
    %v955 = vunpack.c.l.b16 %v269
    %v956 = vunpack.c.h.b16 %v269
    %v957 = vunpack.c.l.b16 %v270
    %v958 = vunpack.c.h.b16 %v270
    %v959 = vunpack.c.l.b16 %v271
    %v960 = vunpack.c.h.b16 %v271
    %v961 = vunpack.c.l.b16 %v272
    %v962 = vunpack.c.h.b16 %v272
    %v963 = vunpack.c.l.b16 %v273
    %v964 = vunpack.c.h.b16 %v273
    %v965 = vunpack.c.l.b16 %v274
    %v966 = vunpack.c.h.b16 %v274
    %v967 = vunpack.c.l.b16 %v275
    %v968 = vunpack.c.h.b16 %v275
    %v969 = vunpack.c.l.b16 %v276
    %v970 = vunpack.c.h.b16 %v276
    %v971 = vunpack.c.l.b16 %v277
    %v972 = vunpack.c.h.b16 %v277
    %v973 = vunpack.c.l.b16 %v278
    %v974 = vunpack.c.h.b16 %v278
    %v975 = vunpack.c.l.b16 %v279
    %v976 = vunpack.c.h.b16 %v279
    %v977 = vunpack.c.l.b16 %v280
    %v978 = vunpack.c.h.b16 %v280
    %v979 = vunpack.c.l.b16 %v281
    %v980 = vunpack.c.h.b16 %v281
    %v981 = vunpack.c.l.b16 %v282
    %v982 = vunpack.c.h.b16 %v282
    %v983 = vunpack.c.l.b16 %v283
    %v984 = vunpack.c.h.b16 %v283
    %v985 = vunpack.c.l.b16 %v284
    %v986 = vunpack.c.h.b16 %v284
    %v987 = vunpack.c.l.b16 %v285
    %v988 = vunpack.c.h.b16 %v285
    %v989 = vunpack.c.l.b16 %v286
    %v990 = vunpack.c.h.b16 %v286
    %v991 = vunpack.c.l.b16 %v287
    %v992 = vunpack.c.h.b16 %v287
    %v993 = vunpack.c.l.b16 %v288
    %v994 = vunpack.c.h.b16 %v288
    %v995 = vunpack.c.l.b16 %v289
    %v996 = vunpack.c.h.b16 %v289
    %v997 = vunpack.c.l.b16 %v290
    %v998 = vunpack.c.h.b16 %v290
    %v999 = vunpack.c.l.b16 %v291
    %v1000 = vunpack.c.h.b16 %v291
    %v1001 = vunpack.c.l.b16 %v292
    %v1002 = vunpack.c.h.b16 %v292
    %v1003 = vunpack.c.l.b16 %v293
    %v1004 = vunpack.c.h.b16 %v293
    %v1005 = vunpack.c.l.b16 %v294
    %v1006 = vunpack.c.h.b16 %v294
    %v1007 = vunpack.c.l.b16 %v295
    %v1008 = vunpack.c.h.b16 %v295
    %v1009 = vunpack.c.l.b16 %v296
    %v1010 = vunpack.c.h.b16 %v296
    %v1011 = vunpack.c.l.b16 %v297
    %v1012 = vunpack.c.h.b16 %v297
    %v1013 = vunpack.c.l.b16 %v298
    %v1014 = vunpack.c.h.b16 %v298
    %v1015 = vunpack.c.l.b16 %v299
    %v1016 = vunpack.c.h.b16 %v299
    %v1017 = vunpack.c.l.b16 %v300
    %v1018 = vunpack.c.h.b16 %v300
    %v1019 = vunpack.c.l.b16 %v301
    %v1020 = vunpack.c.h.b16 %v301
    %v1021 = vunpack.c.l.b16 %v302
    %v1022 = vunpack.c.h.b16 %v302
    %v1023 = vunpack.c.l.b16 %v303
    %v1024 = vunpack.c.h.b16 %v303
    %v1025 = vunpack.c.l.b16 %v304
    %v1026 = vunpack.c.h.b16 %v304
    %v1027 = vunpack.c.l.b16 %v305
    %v1028 = vunpack.c.h.b16 %v305
    %v1029 = vunpack.c.l.b16 %v306
    %v1030 = vunpack.c.h.b16 %v306
    %v1031 = vunpack.c.l.b16 %v307
    %v1032 = vunpack.c.h.b16 %v307
    %v1033 = vunpack.c.l.b16 %v308
    %v1034 = vunpack.c.h.b16 %v308
    %v1035 = vunpack.c.l.b16 %v309
    %v1036 = vunpack.c.h.b16 %v309
    %v1037 = vunpack.c.l.b16 %v310
    %v1038 = vunpack.c.h.b16 %v310
    %v1039 = vunpack.c.l.b16 %v311
    %v1040 = vunpack.c.h.b16 %v311
    %v1041 = vunpack.c.l.b16 %v312
    %v1042 = vunpack.c.h.b16 %v312
    %v1043 = vunpack.c.l.b16 %v313
    %v1044 = vunpack.c.h.b16 %v313
    %v1045 = vunpack.c.l.b16 %v314
    %v1046 = vunpack.c.h.b16 %v314
    %v1047 = vunpack.c.l.b16 %v315
    %v1048 = vunpack.c.h.b16 %v315
    %v1049 = vunpack.c.l.b16 %v316
    %v1050 = vunpack.c.h.b16 %v316
    %v1051 = vunpack.c.l.b16 %v317
    %v1052 = vunpack.c.h.b16 %v317
    %v1053 = vunpack.c.l.b16 %v318
    %v1054 = vunpack.c.h.b16 %v318
    %v1055 = vunpack.c.l.b16 %v319
    %v1056 = vunpack.c.h.b16 %v319
    %v1057 = vunpack.c.l.b16 %v320
    %v1058 = vunpack.c.h.b16 %v320
    %v1059 = vunpack.c.l.b16 %v321
    %v1060 = vunpack.c.h.b16 %v321
    %v1061 = vunpack.c.l.b16 %v322
    %v1062 = vunpack.c.h.b16 %v322
    %v1063 = vunpack.c.l.b16 %v323
    %v1064 = vunpack.c.h.b16 %v323
    %v1065 = vunpack.c.l.b16 %v324
    %v1066 = vunpack.c.h.b16 %v324
    %v1067 = vunpack.c.l.b16 %v325
    %v1068 = vunpack.c.h.b16 %v325
    %v1069 = vunpack.c.l.b16 %v326
    %v1070 = vunpack.c.h.b16 %v326
    %v1071 = vunpack.c.l.b16 %v327
    %v1072 = vunpack.c.h.b16 %v327
    %v1073 = vunpack.c.l.b16 %v328
    %v1074 = vunpack.c.h.b16 %v328
    %v1075 = vunpack.c.l.b16 %v329
    %v1076 = vunpack.c.h.b16 %v329
    %v1077 = vunpack.c.l.b16 %v330
    %v1078 = vunpack.c.h.b16 %v330
    %v1079 = vunpack.c.l.b16 %v331
    %v1080 = vunpack.c.h.b16 %v331
    %v1081 = vunpack.c.l.b16 %v332
    %v1082 = vunpack.c.h.b16 %v332
    %v1083 = vunpack.c.l.b16 %v333
    %v1084 = vunpack.c.h.b16 %v333
    %v1085 = vunpack.c.l.b16 %v334
    %v1086 = vunpack.c.h.b16 %v334
    %v1087 = vunpack.c.l.b16 %v335
    %v1088 = vunpack.c.h.b16 %v335
    %v1089 = vunpack.c.l.b16 %v336
    %v1090 = vunpack.c.h.b16 %v336
    %v1091 = vunpack.c.l.b16 %v337
    %v1092 = vunpack.c.h.b16 %v337
    %v1093 = vunpack.c.l.b16 %v338
    %v1094 = vunpack.c.h.b16 %v338
    %v1095 = vunpack.c.l.b16 %v339
    %v1096 = vunpack.c.h.b16 %v339
    %v1097 = vunpack.c.l.b16 %v340
    %v1098 = vunpack.c.h.b16 %v340
    %v1099 = vunpack.c.l.b16 %v341
    %v1100 = vunpack.c.h.b16 %v341
    %v1101 = vunpack.c.l.b16 %v342
    %v1102 = vunpack.c.h.b16 %v342
    %v1103 = vunpack.c.l.b16 %v343
    %v1104 = vunpack.c.h.b16 %v343
    %v1105 = vunpack.c.l.b16 %v344
    %v1106 = vunpack.c.h.b16 %v344
    %v1107 = vunpack.c.l.b16 %v345
    %v1108 = vunpack.c.h.b16 %v345
    %v1109 = vunpack.c.l.b16 %v346
    %v1110 = vunpack.c.h.b16 %v346
    %v1111 = vunpack.c.l.b16 %v347
    %v1112 = vunpack.c.h.b16 %v347
    %v1113 = vunpack.c.l.b16 %v348
    %v1114 = vunpack.c.h.b16 %v348
    %v1115 = vunpack.c.l.b16 %v349
    %v1116 = vunpack.c.h.b16 %v349
    %v1117 = vunpack.c.l.b16 %v350
    %v1118 = vunpack.c.h.b16 %v350
    %v1119 = vunpack.c.l.b16 %v351
    %v1120 = vunpack.c.h.b16 %v351
    %v1121 = vunpack.c.l.b16 %v352
    %v1122 = vunpack.c.h.b16 %v352
    %v1123 = vunpack.c.l.b16 %v353
    %v1124 = vunpack.c.h.b16 %v353
    %v1125 = vunpack.c.l.b16 %v354
    %v1126 = vunpack.c.h.b16 %v354
    %v1127 = vunpack.c.l.b16 %v355
    %v1128 = vunpack.c.h.b16 %v355
    %v1129 = vunpack.c.l.b16 %v356
    %v1130 = vunpack.c.h.b16 %v356
    %v1131 = vunpack.c.l.b16 %v357
    %v1132 = vunpack.c.h.b16 %v357
    %v1133 = vunpack.c.l.b16 %v358
    %v1134 = vunpack.c.h.b16 %v358
    %v1135 = vunpack.c.l.b16 %v359
    %v1136 = vunpack.c.h.b16 %v359
    %v1137 = vunpack.c.l.b16 %v360
    %v1138 = vunpack.c.h.b16 %v360
    %v1139 = vunpack.c.l.b16 %v361
    %v1140 = vunpack.c.h.b16 %v361
    %v1141 = vunpack.c.l.b16 %v362
    %v1142 = vunpack.c.h.b16 %v362
    %v1143 = vunpack.c.l.b16 %v363
    %v1144 = vunpack.c.h.b16 %v363
    %v1145 = vunpack.c.l.b16 %v364
    %v1146 = vunpack.c.h.b16 %v364
    %v1147 = vunpack.c.l.b16 %v365
    %v1148 = vunpack.c.h.b16 %v365
    %v1149 = vunpack.c.l.b16 %v366
    %v1150 = vunpack.c.h.b16 %v366
    %v1151 = vunpack.c.l.b16 %v367
    %v1152 = vunpack.c.h.b16 %v367
    %v1153 = vunpack.c.l.b16 %v368
    %v1154 = vunpack.c.h.b16 %v368
    %v1155 = vunpack.c.l.b16 %v369
    %v1156 = vunpack.c.h.b16 %v369
    %v1157 = vunpack.c.l.b16 %v370
    %v1158 = vunpack.c.h.b16 %v370
    %v1159 = vunpack.c.l.b16 %v371
    %v1160 = vunpack.c.h.b16 %v371
    %v1161 = vunpack.c.l.b16 %v372
    %v1162 = vunpack.c.h.b16 %v372
    %v1163 = vunpack.c.l.b16 %v373
    %v1164 = vunpack.c.h.b16 %v373
    %v1165 = vunpack.c.l.b16 %v374
    %v1166 = vunpack.c.h.b16 %v374
    %v1167 = vunpack.c.l.b16 %v375
    %v1168 = vunpack.c.h.b16 %v375
    %v1169 = vunpack.c.l.b16 %v376
    %v1170 = vunpack.c.h.b16 %v376
    %v1171 = vunpack.c.l.b16 %v377
    %v1172 = vunpack.c.h.b16 %v377
    %v1173 = vunpack.c.l.b16 %v378
    %v1174 = vunpack.c.h.b16 %v378
    %v1175 = vunpack.c.l.b16 %v379
    %v1176 = vunpack.c.h.b16 %v379
    %v1177 = vunpack.c.l.b16 %v380
    %v1178 = vunpack.c.h.b16 %v380
    %v1179 = vunpack.c.l.b16 %v381
    %v1180 = vunpack.c.h.b16 %v381
    %v1181 = vunpack.c.l.b16 %v382
    %v1182 = vunpack.c.h.b16 %v382
    %v1183 = vunpack.c.l.b16 %v383
    %v1184 = vunpack.c.h.b16 %v383
    %v1185 = vunpack.c.l.b16 %v384
    %v1186 = vunpack.c.h.b16 %v384
    %v1187 = vunpack.c.l.b16 %v385
    %v1188 = vunpack.c.h.b16 %v385
    %v1189 = vunpack.c.l.b16 %v386
    %v1190 = vunpack.c.h.b16 %v386
    %v1191 = vunpack.c.l.b16 %v387
    %v1192 = vunpack.c.h.b16 %v387
    %v1193 = vunpack.c.l.b16 %v388
    %v1194 = vunpack.c.h.b16 %v388
    %v1195 = vunpack.c.l.b16 %v389
    %v1196 = vunpack.c.h.b16 %v389
    %v1197 = vunpack.c.l.b16 %v390
    %v1198 = vunpack.c.h.b16 %v390
    %v1199 = vunpack.c.l.b16 %v391
    %v1200 = vunpack.c.h.b16 %v391
    %v1201 = vunpack.c.l.b16 %v392
    %v1202 = vunpack.c.h.b16 %v392
    %v1203 = vunpack.c.l.b16 %v393
    %v1204 = vunpack.c.h.b16 %v393
    %v1205 = vunpack.c.l.b16 %v394
    %v1206 = vunpack.c.h.b16 %v394
    %v1207 = vunpack.c.l.b16 %v395
    %v1208 = vunpack.c.h.b16 %v395
    %v1209 = vunpack.c.l.b16 %v396
    %v1210 = vunpack.c.h.b16 %v396
    %v1211 = vunpack.c.l.b16 %v397
    %v1212 = vunpack.c.h.b16 %v397
    %v1213 = vunpack.c.l.b16 %v398
    %v1214 = vunpack.c.h.b16 %v398
    %v1215 = vunpack.c.l.b16 %v399
    %v1216 = vunpack.c.h.b16 %v399
    %v1217 = vunpack.c.l.b16 %v400
    %v1218 = vunpack.c.h.b16 %v400
    %v1219 = vunpack.c.l.b16 %v401
    %v1220 = vunpack.c.h.b16 %v401
    %v1221 = vunpack.c.l.b16 %v402
    %v1222 = vunpack.c.h.b16 %v402
    %v1223 = vunpack.c.l.b16 %v403
    %v1224 = vunpack.c.h.b16 %v403
    %v1225 = vunpack.c.l.b16 %v404
    %v1226 = vunpack.c.h.b16 %v404
    %v1227 = vunpack.c.l.b16 %v405
    %v1228 = vunpack.c.h.b16 %v405
    %v1229 = vunpack.c.l.b16 %v406
    %v1230 = vunpack.c.h.b16 %v406
    %v1231 = vunpack.c.l.b16 %v407
    %v1232 = vunpack.c.h.b16 %v407
    %v1233 = vunpack.c.l.b16 %v408
    %v1234 = vunpack.c.h.b16 %v408
    %v1235 = vunpack.c.l.b16 %v409
    %v1236 = vunpack.c.h.b16 %v409
    %v1237 = vunpack.c.l.b16 %v410
    %v1238 = vunpack.c.h.b16 %v410
    %v1239 = vunpack.c.l.b16 %v411
    %v1240 = vunpack.c.h.b16 %v411
    %v1241 = vunpack.c.l.b16 %v412
    %v1242 = vunpack.c.h.b16 %v412
    %v1243 = vunpack.c.l.b16 %v413
    %v1244 = vunpack.c.h.b16 %v413
    %v1245 = vunpack.c.l.b16 %v414
    %v1246 = vunpack.c.h.b16 %v414
    %v1247 = vunpack.c.l.b16 %v415
    %v1248 = vunpack.c.h.b16 %v415
    %v1249 = vunpack.c.l.b16 %v416
    %v1250 = vunpack.c.h.b16 %v416
    %v1251 = vunpack.c.l.b16 %v417
    %v1252 = vunpack.c.h.b16 %v417
    %v1253 = vunpack.c.l.b16 %v418
    %v1254 = vunpack.c.h.b16 %v418
    %v1255 = vunpack.c.l.b16 %v419
    %v1256 = vunpack.c.h.b16 %v419
    %v1257 = vunpack.c.l.b16 %v420
    %v1258 = vunpack.c.h.b16 %v420
    %v1259 = vunpack.c.l.b16 %v421
    %v1260 = vunpack.c.h.b16 %v421
    %v1261 = vunpack.c.l.b16 %v422
    %v1262 = vunpack.c.h.b16 %v422
    %v1263 = vunpack.c.l.b16 %v423
    %v1264 = vunpack.c.h.b16 %v423
    %v1265 = vunpack.c.l.b16 %v424
    %v1266 = vunpack.c.h.b16 %v424
    %v1267 = vunpack.c.l.b16 %v425
    %v1268 = vunpack.c.h.b16 %v425
    %v1269 = vunpack.c.l.b16 %v426
    %v1270 = vunpack.c.h.b16 %v426
    %v1271 = vunpack.c.l.b16 %v427
    %v1272 = vunpack.c.h.b16 %v427
    %v1273 = vunpack.c.l.b16 %v428
    %v1274 = vunpack.c.h.b16 %v428
    %v1275 = vunpack.c.l.b16 %v429
    %v1276 = vunpack.c.h.b16 %v429
    %v1277 = vunpack.c.l.b16 %v430
    %v1278 = vunpack.c.h.b16 %v430
    %v1279 = vunpack.c.l.b16 %v431
    %v1280 = vunpack.c.h.b16 %v431
    %v1281 = vunpack.c.l.b16 %v432
    %v1282 = vunpack.c.h.b16 %v432
    %v1283 = vunpack.c.l.b16 %v433
    %v1284 = vunpack.c.h.b16 %v433
    %v1285 = vunpack.c.l.b16 %v434
    %v1286 = vunpack.c.h.b16 %v434
    %v1287 = vunpack.c.l.b16 %v435
    %v1288 = vunpack.c.h.b16 %v435
    %v1289 = vunpack.c.l.b16 %v436
    %v1290 = vunpack.c.h.b16 %v436
    %v1291 = vunpack.c.l.b16 %v437
    %v1292 = vunpack.c.h.b16 %v437
    %v1293 = vunpack.c.l.b16 %v438
    %v1294 = vunpack.c.h.b16 %v438
    %v1295 = vunpack.c.l.b16 %v439
    %v1296 = vunpack.c.h.b16 %v439
    %v1297 = vunpack.c.l.b16 %v440
    %v1298 = vunpack.c.h.b16 %v440
    %v1299 = vunpack.c.l.b16 %v441
    %v1300 = vunpack.c.h.b16 %v441
    %v1301 = vunpack.c.l.b16 %v442
    %v1302 = vunpack.c.h.b16 %v442
    %v1303 = vunpack.c.l.b16 %v443
    %v1304 = vunpack.c.h.b16 %v443
    %v1305 = vunpack.c.l.b16 %v444
    %v1306 = vunpack.c.h.b16 %v444
    %v1307 = vunpack.c.l.b16 %v445
    %v1308 = vunpack.c.h.b16 %v445
    %v1309 = vunpack.c.l.b16 %v446
    %v1310 = vunpack.c.h.b16 %v446
    %v1311 = vunpack.c.l.b16 %v447
    %v1312 = vunpack.c.h.b16 %v447
    %v1313 = vunpack.c.l.b16 %v448
    %v1314 = vunpack.c.h.b16 %v448
    %v1315 = vunpack.c.l.b16 %v449
    %v1316 = vunpack.c.h.b16 %v449
    %v1317 = vunpack.c.l.b16 %v450
    %v1318 = vunpack.c.h.b16 %v450
    %v1319 = vunpack.c.l.b16 %v451
    %v1320 = vunpack.c.h.b16 %v451
    %v1321 = vunpack.c.l.b16 %v452
    %v1322 = vunpack.c.h.b16 %v452
    %v1323 = vunpack.c.l.b16 %v453
    %v1324 = vunpack.c.h.b16 %v453
    %v1325 = vunpack.c.l.b16 %v454
    %v1326 = vunpack.c.h.b16 %v454
    %v1327 = vunpack.c.l.b16 %v455
    %v1328 = vunpack.c.h.b16 %v455
    %v1329 = vunpack.c.l.b16 %v456
    %v1330 = vunpack.c.h.b16 %v456
    %v1331 = vunpack.c.l.b16 %v457
    %v1332 = vunpack.c.h.b16 %v457
    %v1333 = vunpack.c.l.b16 %v458
    %v1334 = vunpack.c.h.b16 %v458
    %v1335 = vunpack.c.l.b16 %v459
    %v1336 = vunpack.c.h.b16 %v459
    %v1337 = vunpack.c.l.b16 %v460
    %v1338 = vunpack.c.h.b16 %v460
    %v1339 = vunpack.c.l.b16 %v461
    %v1340 = vunpack.c.h.b16 %v461
    %v1341 = vunpack.c.l.b16 %v462
    %v1342 = vunpack.c.h.b16 %v462
    %v1343 = vunpack.c.l.b16 %v463
    %v1344 = vunpack.c.h.b16 %v463
    %v1345 = vunpack.c.l.b16 %v464
    %v1346 = vunpack.c.h.b16 %v464
    %v1347 = vpack.c.b16 %v779, %v771
    %v1348 = vpack.c.b16 %v780, %v772
    %v1349 = vpack.c.b16 %v781, %v773
    %v1350 = vpack.c.b16 %v782, %v774
    %v1351 = vpack.c.b16 %v783, %v775
    %v1352 = vpack.c.b16 %v784, %v776
    %v1353 = vpack.c.b16 %v785, %v777
    %v1354 = vpack.c.b16 %v786, %v778
    %v1355 = vpack.c.b16 %v795, %v787
    %v1356 = vpack.c.b16 %v796, %v788
    %v1357 = vpack.c.b16 %v797, %v789
    %v1358 = vpack.c.b16 %v798, %v790
    %v1359 = vpack.c.b16 %v799, %v791
    %v1360 = vpack.c.b16 %v800, %v792
    %v1361 = vpack.c.b16 %v801, %v793
    %v1362 = vpack.c.b16 %v802, %v794
    %v1363 = vpack.c.b16 %v811, %v803
    %v1364 = vpack.c.b16 %v812, %v804
    %v1365 = vpack.c.b16 %v813, %v805
    %v1366 = vpack.c.b16 %v814, %v806
    %v1367 = vpack.c.b16 %v815, %v807
    %v1368 = vpack.c.b16 %v816, %v808
    %v1369 = vpack.c.b16 %v817, %v809
    %v1370 = vpack.c.b16 %v818, %v810
    %v1371 = vpack.c.b16 %v827, %v819
    %v1372 = vpack.c.b16 %v828, %v820
    %v1373 = vpack.c.b16 %v829, %v821
    %v1374 = vpack.c.b16 %v830, %v822
    %v1375 = vpack.c.b16 %v831, %v823
    %v1376 = vpack.c.b16 %v832, %v824
    %v1377 = vpack.c.b16 %v833, %v825
    %v1378 = vpack.c.b16 %v834, %v826
    %v1379 = vpack.c.b16 %v843, %v835
    %v1380 = vpack.c.b16 %v844, %v836
    %v1381 = vpack.c.b16 %v845, %v837
    %v1382 = vpack.c.b16 %v846, %v838
    %v1383 = vpack.c.b16 %v847, %v839
    %v1384 = vpack.c.b16 %v848, %v840
    %v1385 = vpack.c.b16 %v849, %v841
    %v1386 = vpack.c.b16 %v850, %v842
    %v1387 = vpack.c.b16 %v859, %v851
    %v1388 = vpack.c.b16 %v860, %v852
    %v1389 = vpack.c.b16 %v861, %v853
    %v1390 = vpack.c.b16 %v862, %v854
    %v1391 = vpack.c.b16 %v863, %v855
    %v1392 = vpack.c.b16 %v864, %v856
    %v1393 = vpack.c.b16 %v865, %v857
    %v1394 = vpack.c.b16 %v866, %v858
    %v1395 = vpack.c.b16 %v875, %v867
    %v1396 = vpack.c.b16 %v876, %v868
    %v1397 = vpack.c.b16 %v877, %v869
    %v1398 = vpack.c.b16 %v878, %v870
    %v1399 = vpack.c.b16 %v879, %v871
    %v1400 = vpack.c.b16 %v880, %v872
    %v1401 = vpack.c.b16 %v881, %v873
    %v1402 = vpack.c.b16 %v882, %v874
    %v1403 = vpack.c.b16 %v891, %v883
    %v1404 = vpack.c.b16 %v892, %v884
    %v1405 = vpack.c.b16 %v893, %v885
    %v1406 = vpack.c.b16 %v894, %v886
    %v1407 = vpack.c.b16 %v895, %v887
    %v1408 = vpack.c.b16 %v896, %v888
    %v1409 = vpack.c.b16 %v897, %v889
    %v1410 = vpack.c.b16 %v898, %v890
    %v1411 = vpack.c.b16 %v907, %v899
    %v1412 = vpack.c.b16 %v908, %v900
    %v1413 = vpack.c.b16 %v909, %v901
    %v1414 = vpack.c.b16 %v910, %v902
    %v1415 = vpack.c.b16 %v911, %v903
    %v1416 = vpack.c.b16 %v912, %v904
    %v1417 = vpack.c.b16 %v913, %v905
    %v1418 = vpack.c.b16 %v914, %v906
    %v1419 = vpack.c.b16 %v923, %v915
    %v1420 = vpack.c.b16 %v924, %v916
    %v1421 = vpack.c.b16 %v925, %v917
    %v1422 = vpack.c.b16 %v926, %v918
    %v1423 = vpack.c.b16 %v927, %v919
    %v1424 = vpack.c.b16 %v928, %v920
    %v1425 = vpack.c.b16 %v929, %v921
    %v1426 = vpack.c.b16 %v930, %v922
    %v1427 = vpack.c.b16 %v939, %v931
    %v1428 = vpack.c.b16 %v940, %v932
    %v1429 = vpack.c.b16 %v941, %v933
    %v1430 = vpack.c.b16 %v942, %v934
    %v1431 = vpack.c.b16 %v943, %v935
    %v1432 = vpack.c.b16 %v944, %v936
    %v1433 = vpack.c.b16 %v945, %v937
    %v1434 = vpack.c.b16 %v946, %v938
    %v1435 = vpack.c.b16 %v955, %v947
    %v1436 = vpack.c.b16 %v956, %v948
    %v1437 = vpack.c.b16 %v957, %v949
    %v1438 = vpack.c.b16 %v958, %v950
    %v1439 = vpack.c.b16 %v959, %v951
    %v1440 = vpack.c.b16 %v960, %v952
    %v1441 = vpack.c.b16 %v961, %v953
    %v1442 = vpack.c.b16 %v962, %v954
    %v1443 = vpack.c.b16 %v971, %v963
    %v1444 = vpack.c.b16 %v972, %v964
    %v1445 = vpack.c.b16 %v973, %v965
    %v1446 = vpack.c.b16 %v974, %v966
    %v1447 = vpack.c.b16 %v975, %v967
    %v1448 = vpack.c.b16 %v976, %v968
    %v1449 = vpack.c.b16 %v977, %v969
    %v1450 = vpack.c.b16 %v978, %v970
    %v1451 = vpack.c.b16 %v987, %v979
    %v1452 = vpack.c.b16 %v988, %v980
    %v1453 = vpack.c.b16 %v989, %v981
    %v1454 = vpack.c.b16 %v990, %v982
    %v1455 = vpack.c.b16 %v991, %v983
    %v1456 = vpack.c.b16 %v992, %v984
    %v1457 = vpack.c.b16 %v993, %v985
    %v1458 = vpack.c.b16 %v994, %v986
    %v1459 = vpack.c.b16 %v1003, %v995
    %v1460 = vpack.c.b16 %v1004, %v996
    %v1461 = vpack.c.b16 %v1005, %v997
    %v1462 = vpack.c.b16 %v1006, %v998
    %v1463 = vpack.c.b16 %v1007, %v999
    %v1464 = vpack.c.b16 %v1008, %v1000
    %v1465 = vpack.c.b16 %v1009, %v1001
    %v1466 = vpack.c.b16 %v1010, %v1002
    %v1467 = vpack.c.b16 %v1019, %v1011
    %v1468 = vpack.c.b16 %v1020, %v1012
    %v1469 = vpack.c.b16 %v1021, %v1013
    %v1470 = vpack.c.b16 %v1022, %v1014
    %v1471 = vpack.c.b16 %v1023, %v1015
    %v1472 = vpack.c.b16 %v1024, %v1016
    %v1473 = vpack.c.b16 %v1025, %v1017
    %v1474 = vpack.c.b16 %v1026, %v1018
    %v1475 = vpack.c.b16 %v1035, %v1027
    %v1476 = vpack.c.b16 %v1036, %v1028
    %v1477 = vpack.c.b16 %v1037, %v1029
    %v1478 = vpack.c.b16 %v1038, %v1030
    %v1479 = vpack.c.b16 %v1039, %v1031
    %v1480 = vpack.c.b16 %v1040, %v1032
    %v1481 = vpack.c.b16 %v1041, %v1033
    %v1482 = vpack.c.b16 %v1042, %v1034
    %v1483 = vpack.c.b16 %v1051, %v1043
    %v1484 = vpack.c.b16 %v1052, %v1044
    %v1485 = vpack.c.b16 %v1053, %v1045
    %v1486 = vpack.c.b16 %v1054, %v1046
    %v1487 = vpack.c.b16 %v1055, %v1047
    %v1488 = vpack.c.b16 %v1056, %v1048
    %v1489 = vpack.c.b16 %v1057, %v1049
    %v1490 = vpack.c.b16 %v1058, %v1050
    %v1491 = vpack.c.b16 %v1067, %v1059
    %v1492 = vpack.c.b16 %v1068, %v1060
    %v1493 = vpack.c.b16 %v1069, %v1061
    %v1494 = vpack.c.b16 %v1070, %v1062
    %v1495 = vpack.c.b16 %v1071, %v1063
    %v1496 = vpack.c.b16 %v1072, %v1064
    %v1497 = vpack.c.b16 %v1073, %v1065
    %v1498 = vpack.c.b16 %v1074, %v1066
    %v1499 = vpack.c.b16 %v1083, %v1075
    %v1500 = vpack.c.b16 %v1084, %v1076
    %v1501 = vpack.c.b16 %v1085, %v1077
    %v1502 = vpack.c.b16 %v1086, %v1078
    %v1503 = vpack.c.b16 %v1087, %v1079
    %v1504 = vpack.c.b16 %v1088, %v1080
    %v1505 = vpack.c.b16 %v1089, %v1081
    %v1506 = vpack.c.b16 %v1090, %v1082
    %v1507 = vpack.c.b16 %v1099, %v1091
    %v1508 = vpack.c.b16 %v1100, %v1092
    %v1509 = vpack.c.b16 %v1101, %v1093
    %v1510 = vpack.c.b16 %v1102, %v1094
    %v1511 = vpack.c.b16 %v1103, %v1095
    %v1512 = vpack.c.b16 %v1104, %v1096
    %v1513 = vpack.c.b16 %v1105, %v1097
    %v1514 = vpack.c.b16 %v1106, %v1098
    %v1515 = vpack.c.b16 %v1115, %v1107
    %v1516 = vpack.c.b16 %v1116, %v1108
    %v1517 = vpack.c.b16 %v1117, %v1109
    %v1518 = vpack.c.b16 %v1118, %v1110
    %v1519 = vpack.c.b16 %v1119, %v1111
    %v1520 = vpack.c.b16 %v1120, %v1112
    %v1521 = vpack.c.b16 %v1121, %v1113
    %v1522 = vpack.c.b16 %v1122, %v1114
    %v1523 = vpack.c.b16 %v1131, %v1123
    %v1524 = vpack.c.b16 %v1132, %v1124
    %v1525 = vpack.c.b16 %v1133, %v1125
    %v1526 = vpack.c.b16 %v1134, %v1126
    %v1527 = vpack.c.b16 %v1135, %v1127
    %v1528 = vpack.c.b16 %v1136, %v1128
    %v1529 = vpack.c.b16 %v1137, %v1129
    %v1530 = vpack.c.b16 %v1138, %v1130
    %v1531 = vpack.c.b16 %v1147, %v1139
    %v1532 = vpack.c.b16 %v1148, %v1140
    %v1533 = vpack.c.b16 %v1149, %v1141
    %v1534 = vpack.c.b16 %v1150, %v1142
    %v1535 = vpack.c.b16 %v1151, %v1143
    %v1536 = vpack.c.b16 %v1152, %v1144
    %v1537 = vpack.c.b16 %v1153, %v1145
    %v1538 = vpack.c.b16 %v1154, %v1146
    %v1539 = vpack.c.b16 %v1163, %v1155
    %v1540 = vpack.c.b16 %v1164, %v1156
    %v1541 = vpack.c.b16 %v1165, %v1157
    %v1542 = vpack.c.b16 %v1166, %v1158
    %v1543 = vpack.c.b16 %v1167, %v1159
    %v1544 = vpack.c.b16 %v1168, %v1160
    %v1545 = vpack.c.b16 %v1169, %v1161
    %v1546 = vpack.c.b16 %v1170, %v1162
    %v1547 = vpack.c.b16 %v1179, %v1171
    %v1548 = vpack.c.b16 %v1180, %v1172
    %v1549 = vpack.c.b16 %v1181, %v1173
    %v1550 = vpack.c.b16 %v1182, %v1174
    %v1551 = vpack.c.b16 %v1183, %v1175
    %v1552 = vpack.c.b16 %v1184, %v1176
    %v1553 = vpack.c.b16 %v1185, %v1177
    %v1554 = vpack.c.b16 %v1186, %v1178
    %v1555 = vpack.c.b16 %v1195, %v1187
    %v1556 = vpack.c.b16 %v1196, %v1188
    %v1557 = vpack.c.b16 %v1197, %v1189
    %v1558 = vpack.c.b16 %v1198, %v1190
    %v1559 = vpack.c.b16 %v1199, %v1191
    %v1560 = vpack.c.b16 %v1200, %v1192
    %v1561 = vpack.c.b16 %v1201, %v1193
    %v1562 = vpack.c.b16 %v1202, %v1194
    %v1563 = vpack.c.b16 %v1211, %v1203
    %v1564 = vpack.c.b16 %v1212, %v1204
    %v1565 = vpack.c.b16 %v1213, %v1205
    %v1566 = vpack.c.b16 %v1214, %v1206
    %v1567 = vpack.c.b16 %v1215, %v1207
    %v1568 = vpack.c.b16 %v1216, %v1208
    %v1569 = vpack.c.b16 %v1217, %v1209
    %v1570 = vpack.c.b16 %v1218, %v1210
    %v1571 = vpack.c.b16 %v1227, %v1219
    %v1572 = vpack.c.b16 %v1228, %v1220
    %v1573 = vpack.c.b16 %v1229, %v1221
    %v1574 = vpack.c.b16 %v1230, %v1222
    %v1575 = vpack.c.b16 %v1231, %v1223
    %v1576 = vpack.c.b16 %v1232, %v1224
    %v1577 = vpack.c.b16 %v1233, %v1225
    %v1578 = vpack.c.b16 %v1234, %v1226
    %v1579 = vpack.c.b16 %v1243, %v1235
    %v1580 = vpack.c.b16 %v1244, %v1236
    %v1581 = vpack.c.b16 %v1245, %v1237
    %v1582 = vpack.c.b16 %v1246, %v1238
    %v1583 = vpack.c.b16 %v1247, %v1239
    %v1584 = vpack.c.b16 %v1248, %v1240
    %v1585 = vpack.c.b16 %v1249, %v1241
    %v1586 = vpack.c.b16 %v1250, %v1242
    %v1587 = vpack.c.b16 %v1259, %v1251
    %v1588 = vpack.c.b16 %v1260, %v1252
    %v1589 = vpack.c.b16 %v1261, %v1253
    %v1590 = vpack.c.b16 %v1262, %v1254
    %v1591 = vpack.c.b16 %v1263, %v1255
    %v1592 = vpack.c.b16 %v1264, %v1256
    %v1593 = vpack.c.b16 %v1265, %v1257
    %v1594 = vpack.c.b16 %v1266, %v1258
    %v1595 = vpack.c.b16 %v1275, %v1267
    %v1596 = vpack.c.b16 %v1276, %v1268
    %v1597 = vpack.c.b16 %v1277, %v1269
    %v1598 = vpack.c.b16 %v1278, %v1270
    %v1599 = vpack.c.b16 %v1279, %v1271
    %v1600 = vpack.c.b16 %v1280, %v1272
    %v1601 = vpack.c.b16 %v1281, %v1273
    %v1602 = vpack.c.b16 %v1282, %v1274
    %v1603 = vpack.c.b16 %v1291, %v1283
    %v1604 = vpack.c.b16 %v1292, %v1284
    %v1605 = vpack.c.b16 %v1293, %v1285
    %v1606 = vpack.c.b16 %v1294, %v1286
    %v1607 = vpack.c.b16 %v1295, %v1287
    %v1608 = vpack.c.b16 %v1296, %v1288
    %v1609 = vpack.c.b16 %v1297, %v1289
    %v1610 = vpack.c.b16 %v1298, %v1290
    %v1611 = vpack.c.b16 %v1307, %v1299
    %v1612 = vpack.c.b16 %v1308, %v1300
    %v1613 = vpack.c.b16 %v1309, %v1301
    %v1614 = vpack.c.b16 %v1310, %v1302
    %v1615 = vpack.c.b16 %v1311, %v1303
    %v1616 = vpack.c.b16 %v1312, %v1304
    %v1617 = vpack.c.b16 %v1313, %v1305
    %v1618 = vpack.c.b16 %v1314, %v1306
    %v1619 = vpack.c.b16 %v1323, %v1315
    %v1620 = vpack.c.b16 %v1324, %v1316
    %v1621 = vpack.c.b16 %v1325, %v1317
    %v1622 = vpack.c.b16 %v1326, %v1318
    %v1623 = vpack.c.b16 %v1327, %v1319
    %v1624 = vpack.c.b16 %v1328, %v1320
    %v1625 = vpack.c.b16 %v1329, %v1321
    %v1626 = vpack.c.b16 %v1330, %v1322
    %v1627 = vpack.c.b16 %v1339, %v1331
    %v1628 = vpack.c.b16 %v1340, %v1332
    %v1629 = vpack.c.b16 %v1341, %v1333
    %v1630 = vpack.c.b16 %v1342, %v1334
    %v1631 = vpack.c.b16 %v1343, %v1335
    %v1632 = vpack.c.b16 %v1344, %v1336
    %v1633 = vpack.c.b16 %v1345, %v1337
    %v1634 = vpack.c.b16 %v1346, %v1338
    %vm1923 = vcmask 523264
    %v1925 = vsel %vm1923, %v176, 0
    %1927 = vmatpush.bf16.msra.mxu0 %v1403
    %1928 = vmatpush.bf16.msra.mxu0 %v1395
    %1929 = vmatpush.bf16.msra.mxu0 %v1387
    %1930 = vmatpush.bf16.msra.mxu0 %v1379
    %1931 = vmatpush.bf16.msra.mxu0 %v1371
    %1932 = vmatpush.bf16.msra.mxu0 %v1363
    %1933 = vmatpush.bf16.msra.mxu0 %v1355
    %1934 = vmatpush.bf16.msra.mxu0 %v1347
    %1935 = vmatmul.bf16.gmra.mxu0 %v172
    %v1936 = vpop.f32.mrf.mxu0
    %v1937 = vadd.f32 %v467, %v1936
    %v1938 = vpop.f32.mrf.mxu0
    %1939 = vdwg.mxu0
    %1940 = vmatpush.bf16.msra.mxu0 %v1467
    %1941 = vmatpush.bf16.msra.mxu0 %v1459
    %1942 = vmatpush.bf16.msra.mxu0 %v1451
    %1943 = vmatpush.bf16.msra.mxu0 %v1443
    %1944 = vmatpush.bf16.msra.mxu0 %v1435
    %1945 = vmatpush.bf16.msra.mxu0 %v1427
    %1946 = vmatpush.bf16.msra.mxu0 %v1419
    %1947 = vmatpush.bf16.msra.mxu0 %v1411
    %1948 = vmatmul.bf16.gmra.mxu0 %v173
    %v1949 = vpop.f32.mrf.mxu0
    %v1950 = vadd.f32 %v1937, %v1949
    %v1951 = vpop.f32.mrf.mxu0
    %1952 = vdwg.mxu0
    %1953 = vmatpush.bf16.msra.mxu0 %v1531
    %1954 = vmatpush.bf16.msra.mxu0 %v1523
    %1955 = vmatpush.bf16.msra.mxu0 %v1515
    %1956 = vmatpush.bf16.msra.mxu0 %v1507
    %1957 = vmatpush.bf16.msra.mxu0 %v1499
    %1958 = vmatpush.bf16.msra.mxu0 %v1491
    %1959 = vmatpush.bf16.msra.mxu0 %v1483
    %1960 = vmatpush.bf16.msra.mxu0 %v1475
    %1961 = vmatmul.bf16.gmra.mxu0 %v174
    %v1962 = vpop.f32.mrf.mxu0
    %v1963 = vadd.f32 %v1950, %v1962
    %v1964 = vpop.f32.mrf.mxu0
    %1965 = vdwg.mxu0
    %1966 = vmatpush.bf16.msra.mxu0 %v1595
    %1967 = vmatpush.bf16.msra.mxu0 %v1587
    %1968 = vmatpush.bf16.msra.mxu0 %v1579
    %1969 = vmatpush.bf16.msra.mxu0 %v1571
    %1970 = vmatpush.bf16.msra.mxu0 %v1563
    %1971 = vmatpush.bf16.msra.mxu0 %v1555
    %1972 = vmatpush.bf16.msra.mxu0 %v1547
    %1973 = vmatpush.bf16.msra.mxu0 %v1539
    %1974 = vmatmul.bf16.gmra.mxu0 %v175
    %v1975 = vpop.f32.mrf.mxu0
    %v1976 = vadd.f32 %v1963, %v1975
    %v1977 = vpop.f32.mrf.mxu0
    %1978 = vdwg.mxu0
    %1979 = vmatpush.bf16.msra.mxu0 0
    %1980 = vmatpush.bf16.msra.mxu0 0
    %1981 = vmatpush.bf16.msra.mxu0 0
    %1982 = vmatpush.bf16.msra.mxu0 0
    %1983 = vmatpush.bf16.msra.mxu0 %v1627
    %1984 = vmatpush.bf16.msra.mxu0 %v1619
    %1985 = vmatpush.bf16.msra.mxu0 %v1611
    %1986 = vmatpush.bf16.msra.mxu0 %v1603
    %1987 = vmatmul.bf16.gmra.mxu0 %v1925
    %v1988 = vpop.f32.mrf.mxu0
    %v1989 = vadd.f32 %v1976, %v1988
    %v1990 = vpop.f32.mrf.mxu0
    %1991 = vdwg.mxu0
    %1992 = vmatpush.bf16.msra.mxu0 %v1404
    %1993 = vmatpush.bf16.msra.mxu0 %v1396
    %1994 = vmatpush.bf16.msra.mxu0 %v1388
    %1995 = vmatpush.bf16.msra.mxu0 %v1380
    %1996 = vmatpush.bf16.msra.mxu0 %v1372
    %1997 = vmatpush.bf16.msra.mxu0 %v1364
    %1998 = vmatpush.bf16.msra.mxu0 %v1356
    %1999 = vmatpush.bf16.msra.mxu0 %v1348
    %2000 = vmatmul.bf16.gmra.mxu0 %v172
    %v2001 = vpop.f32.mrf.mxu0
    %v2002 = vadd.f32 %v468, %v2001
    %v2003 = vpop.f32.mrf.mxu0
    %2004 = vdwg.mxu0
    %2005 = vmatpush.bf16.msra.mxu0 %v1468
    %2006 = vmatpush.bf16.msra.mxu0 %v1460
    %2007 = vmatpush.bf16.msra.mxu0 %v1452
    %2008 = vmatpush.bf16.msra.mxu0 %v1444
    %2009 = vmatpush.bf16.msra.mxu0 %v1436
    %2010 = vmatpush.bf16.msra.mxu0 %v1428
    %2011 = vmatpush.bf16.msra.mxu0 %v1420
    %2012 = vmatpush.bf16.msra.mxu0 %v1412
    %2013 = vmatmul.bf16.gmra.mxu0 %v173
    %v2014 = vpop.f32.mrf.mxu0
    %v2015 = vadd.f32 %v2002, %v2014
    %v2016 = vpop.f32.mrf.mxu0
    %2017 = vdwg.mxu0
    %2018 = vmatpush.bf16.msra.mxu0 %v1532
    %2019 = vmatpush.bf16.msra.mxu0 %v1524
    %2020 = vmatpush.bf16.msra.mxu0 %v1516
    %2021 = vmatpush.bf16.msra.mxu0 %v1508
    %2022 = vmatpush.bf16.msra.mxu0 %v1500
    %2023 = vmatpush.bf16.msra.mxu0 %v1492
    %2024 = vmatpush.bf16.msra.mxu0 %v1484
    %2025 = vmatpush.bf16.msra.mxu0 %v1476
    %2026 = vmatmul.bf16.gmra.mxu0 %v174
    %v2027 = vpop.f32.mrf.mxu0
    %v2028 = vadd.f32 %v2015, %v2027
    %v2029 = vpop.f32.mrf.mxu0
    %2030 = vdwg.mxu0
    %2031 = vmatpush.bf16.msra.mxu0 %v1596
    %2032 = vmatpush.bf16.msra.mxu0 %v1588
    %2033 = vmatpush.bf16.msra.mxu0 %v1580
    %2034 = vmatpush.bf16.msra.mxu0 %v1572
    %2035 = vmatpush.bf16.msra.mxu0 %v1564
    %2036 = vmatpush.bf16.msra.mxu0 %v1556
    %2037 = vmatpush.bf16.msra.mxu0 %v1548
    %2038 = vmatpush.bf16.msra.mxu0 %v1540
    %2039 = vmatmul.bf16.gmra.mxu0 %v175
    %v2040 = vpop.f32.mrf.mxu0
    %v2041 = vadd.f32 %v2028, %v2040
    %v2042 = vpop.f32.mrf.mxu0
    %2043 = vdwg.mxu0
    %2044 = vmatpush.bf16.msra.mxu0 0
    %2045 = vmatpush.bf16.msra.mxu0 0
    %2046 = vmatpush.bf16.msra.mxu0 0
    %2047 = vmatpush.bf16.msra.mxu0 0
    %2048 = vmatpush.bf16.msra.mxu0 %v1628
    %2049 = vmatpush.bf16.msra.mxu0 %v1620
    %2050 = vmatpush.bf16.msra.mxu0 %v1612
    %2051 = vmatpush.bf16.msra.mxu0 %v1604
    %2052 = vmatmul.bf16.gmra.mxu0 %v1925
    %v2053 = vpop.f32.mrf.mxu0
    %v2054 = vadd.f32 %v2041, %v2053
    %v2055 = vpop.f32.mrf.mxu0
    %2056 = vdwg.mxu0
    %2057 = vmatpush.bf16.msra.mxu0 %v1405
    %2058 = vmatpush.bf16.msra.mxu0 %v1397
    %2059 = vmatpush.bf16.msra.mxu0 %v1389
    %2060 = vmatpush.bf16.msra.mxu0 %v1381
    %2061 = vmatpush.bf16.msra.mxu0 %v1373
    %2062 = vmatpush.bf16.msra.mxu0 %v1365
    %2063 = vmatpush.bf16.msra.mxu0 %v1357
    %2064 = vmatpush.bf16.msra.mxu0 %v1349
    %2065 = vmatmul.bf16.gmra.mxu0 %v172
    %v2066 = vpop.f32.mrf.mxu0
    %v2067 = vadd.f32 %v469, %v2066
    %v2068 = vpop.f32.mrf.mxu0
    %2069 = vdwg.mxu0
    %2070 = vmatpush.bf16.msra.mxu0 %v1469
    %2071 = vmatpush.bf16.msra.mxu0 %v1461
    %2072 = vmatpush.bf16.msra.mxu0 %v1453
    %2073 = vmatpush.bf16.msra.mxu0 %v1445
    %2074 = vmatpush.bf16.msra.mxu0 %v1437
    %2075 = vmatpush.bf16.msra.mxu0 %v1429
    %2076 = vmatpush.bf16.msra.mxu0 %v1421
    %2077 = vmatpush.bf16.msra.mxu0 %v1413
    %2078 = vmatmul.bf16.gmra.mxu0 %v173
    %v2079 = vpop.f32.mrf.mxu0
    %v2080 = vadd.f32 %v2067, %v2079
    %v2081 = vpop.f32.mrf.mxu0
    %2082 = vdwg.mxu0
    %2083 = vmatpush.bf16.msra.mxu0 %v1533
    %2084 = vmatpush.bf16.msra.mxu0 %v1525
    %2085 = vmatpush.bf16.msra.mxu0 %v1517
    %2086 = vmatpush.bf16.msra.mxu0 %v1509
    %2087 = vmatpush.bf16.msra.mxu0 %v1501
    %2088 = vmatpush.bf16.msra.mxu0 %v1493
    %2089 = vmatpush.bf16.msra.mxu0 %v1485
    %2090 = vmatpush.bf16.msra.mxu0 %v1477
    %2091 = vmatmul.bf16.gmra.mxu0 %v174
    %v2092 = vpop.f32.mrf.mxu0
    %v2093 = vadd.f32 %v2080, %v2092
    %v2094 = vpop.f32.mrf.mxu0
    %2095 = vdwg.mxu0
    %2096 = vmatpush.bf16.msra.mxu0 %v1597
    %2097 = vmatpush.bf16.msra.mxu0 %v1589
    %2098 = vmatpush.bf16.msra.mxu0 %v1581
    %2099 = vmatpush.bf16.msra.mxu0 %v1573
    %2100 = vmatpush.bf16.msra.mxu0 %v1565
    %2101 = vmatpush.bf16.msra.mxu0 %v1557
    %2102 = vmatpush.bf16.msra.mxu0 %v1549
    %2103 = vmatpush.bf16.msra.mxu0 %v1541
    %2104 = vmatmul.bf16.gmra.mxu0 %v175
    %v2105 = vpop.f32.mrf.mxu0
    %v2106 = vadd.f32 %v2093, %v2105
    %v2107 = vpop.f32.mrf.mxu0
    %2108 = vdwg.mxu0
    %2109 = vmatpush.bf16.msra.mxu0 0
    %2110 = vmatpush.bf16.msra.mxu0 0
    %2111 = vmatpush.bf16.msra.mxu0 0
    %2112 = vmatpush.bf16.msra.mxu0 0
    %2113 = vmatpush.bf16.msra.mxu0 %v1629
    %2114 = vmatpush.bf16.msra.mxu0 %v1621
    %2115 = vmatpush.bf16.msra.mxu0 %v1613
    %2116 = vmatpush.bf16.msra.mxu0 %v1605
    %2117 = vmatmul.bf16.gmra.mxu0 %v1925
    %v2118 = vpop.f32.mrf.mxu0
    %v2119 = vadd.f32 %v2106, %v2118
    %v2120 = vpop.f32.mrf.mxu0
    %2121 = vdwg.mxu0
    %2122 = vmatpush.bf16.msra.mxu0 %v1406
    %2123 = vmatpush.bf16.msra.mxu0 %v1398
    %2124 = vmatpush.bf16.msra.mxu0 %v1390
    %2125 = vmatpush.bf16.msra.mxu0 %v1382
    %2126 = vmatpush.bf16.msra.mxu0 %v1374
    %2127 = vmatpush.bf16.msra.mxu0 %v1366
    %2128 = vmatpush.bf16.msra.mxu0 %v1358
    %2129 = vmatpush.bf16.msra.mxu0 %v1350
    %2130 = vmatmul.bf16.gmra.mxu0 %v172
    %v2131 = vpop.f32.mrf.mxu0
    %v2132 = vadd.f32 %v470, %v2131
    %v2133 = vpop.f32.mrf.mxu0
    %2134 = vdwg.mxu0
    %2135 = vmatpush.bf16.msra.mxu0 %v1470
    %2136 = vmatpush.bf16.msra.mxu0 %v1462
    %2137 = vmatpush.bf16.msra.mxu0 %v1454
    %2138 = vmatpush.bf16.msra.mxu0 %v1446
    %2139 = vmatpush.bf16.msra.mxu0 %v1438
    %2140 = vmatpush.bf16.msra.mxu0 %v1430
    %2141 = vmatpush.bf16.msra.mxu0 %v1422
    %2142 = vmatpush.bf16.msra.mxu0 %v1414
    %2143 = vmatmul.bf16.gmra.mxu0 %v173
    %v2144 = vpop.f32.mrf.mxu0
    %v2145 = vadd.f32 %v2132, %v2144
    %v2146 = vpop.f32.mrf.mxu0
    %2147 = vdwg.mxu0
    %2148 = vmatpush.bf16.msra.mxu0 %v1534
    %2149 = vmatpush.bf16.msra.mxu0 %v1526
    %2150 = vmatpush.bf16.msra.mxu0 %v1518
    %2151 = vmatpush.bf16.msra.mxu0 %v1510
    %2152 = vmatpush.bf16.msra.mxu0 %v1502
    %2153 = vmatpush.bf16.msra.mxu0 %v1494
    %2154 = vmatpush.bf16.msra.mxu0 %v1486
    %2155 = vmatpush.bf16.msra.mxu0 %v1478
    %2156 = vmatmul.bf16.gmra.mxu0 %v174
    %v2157 = vpop.f32.mrf.mxu0
    %v2158 = vadd.f32 %v2145, %v2157
    %v2159 = vpop.f32.mrf.mxu0
    %2160 = vdwg.mxu0
    %2161 = vmatpush.bf16.msra.mxu0 %v1598
    %2162 = vmatpush.bf16.msra.mxu0 %v1590
    %2163 = vmatpush.bf16.msra.mxu0 %v1582
    %2164 = vmatpush.bf16.msra.mxu0 %v1574
    %2165 = vmatpush.bf16.msra.mxu0 %v1566
    %2166 = vmatpush.bf16.msra.mxu0 %v1558
    %2167 = vmatpush.bf16.msra.mxu0 %v1550
    %2168 = vmatpush.bf16.msra.mxu0 %v1542
    %2169 = vmatmul.bf16.gmra.mxu0 %v175
    %v2170 = vpop.f32.mrf.mxu0
    %v2171 = vadd.f32 %v2158, %v2170
    %v2172 = vpop.f32.mrf.mxu0
    %2173 = vdwg.mxu0
    %2174 = vmatpush.bf16.msra.mxu0 0
    %2175 = vmatpush.bf16.msra.mxu0 0
    %2176 = vmatpush.bf16.msra.mxu0 0
    %2177 = vmatpush.bf16.msra.mxu0 0
    %2178 = vmatpush.bf16.msra.mxu0 %v1630
    %2179 = vmatpush.bf16.msra.mxu0 %v1622
    %2180 = vmatpush.bf16.msra.mxu0 %v1614
    %2181 = vmatpush.bf16.msra.mxu0 %v1606
    %2182 = vmatmul.bf16.gmra.mxu0 %v1925
    %v2183 = vpop.f32.mrf.mxu0
    %v2184 = vadd.f32 %v2171, %v2183
    %v2185 = vpop.f32.mrf.mxu0
    %2186 = vdwg.mxu0
    %2187 = vmatpush.bf16.msra.mxu0 %v1407
    %2188 = vmatpush.bf16.msra.mxu0 %v1399
    %2189 = vmatpush.bf16.msra.mxu0 %v1391
    %2190 = vmatpush.bf16.msra.mxu0 %v1383
    %2191 = vmatpush.bf16.msra.mxu0 %v1375
    %2192 = vmatpush.bf16.msra.mxu0 %v1367
    %2193 = vmatpush.bf16.msra.mxu0 %v1359
    %2194 = vmatpush.bf16.msra.mxu0 %v1351
    %2195 = vmatmul.bf16.gmra.mxu0 %v172
    %v2196 = vpop.f32.mrf.mxu0
    %v2197 = vadd.f32 %v471, %v2196
    %v2198 = vpop.f32.mrf.mxu0
    %2199 = vdwg.mxu0
    %2200 = vmatpush.bf16.msra.mxu0 %v1471
    %2201 = vmatpush.bf16.msra.mxu0 %v1463
    %2202 = vmatpush.bf16.msra.mxu0 %v1455
    %2203 = vmatpush.bf16.msra.mxu0 %v1447
    %2204 = vmatpush.bf16.msra.mxu0 %v1439
    %2205 = vmatpush.bf16.msra.mxu0 %v1431
    %2206 = vmatpush.bf16.msra.mxu0 %v1423
    %2207 = vmatpush.bf16.msra.mxu0 %v1415
    %2208 = vmatmul.bf16.gmra.mxu0 %v173
    %v2209 = vpop.f32.mrf.mxu0
    %v2210 = vadd.f32 %v2197, %v2209
    %v2211 = vpop.f32.mrf.mxu0
    %2212 = vdwg.mxu0
    %2213 = vmatpush.bf16.msra.mxu0 %v1535
    %2214 = vmatpush.bf16.msra.mxu0 %v1527
    %2215 = vmatpush.bf16.msra.mxu0 %v1519
    %2216 = vmatpush.bf16.msra.mxu0 %v1511
    %2217 = vmatpush.bf16.msra.mxu0 %v1503
    %2218 = vmatpush.bf16.msra.mxu0 %v1495
    %2219 = vmatpush.bf16.msra.mxu0 %v1487
    %2220 = vmatpush.bf16.msra.mxu0 %v1479
    %2221 = vmatmul.bf16.gmra.mxu0 %v174
    %v2222 = vpop.f32.mrf.mxu0
    %v2223 = vadd.f32 %v2210, %v2222
    %v2224 = vpop.f32.mrf.mxu0
    %2225 = vdwg.mxu0
    %2226 = vmatpush.bf16.msra.mxu0 %v1599
    %2227 = vmatpush.bf16.msra.mxu0 %v1591
    %2228 = vmatpush.bf16.msra.mxu0 %v1583
    %2229 = vmatpush.bf16.msra.mxu0 %v1575
    %2230 = vmatpush.bf16.msra.mxu0 %v1567
    %2231 = vmatpush.bf16.msra.mxu0 %v1559
    %2232 = vmatpush.bf16.msra.mxu0 %v1551
    %2233 = vmatpush.bf16.msra.mxu0 %v1543
    %2234 = vmatmul.bf16.gmra.mxu0 %v175
    %v2235 = vpop.f32.mrf.mxu0
    %v2236 = vadd.f32 %v2223, %v2235
    %v2237 = vpop.f32.mrf.mxu0
    %2238 = vdwg.mxu0
    %2239 = vmatpush.bf16.msra.mxu0 0
    %2240 = vmatpush.bf16.msra.mxu0 0
    %2241 = vmatpush.bf16.msra.mxu0 0
    %2242 = vmatpush.bf16.msra.mxu0 0
    %2243 = vmatpush.bf16.msra.mxu0 %v1631
    %2244 = vmatpush.bf16.msra.mxu0 %v1623
    %2245 = vmatpush.bf16.msra.mxu0 %v1615
    %2246 = vmatpush.bf16.msra.mxu0 %v1607
    %2247 = vmatmul.bf16.gmra.mxu0 %v1925
    %v2248 = vpop.f32.mrf.mxu0
    %v2249 = vadd.f32 %v2236, %v2248
    %v2250 = vpop.f32.mrf.mxu0
    %2251 = vdwg.mxu0
    %2252 = vmatpush.bf16.msra.mxu0 %v1408
    %2253 = vmatpush.bf16.msra.mxu0 %v1400
    %2254 = vmatpush.bf16.msra.mxu0 %v1392
    %2255 = vmatpush.bf16.msra.mxu0 %v1384
    %2256 = vmatpush.bf16.msra.mxu0 %v1376
    %2257 = vmatpush.bf16.msra.mxu0 %v1368
    %2258 = vmatpush.bf16.msra.mxu0 %v1360
    %2259 = vmatpush.bf16.msra.mxu0 %v1352
    %2260 = vmatmul.bf16.gmra.mxu0 %v172
    %v2261 = vpop.f32.mrf.mxu0
    %v2262 = vadd.f32 %v472, %v2261
    %v2263 = vpop.f32.mrf.mxu0
    %2264 = vdwg.mxu0
    %2265 = vmatpush.bf16.msra.mxu0 %v1472
    %2266 = vmatpush.bf16.msra.mxu0 %v1464
    %2267 = vmatpush.bf16.msra.mxu0 %v1456
    %2268 = vmatpush.bf16.msra.mxu0 %v1448
    %2269 = vmatpush.bf16.msra.mxu0 %v1440
    %2270 = vmatpush.bf16.msra.mxu0 %v1432
    %2271 = vmatpush.bf16.msra.mxu0 %v1424
    %2272 = vmatpush.bf16.msra.mxu0 %v1416
    %2273 = vmatmul.bf16.gmra.mxu0 %v173
    %v2274 = vpop.f32.mrf.mxu0
    %v2275 = vadd.f32 %v2262, %v2274
    %v2276 = vpop.f32.mrf.mxu0
    %2277 = vdwg.mxu0
    %2278 = vmatpush.bf16.msra.mxu0 %v1536
    %2279 = vmatpush.bf16.msra.mxu0 %v1528
    %2280 = vmatpush.bf16.msra.mxu0 %v1520
    %2281 = vmatpush.bf16.msra.mxu0 %v1512
    %2282 = vmatpush.bf16.msra.mxu0 %v1504
    %2283 = vmatpush.bf16.msra.mxu0 %v1496
    %2284 = vmatpush.bf16.msra.mxu0 %v1488
    %2285 = vmatpush.bf16.msra.mxu0 %v1480
    %2286 = vmatmul.bf16.gmra.mxu0 %v174
    %v2287 = vpop.f32.mrf.mxu0
    %v2288 = vadd.f32 %v2275, %v2287
    %v2289 = vpop.f32.mrf.mxu0
    %2290 = vdwg.mxu0
    %2291 = vmatpush.bf16.msra.mxu0 %v1600
    %2292 = vmatpush.bf16.msra.mxu0 %v1592
    %2293 = vmatpush.bf16.msra.mxu0 %v1584
    %2294 = vmatpush.bf16.msra.mxu0 %v1576
    %2295 = vmatpush.bf16.msra.mxu0 %v1568
    %2296 = vmatpush.bf16.msra.mxu0 %v1560
    %2297 = vmatpush.bf16.msra.mxu0 %v1552
    %2298 = vmatpush.bf16.msra.mxu0 %v1544
    %2299 = vmatmul.bf16.gmra.mxu0 %v175
    %v2300 = vpop.f32.mrf.mxu0
    %v2301 = vadd.f32 %v2288, %v2300
    %v2302 = vpop.f32.mrf.mxu0
    %2303 = vdwg.mxu0
    %2304 = vmatpush.bf16.msra.mxu0 0
    %2305 = vmatpush.bf16.msra.mxu0 0
    %2306 = vmatpush.bf16.msra.mxu0 0
    %2307 = vmatpush.bf16.msra.mxu0 0
    %2308 = vmatpush.bf16.msra.mxu0 %v1632
    %2309 = vmatpush.bf16.msra.mxu0 %v1624
    %2310 = vmatpush.bf16.msra.mxu0 %v1616
    %2311 = vmatpush.bf16.msra.mxu0 %v1608
    %2312 = vmatmul.bf16.gmra.mxu0 %v1925
    %v2313 = vpop.f32.mrf.mxu0
    %v2314 = vadd.f32 %v2301, %v2313
    %v2315 = vpop.f32.mrf.mxu0
    %2316 = vdwg.mxu0
    %2317 = vmatpush.bf16.msra.mxu0 %v1409
    %2318 = vmatpush.bf16.msra.mxu0 %v1401
    %2319 = vmatpush.bf16.msra.mxu0 %v1393
    %2320 = vmatpush.bf16.msra.mxu0 %v1385
    %2321 = vmatpush.bf16.msra.mxu0 %v1377
    %2322 = vmatpush.bf16.msra.mxu0 %v1369
    %2323 = vmatpush.bf16.msra.mxu0 %v1361
    %2324 = vmatpush.bf16.msra.mxu0 %v1353
    %2325 = vmatmul.bf16.gmra.mxu0 %v172
    %v2326 = vpop.f32.mrf.mxu0
    %v2327 = vadd.f32 %v473, %v2326
    %v2328 = vpop.f32.mrf.mxu0
    %2329 = vdwg.mxu0
    %2330 = vmatpush.bf16.msra.mxu0 %v1473
    %2331 = vmatpush.bf16.msra.mxu0 %v1465
    %2332 = vmatpush.bf16.msra.mxu0 %v1457
    %2333 = vmatpush.bf16.msra.mxu0 %v1449
    %2334 = vmatpush.bf16.msra.mxu0 %v1441
    %2335 = vmatpush.bf16.msra.mxu0 %v1433
    %2336 = vmatpush.bf16.msra.mxu0 %v1425
    %2337 = vmatpush.bf16.msra.mxu0 %v1417
    %2338 = vmatmul.bf16.gmra.mxu0 %v173
    %v2339 = vpop.f32.mrf.mxu0
    %v2340 = vadd.f32 %v2327, %v2339
    %v2341 = vpop.f32.mrf.mxu0
    %2342 = vdwg.mxu0
    %2343 = vmatpush.bf16.msra.mxu0 %v1537
    %2344 = vmatpush.bf16.msra.mxu0 %v1529
    %2345 = vmatpush.bf16.msra.mxu0 %v1521
    %2346 = vmatpush.bf16.msra.mxu0 %v1513
    %2347 = vmatpush.bf16.msra.mxu0 %v1505
    %2348 = vmatpush.bf16.msra.mxu0 %v1497
    %2349 = vmatpush.bf16.msra.mxu0 %v1489
    %2350 = vmatpush.bf16.msra.mxu0 %v1481
    %2351 = vmatmul.bf16.gmra.mxu0 %v174
    %v2352 = vpop.f32.mrf.mxu0
    %v2353 = vadd.f32 %v2340, %v2352
    %v2354 = vpop.f32.mrf.mxu0
    %2355 = vdwg.mxu0
    %2356 = vmatpush.bf16.msra.mxu0 %v1601
    %2357 = vmatpush.bf16.msra.mxu0 %v1593
    %2358 = vmatpush.bf16.msra.mxu0 %v1585
    %2359 = vmatpush.bf16.msra.mxu0 %v1577
    %2360 = vmatpush.bf16.msra.mxu0 %v1569
    %2361 = vmatpush.bf16.msra.mxu0 %v1561
    %2362 = vmatpush.bf16.msra.mxu0 %v1553
    %2363 = vmatpush.bf16.msra.mxu0 %v1545
    %2364 = vmatmul.bf16.gmra.mxu0 %v175
    %v2365 = vpop.f32.mrf.mxu0
    %v2366 = vadd.f32 %v2353, %v2365
    %v2367 = vpop.f32.mrf.mxu0
    %2368 = vdwg.mxu0
    %2369 = vmatpush.bf16.msra.mxu0 0
    %2370 = vmatpush.bf16.msra.mxu0 0
    %2371 = vmatpush.bf16.msra.mxu0 0
    %2372 = vmatpush.bf16.msra.mxu0 0
    %2373 = vmatpush.bf16.msra.mxu0 %v1633
    %2374 = vmatpush.bf16.msra.mxu0 %v1625
    %2375 = vmatpush.bf16.msra.mxu0 %v1617
    %2376 = vmatpush.bf16.msra.mxu0 %v1609
    %2377 = vmatmul.bf16.gmra.mxu0 %v1925
    %v2378 = vpop.f32.mrf.mxu0
    %v2379 = vadd.f32 %v2366, %v2378
    %v2380 = vpop.f32.mrf.mxu0
    %2381 = vdwg.mxu0
    %2382 = vmatpush.bf16.msra.mxu0 %v1410
    %2383 = vmatpush.bf16.msra.mxu0 %v1402
    %2384 = vmatpush.bf16.msra.mxu0 %v1394
    %2385 = vmatpush.bf16.msra.mxu0 %v1386
    %2386 = vmatpush.bf16.msra.mxu0 %v1378
    %2387 = vmatpush.bf16.msra.mxu0 %v1370
    %2388 = vmatpush.bf16.msra.mxu0 %v1362
    %2389 = vmatpush.bf16.msra.mxu0 %v1354
    %2390 = vmatmul.bf16.gmra.mxu0 %v172
    %v2391 = vpop.f32.mrf.mxu0
    %v2392 = vadd.f32 %v474, %v2391
    %v2393 = vpop.f32.mrf.mxu0
    %2394 = vdwg.mxu0
    %2395 = vmatpush.bf16.msra.mxu0 %v1474
    %2396 = vmatpush.bf16.msra.mxu0 %v1466
    %2397 = vmatpush.bf16.msra.mxu0 %v1458
    %2398 = vmatpush.bf16.msra.mxu0 %v1450
    %2399 = vmatpush.bf16.msra.mxu0 %v1442
    %2400 = vmatpush.bf16.msra.mxu0 %v1434
    %2401 = vmatpush.bf16.msra.mxu0 %v1426
    %2402 = vmatpush.bf16.msra.mxu0 %v1418
    %2403 = vmatmul.bf16.gmra.mxu0 %v173
    %v2404 = vpop.f32.mrf.mxu0
    %v2405 = vadd.f32 %v2392, %v2404
    %v2406 = vpop.f32.mrf.mxu0
    %2407 = vdwg.mxu0
    %2408 = vmatpush.bf16.msra.mxu0 %v1538
    %2409 = vmatpush.bf16.msra.mxu0 %v1530
    %2410 = vmatpush.bf16.msra.mxu0 %v1522
    %2411 = vmatpush.bf16.msra.mxu0 %v1514
    %2412 = vmatpush.bf16.msra.mxu0 %v1506
    %2413 = vmatpush.bf16.msra.mxu0 %v1498
    %2414 = vmatpush.bf16.msra.mxu0 %v1490
    %2415 = vmatpush.bf16.msra.mxu0 %v1482
    %2416 = vmatmul.bf16.gmra.mxu0 %v174
    %v2417 = vpop.f32.mrf.mxu0
    %v2418 = vadd.f32 %v2405, %v2417
    %v2419 = vpop.f32.mrf.mxu0
    %2420 = vdwg.mxu0
    %2421 = vmatpush.bf16.msra.mxu0 %v1602
    %2422 = vmatpush.bf16.msra.mxu0 %v1594
    %2423 = vmatpush.bf16.msra.mxu0 %v1586
    %2424 = vmatpush.bf16.msra.mxu0 %v1578
    %2425 = vmatpush.bf16.msra.mxu0 %v1570
    %2426 = vmatpush.bf16.msra.mxu0 %v1562
    %2427 = vmatpush.bf16.msra.mxu0 %v1554
    %2428 = vmatpush.bf16.msra.mxu0 %v1546
    %2429 = vmatmul.bf16.gmra.mxu0 %v175
    %v2430 = vpop.f32.mrf.mxu0
    %v2431 = vadd.f32 %v2418, %v2430
    %v2432 = vpop.f32.mrf.mxu0
    %2433 = vdwg.mxu0
    %2434 = vmatpush.bf16.msra.mxu0 0
    %2435 = vmatpush.bf16.msra.mxu0 0
    %2436 = vmatpush.bf16.msra.mxu0 0
    %2437 = vmatpush.bf16.msra.mxu0 0
    %2438 = vmatpush.bf16.msra.mxu0 %v1634
    %2439 = vmatpush.bf16.msra.mxu0 %v1626
    %2440 = vmatpush.bf16.msra.mxu0 %v1618
    %2441 = vmatpush.bf16.msra.mxu0 %v1610
    %2442 = vmatmul.bf16.gmra.mxu0 %v1925
    %v2443 = vpop.f32.mrf.mxu0
    %v2444 = vadd.f32 %v2431, %v2443
    %v2445 = vpop.f32.mrf.mxu0
    %2446 = vdwg.mxu0
    %v2447 = vadd.f32 %v1989, 3.0
    %v2448 = vadd.f32 %v2054, 3.0
    %v2449 = vadd.f32 %v2119, 3.0
    %v2450 = vadd.f32 %v2184, 3.0
    %v2451 = vadd.f32 %v2249, 3.0
    %v2452 = vadd.f32 %v2314, 3.0
    %v2453 = vadd.f32 %v2379, 3.0
    %v2454 = vadd.f32 %v2444, 3.0
    %v2455 = vmax.f32 %v2447, 0.0
    %v2456 = vmax.f32 %v2448, 0.0
    %v2457 = vmax.f32 %v2449, 0.0
    %v2458 = vmax.f32 %v2450, 0.0
    %v2459 = vmax.f32 %v2451, 0.0
    %v2460 = vmax.f32 %v2452, 0.0
    %v2461 = vmax.f32 %v2453, 0.0
    %v2462 = vmax.f32 %v2454, 0.0
    %v2463 = vmin.f32 %v2455, 6.0
    %v2464 = vmin.f32 %v2456, 6.0
    %v2465 = vmin.f32 %v2457, 6.0
    %v2466 = vmin.f32 %v2458, 6.0
    %v2467 = vmin.f32 %v2459, 6.0
    %v2468 = vmin.f32 %v2460, 6.0
    %v2469 = vmin.f32 %v2461, 6.0
    %v2470 = vmin.f32 %v2462, 6.0
    %v2471 = vmul.f32 %v1989, %v2463
    %v2472 = vmul.f32 %v2054, %v2464
    %v2473 = vmul.f32 %v2119, %v2465
    %v2474 = vmul.f32 %v2184, %v2466
    %v2475 = vmul.f32 %v2249, %v2467
    %v2476 = vmul.f32 %v2314, %v2468
    %v2477 = vmul.f32 %v2379, %v2469
    %v2478 = vmul.f32 %v2444, %v2470
    %v2479 = vmul.f32 %v2471, 0.16666667
    %v2480 = vmul.f32 %v2472, 0.16666667
    %v2481 = vmul.f32 %v2473, 0.16666667
    %v2482 = vmul.f32 %v2474, 0.16666667
    %v2483 = vmul.f32 %v2475, 0.16666667
    %v2484 = vmul.f32 %v2476, 0.16666667
    %v2485 = vmul.f32 %v2477, 0.16666667
    %v2486 = vmul.f32 %v2478, 0.16666667
    %v2487 = vld [vmem:[%s5] sm:$0xff]
    %v2488 = vld [vmem:[%s5 + $0x8] sm:$0xff]
    %v2489 = vld [vmem:[%s5 + $0x10] sm:$0xff]
    %v2490 = vld [vmem:[%s5 + $0x18] sm:$0xff]
    %v2491 = vld [vmem:[%s5 + $0x20] sm:$0xff]
    %v2492 = vld [vmem:[%s5 + $0x28] sm:$0xff]
    %v2493 = vld [vmem:[%s5 + $0x30] sm:$0xff]
    %v2494 = vld [vmem:[%s5 + $0x38] sm:$0xff]
    %v2495 = vld [vmem:[%s5 + $0x40] sm:$0xff]
    %v2496 = vld [vmem:[%s5 + $0x48] sm:$0xff]
    %v2497 = vld [vmem:[%s5 + $0x50] sm:$0xff]
    %v2498 = vld [vmem:[%s5 + $0x58] sm:$0xff]
    %v2499 = vld [vmem:[%s5 + $0x60] sm:$0xff]
    %v2500 = vld [vmem:[%s5 + $0x68] sm:$0xff]
    %v2501 = vld [vmem:[%s5 + $0x70] sm:$0xff]
    %v2502 = vld [vmem:[%s5 + $0x78] sm:$0xff]
    %v2503 = vld [vmem:[%s5 + $0x80] sm:$0xff]
    %v2504 = vld [vmem:[%s5 + $0x88] sm:$0xff]
    %v2505 = vld [vmem:[%s5 + $0x90] sm:$0xff]
    %v2506 = vld [vmem:[%s5 + $0x98] sm:$0xff]
    %v2507 = vld [vmem:[%s5 + $0xa0] sm:$0xff]
    %v2508 = vld [vmem:[%s5 + $0xa8] sm:$0xff]
    %v2509 = vld [vmem:[%s5 + $0xb0] sm:$0xff]
    %v2510 = vld [vmem:[%s5 + $0xb8] sm:$0xff]
    %v2511 = vld [vmem:[%s5 + $0xc0] sm:$0xff]
    %v2512 = vld [vmem:[%s5 + $0xc8] sm:$0xff]
    %v2513 = vld [vmem:[%s5 + $0xd0] sm:$0xff]
    %v2514 = vld [vmem:[%s5 + $0xd8] sm:$0xff]
    %v2515 = vld [vmem:[%s5 + $0xe0] sm:$0xff]
    %v2516 = vld [vmem:[%s5 + $0xe8] sm:$0xff]
    %v2517 = vld [vmem:[%s5 + $0xf0] sm:$0xff]
    %v2518 = vld [vmem:[%s5 + $0xf8] sm:$0xff]
    %v2519 = vld [vmem:[%s5 + $0x100] sm:$0xff]
    %v2520 = vld [vmem:[%s5 + $0x108] sm:$0xff]
    %v2521 = vld [vmem:[%s5 + $0x110] sm:$0xff]
    %v2522 = vld [vmem:[%s5 + $0x118] sm:$0xff]
    %v2523 = vld [vmem:[%s5 + $0x120] sm:$0xff]
    %v2524 = vld [vmem:[%s5 + $0x128] sm:$0xff]
    %v2525 = vld [vmem:[%s5 + $0x130] sm:$0xff]
    %v2526 = vld [vmem:[%s5 + $0x138] sm:$0xff]
    %v2527 = vld [vmem:[%s5 + $0x140] sm:$0xff]
    %v2528 = vld [vmem:[%s5 + $0x148] sm:$0xff]
    %v2529 = vld [vmem:[%s5 + $0x150] sm:$0xff]
    %v2530 = vld [vmem:[%s5 + $0x158] sm:$0xff]
    %v2531 = vld [vmem:[%s5 + $0x160] sm:$0xff]
    %v2532 = vld [vmem:[%s5 + $0x168] sm:$0xff]
    %v2533 = vld [vmem:[%s5 + $0x170] sm:$0xff]
    %v2534 = vld [vmem:[%s5 + $0x178] sm:$0xff]
    %v2535 = vld [vmem:[%s5 + $0x180] sm:$0xff]
    %v2536 = vld [vmem:[%s5 + $0x188] sm:$0xff]
    %v2537 = vld [vmem:[%s5 + $0x190] sm:$0xff]
    %v2538 = vld [vmem:[%s5 + $0x198] sm:$0xff]
    %v2539 = vld [vmem:[%s5 + $0x1a0] sm:$0xff]
    %v2540 = vld [vmem:[%s5 + $0x1a8] sm:$0xff]
    %v2541 = vld [vmem:[%s5 + $0x1b0] sm:$0xff]
    %v2542 = vld [vmem:[%s5 + $0x1b8] sm:$0xff]
    %v2543 = vld [vmem:[%s5 + $0x1c0] sm:$0xff]
    %v2544 = vld [vmem:[%s5 + $0x1c8] sm:$0xff]
    %v2545 = vld [vmem:[%s5 + $0x1d0] sm:$0xff]
    %v2546 = vld [vmem:[%s5 + $0x1d8] sm:$0xff]
    %v2547 = vld [vmem:[%s5 + $0x1e0] sm:$0xff]
    %v2548 = vld [vmem:[%s5 + $0x1e8] sm:$0xff]
    %v2549 = vld [vmem:[%s5 + $0x1f0] sm:$0xff]
    %v2550 = vld [vmem:[%s5 + $0x1f8] sm:$0xff]
    %v2551 = vld [vmem:[%s5 + $0x200] sm:$0xff]
    %v2552 = vld [vmem:[%s5 + $0x208] sm:$0xff]
    %v2553 = vld [vmem:[%s5 + $0x210] sm:$0xff]
    %v2554 = vld [vmem:[%s5 + $0x218] sm:$0xff]
    %v2555 = vld [vmem:[%s5 + $0x220] sm:$0xff]
    %v2556 = vld [vmem:[%s5 + $0x228] sm:$0xff]
    %v2557 = vld [vmem:[%s5 + $0x230] sm:$0xff]
    %v2558 = vld [vmem:[%s5 + $0x238] sm:$0xff]
    %v2559 = vld [vmem:[%s5 + $0x240] sm:$0xff]
    %v2560 = vld [vmem:[%s5 + $0x248] sm:$0xff]
    %v2561 = vld [vmem:[%s5 + $0x250] sm:$0xff]
    %v2562 = vld [vmem:[%s5 + $0x258] sm:$0xff]
    %v2563 = vld [vmem:[%s5 + $0x260] sm:$0xff]
    %v2564 = vld [vmem:[%s5 + $0x268] sm:$0xff]
    %v2565 = vld [vmem:[%s5 + $0x270] sm:$0xff]
    %v2566 = vld [vmem:[%s5 + $0x278] sm:$0xff]
    %v2567 = vld [vmem:[%s5 + $0x280] sm:$0xff]
    %v2568 = vld [vmem:[%s5 + $0x288] sm:$0xff]
    %v2569 = vld [vmem:[%s5 + $0x290] sm:$0xff]
    %v2570 = vld [vmem:[%s5 + $0x298] sm:$0xff]
    %v2571 = vld [vmem:[%s5 + $0x2a0] sm:$0xff]
    %v2572 = vld [vmem:[%s5 + $0x2a8] sm:$0xff]
    %v2573 = vld [vmem:[%s5 + $0x2b0] sm:$0xff]
    %v2574 = vld [vmem:[%s5 + $0x2b8] sm:$0xff]
    %v2575 = vld [vmem:[%s5 + $0x2c0] sm:$0xff]
    %v2576 = vld [vmem:[%s5 + $0x2c8] sm:$0xff]
    %v2577 = vld [vmem:[%s5 + $0x2d0] sm:$0xff]
    %v2578 = vld [vmem:[%s5 + $0x2d8] sm:$0xff]
    %v2579 = vld [vmem:[%s5 + $0x2e0] sm:$0xff]
    %v2580 = vld [vmem:[%s5 + $0x2e8] sm:$0xff]
    %v2581 = vld [vmem:[%s5 + $0x2f0] sm:$0xff]
    %v2582 = vld [vmem:[%s5 + $0x2f8] sm:$0xff]
    %v2583 = vld [vmem:[%s5 + $0x300] sm:$0xff]
    %v2584 = vld [vmem:[%s5 + $0x308] sm:$0xff]
    %v2585 = vld [vmem:[%s5 + $0x310] sm:$0xff]
    %v2586 = vld [vmem:[%s5 + $0x318] sm:$0xff]
    %v2587 = vld [vmem:[%s5 + $0x320] sm:$0xff]
    %v2588 = vld [vmem:[%s5 + $0x328] sm:$0xff]
    %v2589 = vld [vmem:[%s5 + $0x330] sm:$0xff]
    %v2590 = vld [vmem:[%s5 + $0x338] sm:$0xff]
    %v2591 = vld [vmem:[%s5 + $0x340] sm:$0xff]
    %v2592 = vld [vmem:[%s5 + $0x348] sm:$0xff]
    %v2593 = vld [vmem:[%s5 + $0x350] sm:$0xff]
    %v2594 = vld [vmem:[%s5 + $0x358] sm:$0xff]
    %v2595 = vld [vmem:[%s5 + $0x360] sm:$0xff]
    %v2596 = vld [vmem:[%s5 + $0x368] sm:$0xff]
    %v2597 = vld [vmem:[%s5 + $0x370] sm:$0xff]
    %v2598 = vld [vmem:[%s5 + $0x378] sm:$0xff]
    %v2599 = vld [vmem:[%s5 + $0x380] sm:$0xff]
    %v2600 = vld [vmem:[%s5 + $0x388] sm:$0xff]
    %v2601 = vld [vmem:[%s5 + $0x390] sm:$0xff]
    %v2602 = vld [vmem:[%s5 + $0x398] sm:$0xff]
    %v2603 = vld [vmem:[%s5 + $0x3a0] sm:$0xff]
    %v2604 = vld [vmem:[%s5 + $0x3a8] sm:$0xff]
    %v2605 = vld [vmem:[%s5 + $0x3b0] sm:$0xff]
    %v2606 = vld [vmem:[%s5 + $0x3b8] sm:$0xff]
    %v2607 = vld [vmem:[%s5 + $0x3c0] sm:$0xff]
    %v2608 = vld [vmem:[%s5 + $0x3c8] sm:$0xff]
    %v2609 = vld [vmem:[%s5 + $0x3d0] sm:$0xff]
    %v2610 = vld [vmem:[%s5 + $0x3d8] sm:$0xff]
    %v2611 = vld [vmem:[%s5 + $0x3e0] sm:$0xff]
    %v2612 = vld [vmem:[%s5 + $0x3e8] sm:$0xff]
    %v2613 = vld [vmem:[%s5 + $0x3f0] sm:$0xff]
    %v2614 = vld [vmem:[%s5 + $0x3f8] sm:$0xff]
    %v2615 = vld [vmem:[%s6] sm:$0x1]
    %v2617 = vperm.slane %v2615, 0
    %2619 = vmatpush.msra.mxu0 %v2502
    %2620 = vmatpush.msra.mxu0 %v2501
    %2621 = vmatpush.msra.mxu0 %v2500
    %2622 = vmatpush.msra.mxu0 %v2499
    %2623 = vmatpush.msra.mxu0 %v2498
    %2624 = vmatpush.msra.mxu0 %v2497
    %2625 = vmatpush.msra.mxu0 %v2496
    %2626 = vmatpush.msra.mxu0 %v2495
    %2627 = vmatpush.msra.mxu0 %v2494
    %2628 = vmatpush.msra.mxu0 %v2493
    %2629 = vmatpush.msra.mxu0 %v2492
    %2630 = vmatpush.msra.mxu0 %v2491
    %2631 = vmatpush.msra.mxu0 %v2490
    %2632 = vmatpush.msra.mxu0 %v2489
    %2633 = vmatpush.msra.mxu0 %v2488
    %2634 = vmatpush.msra.mxu0 %v2487
    %2635 = vmatmul.f32.gmra.mxu0 %v2479
    %v2636 = vpop.f32.mrf.mxu0
    %v2637 = vadd.f32 %v2617, %v2636
    %2638 = vdwg.mxu0
    %2639 = vmatpush.msra.mxu0 %v2518
    %2640 = vmatpush.msra.mxu0 %v2517
    %2641 = vmatpush.msra.mxu0 %v2516
    %2642 = vmatpush.msra.mxu0 %v2515
    %2643 = vmatpush.msra.mxu0 %v2514
    %2644 = vmatpush.msra.mxu0 %v2513
    %2645 = vmatpush.msra.mxu0 %v2512
    %2646 = vmatpush.msra.mxu0 %v2511
    %2647 = vmatpush.msra.mxu0 %v2510
    %2648 = vmatpush.msra.mxu0 %v2509
    %2649 = vmatpush.msra.mxu0 %v2508
    %2650 = vmatpush.msra.mxu0 %v2507
    %2651 = vmatpush.msra.mxu0 %v2506
    %2652 = vmatpush.msra.mxu0 %v2505
    %2653 = vmatpush.msra.mxu0 %v2504
    %2654 = vmatpush.msra.mxu0 %v2503
    %2655 = vmatmul.f32.gmra.mxu0 %v2480
    %v2656 = vpop.f32.mrf.mxu0
    %v2657 = vadd.f32 %v2637, %v2656
    %2658 = vdwg.mxu0
    %2659 = vmatpush.msra.mxu0 %v2534
    %2660 = vmatpush.msra.mxu0 %v2533
    %2661 = vmatpush.msra.mxu0 %v2532
    %2662 = vmatpush.msra.mxu0 %v2531
    %2663 = vmatpush.msra.mxu0 %v2530
    %2664 = vmatpush.msra.mxu0 %v2529
    %2665 = vmatpush.msra.mxu0 %v2528
    %2666 = vmatpush.msra.mxu0 %v2527
    %2667 = vmatpush.msra.mxu0 %v2526
    %2668 = vmatpush.msra.mxu0 %v2525
    %2669 = vmatpush.msra.mxu0 %v2524
    %2670 = vmatpush.msra.mxu0 %v2523
    %2671 = vmatpush.msra.mxu0 %v2522
    %2672 = vmatpush.msra.mxu0 %v2521
    %2673 = vmatpush.msra.mxu0 %v2520
    %2674 = vmatpush.msra.mxu0 %v2519
    %2675 = vmatmul.f32.gmra.mxu0 %v2481
    %v2676 = vpop.f32.mrf.mxu0
    %v2677 = vadd.f32 %v2657, %v2676
    %2678 = vdwg.mxu0
    %2679 = vmatpush.msra.mxu0 %v2550
    %2680 = vmatpush.msra.mxu0 %v2549
    %2681 = vmatpush.msra.mxu0 %v2548
    %2682 = vmatpush.msra.mxu0 %v2547
    %2683 = vmatpush.msra.mxu0 %v2546
    %2684 = vmatpush.msra.mxu0 %v2545
    %2685 = vmatpush.msra.mxu0 %v2544
    %2686 = vmatpush.msra.mxu0 %v2543
    %2687 = vmatpush.msra.mxu0 %v2542
    %2688 = vmatpush.msra.mxu0 %v2541
    %2689 = vmatpush.msra.mxu0 %v2540
    %2690 = vmatpush.msra.mxu0 %v2539
    %2691 = vmatpush.msra.mxu0 %v2538
    %2692 = vmatpush.msra.mxu0 %v2537
    %2693 = vmatpush.msra.mxu0 %v2536
    %2694 = vmatpush.msra.mxu0 %v2535
    %2695 = vmatmul.f32.gmra.mxu0 %v2482
    %v2696 = vpop.f32.mrf.mxu0
    %v2697 = vadd.f32 %v2677, %v2696
    %2698 = vdwg.mxu0
    %2699 = vmatpush.msra.mxu0 %v2566
    %2700 = vmatpush.msra.mxu0 %v2565
    %2701 = vmatpush.msra.mxu0 %v2564
    %2702 = vmatpush.msra.mxu0 %v2563
    %2703 = vmatpush.msra.mxu0 %v2562
    %2704 = vmatpush.msra.mxu0 %v2561
    %2705 = vmatpush.msra.mxu0 %v2560
    %2706 = vmatpush.msra.mxu0 %v2559
    %2707 = vmatpush.msra.mxu0 %v2558
    %2708 = vmatpush.msra.mxu0 %v2557
    %2709 = vmatpush.msra.mxu0 %v2556
    %2710 = vmatpush.msra.mxu0 %v2555
    %2711 = vmatpush.msra.mxu0 %v2554
    %2712 = vmatpush.msra.mxu0 %v2553
    %2713 = vmatpush.msra.mxu0 %v2552
    %2714 = vmatpush.msra.mxu0 %v2551
    %2715 = vmatmul.f32.gmra.mxu0 %v2483
    %v2716 = vpop.f32.mrf.mxu0
    %v2717 = vadd.f32 %v2697, %v2716
    %2718 = vdwg.mxu0
    %2719 = vmatpush.msra.mxu0 %v2582
    %2720 = vmatpush.msra.mxu0 %v2581
    %2721 = vmatpush.msra.mxu0 %v2580
    %2722 = vmatpush.msra.mxu0 %v2579
    %2723 = vmatpush.msra.mxu0 %v2578
    %2724 = vmatpush.msra.mxu0 %v2577
    %2725 = vmatpush.msra.mxu0 %v2576
    %2726 = vmatpush.msra.mxu0 %v2575
    %2727 = vmatpush.msra.mxu0 %v2574
    %2728 = vmatpush.msra.mxu0 %v2573
    %2729 = vmatpush.msra.mxu0 %v2572
    %2730 = vmatpush.msra.mxu0 %v2571
    %2731 = vmatpush.msra.mxu0 %v2570
    %2732 = vmatpush.msra.mxu0 %v2569
    %2733 = vmatpush.msra.mxu0 %v2568
    %2734 = vmatpush.msra.mxu0 %v2567
    %2735 = vmatmul.f32.gmra.mxu0 %v2484
    %v2736 = vpop.f32.mrf.mxu0
    %v2737 = vadd.f32 %v2717, %v2736
    %2738 = vdwg.mxu0
    %2739 = vmatpush.msra.mxu0 %v2598
    %2740 = vmatpush.msra.mxu0 %v2597
    %2741 = vmatpush.msra.mxu0 %v2596
    %2742 = vmatpush.msra.mxu0 %v2595
    %2743 = vmatpush.msra.mxu0 %v2594
    %2744 = vmatpush.msra.mxu0 %v2593
    %2745 = vmatpush.msra.mxu0 %v2592
    %2746 = vmatpush.msra.mxu0 %v2591
    %2747 = vmatpush.msra.mxu0 %v2590
    %2748 = vmatpush.msra.mxu0 %v2589
    %2749 = vmatpush.msra.mxu0 %v2588
    %2750 = vmatpush.msra.mxu0 %v2587
    %2751 = vmatpush.msra.mxu0 %v2586
    %2752 = vmatpush.msra.mxu0 %v2585
    %2753 = vmatpush.msra.mxu0 %v2584
    %2754 = vmatpush.msra.mxu0 %v2583
    %2755 = vmatmul.f32.gmra.mxu0 %v2485
    %v2756 = vpop.f32.mrf.mxu0
    %v2757 = vadd.f32 %v2737, %v2756
    %2758 = vdwg.mxu0
    %2759 = vmatpush.msra.mxu0 %v2614
    %2760 = vmatpush.msra.mxu0 %v2613
    %2761 = vmatpush.msra.mxu0 %v2612
    %2762 = vmatpush.msra.mxu0 %v2611
    %2763 = vmatpush.msra.mxu0 %v2610
    %2764 = vmatpush.msra.mxu0 %v2609
    %2765 = vmatpush.msra.mxu0 %v2608
    %2766 = vmatpush.msra.mxu0 %v2607
    %2767 = vmatpush.msra.mxu0 %v2606
    %2768 = vmatpush.msra.mxu0 %v2605
    %2769 = vmatpush.msra.mxu0 %v2604
    %2770 = vmatpush.msra.mxu0 %v2603
    %2771 = vmatpush.msra.mxu0 %v2602
    %2772 = vmatpush.msra.mxu0 %v2601
    %2773 = vmatpush.msra.mxu0 %v2600
    %2774 = vmatpush.msra.mxu0 %v2599
    %2775 = vmatmul.f32.gmra.mxu0 %v2486
    %v2776 = vpop.f32.mrf.mxu0
    %v2777 = vadd.f32 %v2757, %v2776
    %2778 = vdwg.mxu0
    %vm2779 = vcmask 17408
    %2780 = vst.msk [vmem:[#allocation2] sm:$0x3] %vm2779, %v2777
    // Predicated region
    $region30: #{multitask_forward.5} parent=1 // pred_check
      _
    $region31: #{multitask_forward.5} parent=1 // pred_check_branch
      %2782 = sbr.rel (0) target = $region33
    $region32: #{multitask_forward.5} parent=1 // pred_region
      %2784 = vsyncadd [#allocation3], 0
      %s2786 = sshll.u32 [#allocation2], 4
      %s2787 = int_to_ptr.vmem [resolvable:$true] %s2786
      %s2788 = sshll.u32 %s7, 4
      %s2789 = int_to_ptr.hbm [resolvable:$true] %s2788
      %2791 = dma.vmem_to_hbm [thread:$0]  %s2787, 32, %s2789, [#allocation3]
    $region33: #{multitask_forward.5} parent=1 // pred_fallthru
      _
    // Predicated region
    $region34: #{multitask_forward.5} parent=1 // pred_check
      _
    $region35: #{multitask_forward.5} parent=1 // pred_check_branch
      %2793 = sbr.rel (0) target = $region37
    $region36: #{multitask_forward.5} parent=1 // pred_region
      %2795 = dma.done [#allocation3], 32
    $region37: #{multitask_forward.5} parent=1 // pred_fallthru
      _
    %2796 = vsyncpa [#allocation3], 1

</llo_original>
